<compile_context>
chip_gen: v7x
topology: tpu7x:2x2x1
jax: 0.10.0
libtpu: 0.0.40
codegen_flags: <defaults>
</compile_context>

<pallas_src>
import functools

import numpy as np
import jax
import jax.numpy as jnp
from jax.experimental import pallas as pl

EMBEDDING_DIM = 128
K = 3  # conv kernel size


def _rup8(n):
    return ((n + 7) // 8) * 8


def _out_hw(h, w, stride=2, pad=1):
    return (h + 2 * pad - K) // stride + 1, (w + 2 * pad - K) // stride + 1


# ----------------------------------------------------------------------------
# Fused Pallas kernel: conv1+conv2+conv3+pool+fc+normalize, all VMEM-resident
# ----------------------------------------------------------------------------
def fused_cnn_kernel(x_ref,
                     sel1_ref, w1_ref, b1_ref,
                     sel2_ref, w2_ref, b2_ref,
                     sel3_ref, w3_ref, b3_ref,
                     wfc_ref, bfc_ref,
                     o_ref,
                     *, batch, p3_valid, c3):
    def conv_relu(x_bf16, sel_ref, w_ref, b_ref):
        # x_bf16 : (Pin, B*Cin)            bf16, batch folded onto lanes
        # sel_ref: (9*Pout_pad, Pin)       bf16 0/1, batch-independent gather
        # w_ref  : (9, B*Cin, B*Cout)      bf16, per-tap kron(I_B, w_tap)
        # b_ref  : (1, B*Cout)             f32, bias tiled over batch
        pout = sel_ref.shape[0] // (K * K)          # 8-row aligned Pout
        bcout = w_ref.shape[2]
        # ONE gather matmul for all 9 taps (contraction = Pin).
        g = jnp.dot(sel_ref[...], x_bf16,
                    preferred_element_type=jnp.float32).astype(jnp.bfloat16)
        acc = jnp.zeros((pout, bcout), jnp.float32)
        for t in range(K * K):                      # static unroll, 8-row slabs
            acc = acc + jnp.dot(g[t * pout:(t + 1) * pout, :], w_ref[t],
                                preferred_element_type=jnp.float32)
        return jnp.maximum(acc + b_ref[...], 0.0)   # f32 activations

    a1 = conv_relu(x_ref[...], sel1_ref, w1_ref, b1_ref)              # (64, B*16)
    a2 = conv_relu(a1.astype(jnp.bfloat16), sel2_ref, w2_ref, b2_ref)  # (16, B*32)
    a3 = conv_relu(a2.astype(jnp.bfloat16), sel3_ref, w3_ref, b3_ref)  # (8,  B*64)

    # AdaptiveAvgPool2d((1,1)): mean over the p3_valid real spatial rows.
    pooled = jnp.mean(a3[:p3_valid, :], axis=0, keepdims=True)        # (1, B*64)

    # Linear(64, E) + F.normalize(p=2, dim=1), tiny per-image tail (f32).
    for b in range(batch):                                            # static unroll
        pooled_b = pooled[:, b * c3:(b + 1) * c3]                     # (1, 64)
        emb = jnp.dot(pooled_b, wfc_ref[...],
                      preferred_element_type=jnp.float32) + bfc_ref[...]
        ssq = jnp.sum(emb * emb, axis=1, keepdims=True)
        # x / max(||x||, 1e-12)  ==  x * rsqrt(max(||x||^2, 1e-24))
        o_ref[b:b + 1, :] = emb * jax.lax.rsqrt(jnp.maximum(ssq, 1e-24))


# ----------------------------------------------------------------------------
# One-time constant / parameter preparation (off the latency path)
# ----------------------------------------------------------------------------
def _build_sel(H, W, Ho, Wo, pin_rows=None, stride=2, pad=1):
    """Batch-independent 0/1 tap-gather matrix pre-flattened to
    (9 * round_up(Ho*Wo, 8), pin_rows), bf16.  Zero rows implement both the
    conv padding taps and the 8-row alignment padding."""
    if pin_rows is None:
        pin_rows = H * W
    pout_pad = _rup8(Ho * Wo)
    sel = np.zeros((K * K, pout_pad, pin_rows), np.float32)
    for dy in range(K):
        for dx in range(K):
            t = dy * K + dx
            for oy in range(Ho):
                iy = stride * oy + dy - pad
                if not (0 <= iy < H):
                    continue
                for ox in range(Wo):
                    ix = stride * ox + dx - pad
                    if not (0 <= ix < W):
                        continue
                    sel[t, oy * Wo + ox, iy * W + ix] = 1.0
    return jnp.asarray(sel.reshape(K * K * pout_pad, pin_rows), dtype=jnp.bfloat16)


def prepare_constants(H, W):
    """Shape-only constants (batch independent): tap-gather matrices."""
    h1, w1 = _out_hw(H, W)
    h2, w2 = _out_hw(h1, w1)
    h3, w3 = _out_hw(h2, w2)
    return {
        "sel1": _build_sel(H, W, h1, w1, pin_rows=H * W),
        "sel2": _build_sel(h1, w1, h2, w2, pin_rows=_rup8(h1 * w1)),
        "sel3": _build_sel(h2, w2, h3, w3, pin_rows=_rup8(h2 * w2)),
    }


def prepare_params(params_pt, batch):
    """Re-layout PyTorch-style params into matmul-ready layout (done ONCE)."""
    def conv_w_bd(w):
        # (Cout, Cin, 3, 3) -> (9, B*Cin, B*Cout): per-tap kron(I_B, w_tap),
        # tap order dy*3+dx (matches _build_sel).
        w = np.asarray(w, np.float32)
        cout, cin = int(w.shape[0]), int(w.shape[1])
        taps = np.transpose(w, (2, 3, 1, 0)).reshape(K * K, cin, cout)
        eye = np.eye(batch, dtype=np.float32)
        bd = np.einsum("ab,tio->taibo", eye, taps).reshape(
            K * K, batch * cin, batch * cout)
        return jnp.asarray(bd, dtype=jnp.bfloat16)

    def bias_tiled(b):
        b = np.asarray(b, np.float32).reshape(-1)
        return jnp.asarray(np.tile(b, batch).reshape(1, -1), dtype=jnp.float32)

    return {
        "w1": conv_w_bd(params_pt["w1"]), "b1": bias_tiled(params_pt["b1"]),
        "w2": conv_w_bd(params_pt["w2"]), "b2": bias_tiled(params_pt["b2"]),
        "w3": conv_w_bd(params_pt["w3"]), "b3": bias_tiled(params_pt["b3"]),
        # fc kept in f32 (tiny); (E, 64) -> (64, E)
        "w_fc": jnp.asarray(np.asarray(params_pt["w_fc"], np.float32).T),
        "b_fc": jnp.asarray(np.asarray(params_pt["b_fc"], np.float32).reshape(1, -1)),
    }


# ----------------------------------------------------------------------------
# Forward wrapper: single pallas_call, whole-array (VMEM-resident) blocks
# ----------------------------------------------------------------------------
def _full_spec(shape):
    return pl.BlockSpec(shape, lambda: (0,) * len(shape))


def lightweight_cnn_forward(x_nchw, prepped, consts):
    B, C, H, W = x_nchw.shape
    E = prepped["w_fc"].shape[1]
    c3 = prepped["w_fc"].shape[0]
    h1, w1 = _out_hw(H, W)
    h2, w2 = _out_hw(h1, w1)
    h3, w3 = _out_hw(h2, w2)

    # NCHW -> (H*W, B*C): spatial on sublanes, batch*channels on lanes, bf16.
    x_flat = jnp.transpose(x_nchw, (2, 3, 0, 1)).reshape(H * W, B * C)
    x_flat = x_flat.astype(jnp.bfloat16)

    operands = (x_flat,
                consts["sel1"], prepped["w1"], prepped["b1"],
                consts["sel2"], prepped["w2"], prepped["b2"],
                consts["sel3"], prepped["w3"], prepped["b3"],
                prepped["w_fc"], prepped["b_fc"])

    kernel = functools.partial(fused_cnn_kernel,
                               batch=B, p3_valid=h3 * w3, c3=c3)

    return pl.pallas_call(
        kernel,
        out_shape=jax.ShapeDtypeStruct((B, E), jnp.float32),
        in_specs=[_full_spec(op.shape) for op in operands],
        out_specs=_full_spec((B, E)),
    )(*operands)


# ----------------------------------------------------------------------------
# Pure-JAX reference (XLA, f32) for correctness checking
# ----------------------------------------------------------------------------
def reference_forward(x_nchw, params):
    x = x_nchw.astype(jnp.float32)

    def conv(x, w, b):
        y = jax.lax.conv_general_dilated(
            x, w, window_strides=(2, 2), padding=((1, 1), (1, 1)),
            dimension_numbers=("NCHW", "OIHW", "NCHW"),
            precision=jax.lax.Precision.HIGHEST)
        return jnp.maximum(y + b.reshape(1, -1, 1, 1), 0.0)

    x = conv(x, params["w1"], params["b1"])
    x = conv(x, params["w2"], params["b2"])
    x = conv(x, params["w3"], params["b3"])
    pooled = jnp.mean(x, axis=(2, 3))                      # AdaptiveAvgPool2d((1,1))
    emb = pooled @ params["w_fc"].T + params["b_fc"]
    n = jnp.sqrt(jnp.sum(emb * emb, axis=1, keepdims=True))
    return emb / jnp.maximum(n, 1e-12)


# ----------------------------------------------------------------------------
# Params in PyTorch layout (as the nn.Module would hold them)
# ----------------------------------------------------------------------------
def init_params(key, embedding_dim=EMBEDDING_DIM):
    ks = jax.random.split(key, 8)

    def norm(k, shape, scale):
        return (scale * jax.random.normal(k, shape)).astype(jnp.float32)

    return {
        "w1": norm(ks[0], (16, 3, 3, 3), 0.1),  "b1": norm(ks[1], (16,), 0.1),
        "w2": norm(ks[2], (32, 16, 3, 3), 0.1), "b2": norm(ks[3], (32,), 0.1),
        "w3": norm(ks[4], (64, 32, 3, 3), 0.1), "b3": norm(ks[5], (64,), 0.1),
        "w_fc": norm(ks[6], (embedding_dim, 64), 0.1),
        "b_fc": norm(ks[7], (embedding_dim,), 0.1),
    }


if __name__ == "__main__":
    key = jax.random.PRNGKey(0)
    k_x, k_p = jax.random.split(key)

    B, C, H, W = 2, 3, 16, 16
    x = jax.random.normal(k_x, (B, C, H, W), dtype=jnp.float32)
    params = init_params(k_p)

    prepped = prepare_params(params, B)   # one-time weight re-layout (kron(I_B, w))
    consts = prepare_constants(H, W)      # one-time batch-independent gather matrices

    fwd = jax.jit(lightweight_cnn_forward)
    out = jax.block_until_ready(fwd(x, prepped, consts))

    assert out.shape == (B, EMBEDDING_DIM)
    # rows are L2-normalized (normalization is done in f32 inside the kernel)
    norms = jnp.linalg.norm(out, axis=1)
    assert bool(jnp.all(jnp.abs(norms - 1.0) < 1e-4)), "rows not unit-norm"
    # matches the f32 conv/pool/fc/normalize reference (bf16 matmul operands)
    ref = reference_forward(x, params)
    max_err = float(jnp.max(jnp.abs(out - ref)))
    assert max_err < 3e-2, f"mismatch vs reference: {max_err}"

    print("KERNEL_OK")
</pallas_src>

<mosaic_0001>
module attributes {stable_mosaic.version = 11 : i64} {
  func.func @fused_cnn_kernel(%arg0: memref<256x6xbf16, #tpu.memory_space<vmem>>, %arg1: memref<576x256xbf16, #tpu.memory_space<vmem>>, %arg2: memref<9x6x32xbf16, #tpu.memory_space<vmem>>, %arg3: memref<1x32xf32, #tpu.memory_space<vmem>>, %arg4: memref<144x64xbf16, #tpu.memory_space<vmem>>, %arg5: memref<9x32x64xbf16, #tpu.memory_space<vmem>>, %arg6: memref<1x64xf32, #tpu.memory_space<vmem>>, %arg7: memref<72x16xbf16, #tpu.memory_space<vmem>>, %arg8: memref<9x64x128xbf16, #tpu.memory_space<vmem>>, %arg9: memref<1x128xf32, #tpu.memory_space<vmem>>, %arg10: memref<64x128xf32, #tpu.memory_space<vmem>>, %arg11: memref<1x128xf32, #tpu.memory_space<vmem>>, %arg12: memref<2x128xf32, #tpu.memory_space<vmem>>) attributes {dimension_semantics = [], scalar_prefetch = 0 : i64, scratch_operands = 0 : i64, tpu.core_type = #tpu.core_type<tc>} {
    %c0 = arith.constant 0 : index
    %c0_0 = arith.constant 0 : index
    %0 = vector.load %arg0[%c0, %c0_0] : memref<256x6xbf16, #tpu.memory_space<vmem>>, vector<256x6xbf16>
    %c0_1 = arith.constant 0 : index
    %c0_2 = arith.constant 0 : index
    %1 = vector.load %arg1[%c0_1, %c0_2] : memref<576x256xbf16, #tpu.memory_space<vmem>>, vector<576x256xbf16>
    %cst = arith.constant dense<0.000000e+00> : vector<576x6xf32>
    %2 = tpu.matmul %1, %0, %cst {dimension_numbers = #tpu.dot_dimension_numbers<[1], [0], [0], [1], [0, 0, 1, 1], [], []>} : vector<576x256xbf16>, vector<256x6xbf16>, vector<576x6xf32> -> vector<576x6xf32>
    %3 = arith.truncf %2 : vector<576x6xf32> to vector<576x6xbf16>
    %cst_3 = arith.constant 0.000000e+00 : f32
    %4 = vector.broadcast %cst_3 : f32 to vector<64x32xf32>
    %5 = vector.extract_strided_slice %3 {offsets = [0, 0], sizes = [64, 6], strides = [1, 1]} : vector<576x6xbf16> to vector<64x6xbf16>
    %c0_4 = arith.constant 0 : index
    %c0_5 = arith.constant 0 : index
    %c0_6 = arith.constant 0 : index
    %6 = vector.load %arg2[%c0_4, %c0_5, %c0_6] : memref<9x6x32xbf16, #tpu.memory_space<vmem>>, vector<1x6x32xbf16>
    %7 = vector.shape_cast %6 : vector<1x6x32xbf16> to vector<6x32xbf16>
    %cst_7 = arith.constant dense<0.000000e+00> : vector<64x32xf32>
    %8 = tpu.matmul %5, %7, %cst_7 {dimension_numbers = #tpu.dot_dimension_numbers<[1], [0], [0], [1], [0, 0, 1, 1], [], []>} : vector<64x6xbf16>, vector<6x32xbf16>, vector<64x32xf32> -> vector<64x32xf32>
    %9 = arith.addf %4, %8 : vector<64x32xf32>
    %10 = vector.extract_strided_slice %3 {offsets = [64, 0], sizes = [64, 6], strides = [1, 1]} : vector<576x6xbf16> to vector<64x6xbf16>
    %c1 = arith.constant 1 : index
    %c0_8 = arith.constant 0 : index
    %c0_9 = arith.constant 0 : index
    %11 = vector.load %arg2[%c1, %c0_8, %c0_9] : memref<9x6x32xbf16, #tpu.memory_space<vmem>>, vector<1x6x32xbf16>
    %12 = vector.shape_cast %11 : vector<1x6x32xbf16> to vector<6x32xbf16>
    %cst_10 = arith.constant dense<0.000000e+00> : vector<64x32xf32>
    %13 = tpu.matmul %10, %12, %cst_10 {dimension_numbers = #tpu.dot_dimension_numbers<[1], [0], [0], [1], [0, 0, 1, 1], [], []>} : vector<64x6xbf16>, vector<6x32xbf16>, vector<64x32xf32> -> vector<64x32xf32>
    %14 = arith.addf %9, %13 : vector<64x32xf32>
    %15 = vector.extract_strided_slice %3 {offsets = [128, 0], sizes = [64, 6], strides = [1, 1]} : vector<576x6xbf16> to vector<64x6xbf16>
    %c2 = arith.constant 2 : index
    %c0_11 = arith.constant 0 : index
    %c0_12 = arith.constant 0 : index
    %16 = vector.load %arg2[%c2, %c0_11, %c0_12] : memref<9x6x32xbf16, #tpu.memory_space<vmem>>, vector<1x6x32xbf16>
    %17 = vector.shape_cast %16 : vector<1x6x32xbf16> to vector<6x32xbf16>
    %cst_13 = arith.constant dense<0.000000e+00> : vector<64x32xf32>
    %18 = tpu.matmul %15, %17, %cst_13 {dimension_numbers = #tpu.dot_dimension_numbers<[1], [0], [0], [1], [0, 0, 1, 1], [], []>} : vector<64x6xbf16>, vector<6x32xbf16>, vector<64x32xf32> -> vector<64x32xf32>
    %19 = arith.addf %14, %18 : vector<64x32xf32>
    %20 = vector.extract_strided_slice %3 {offsets = [192, 0], sizes = [64, 6], strides = [1, 1]} : vector<576x6xbf16> to vector<64x6xbf16>
    %c3 = arith.constant 3 : index
    %c0_14 = arith.constant 0 : index
    %c0_15 = arith.constant 0 : index
    %21 = vector.load %arg2[%c3, %c0_14, %c0_15] : memref<9x6x32xbf16, #tpu.memory_space<vmem>>, vector<1x6x32xbf16>
    %22 = vector.shape_cast %21 : vector<1x6x32xbf16> to vector<6x32xbf16>
    %cst_16 = arith.constant dense<0.000000e+00> : vector<64x32xf32>
    %23 = tpu.matmul %20, %22, %cst_16 {dimension_numbers = #tpu.dot_dimension_numbers<[1], [0], [0], [1], [0, 0, 1, 1], [], []>} : vector<64x6xbf16>, vector<6x32xbf16>, vector<64x32xf32> -> vector<64x32xf32>
    %24 = arith.addf %19, %23 : vector<64x32xf32>
    %25 = vector.extract_strided_slice %3 {offsets = [256, 0], sizes = [64, 6], strides = [1, 1]} : vector<576x6xbf16> to vector<64x6xbf16>
    %c4 = arith.constant 4 : index
    %c0_17 = arith.constant 0 : index
    %c0_18 = arith.constant 0 : index
    %26 = vector.load %arg2[%c4, %c0_17, %c0_18] : memref<9x6x32xbf16, #tpu.memory_space<vmem>>, vector<1x6x32xbf16>
    %27 = vector.shape_cast %26 : vector<1x6x32xbf16> to vector<6x32xbf16>
    %cst_19 = arith.constant dense<0.000000e+00> : vector<64x32xf32>
    %28 = tpu.matmul %25, %27, %cst_19 {dimension_numbers = #tpu.dot_dimension_numbers<[1], [0], [0], [1], [0, 0, 1, 1], [], []>} : vector<64x6xbf16>, vector<6x32xbf16>, vector<64x32xf32> -> vector<64x32xf32>
    %29 = arith.addf %24, %28 : vector<64x32xf32>
    %30 = vector.extract_strided_slice %3 {offsets = [320, 0], sizes = [64, 6], strides = [1, 1]} : vector<576x6xbf16> to vector<64x6xbf16>
    %c5 = arith.constant 5 : index
    %c0_20 = arith.constant 0 : index
    %c0_21 = arith.constant 0 : index
    %31 = vector.load %arg2[%c5, %c0_20, %c0_21] : memref<9x6x32xbf16, #tpu.memory_space<vmem>>, vector<1x6x32xbf16>
    %32 = vector.shape_cast %31 : vector<1x6x32xbf16> to vector<6x32xbf16>
    %cst_22 = arith.constant dense<0.000000e+00> : vector<64x32xf32>
    %33 = tpu.matmul %30, %32, %cst_22 {dimension_numbers = #tpu.dot_dimension_numbers<[1], [0], [0], [1], [0, 0, 1, 1], [], []>} : vector<64x6xbf16>, vector<6x32xbf16>, vector<64x32xf32> -> vector<64x32xf32>
    %34 = arith.addf %29, %33 : vector<64x32xf32>
    %35 = vector.extract_strided_slice %3 {offsets = [384, 0], sizes = [64, 6], strides = [1, 1]} : vector<576x6xbf16> to vector<64x6xbf16>
    %c6 = arith.constant 6 : index
    %c0_23 = arith.constant 0 : index
    %c0_24 = arith.constant 0 : index
    %36 = vector.load %arg2[%c6, %c0_23, %c0_24] : memref<9x6x32xbf16, #tpu.memory_space<vmem>>, vector<1x6x32xbf16>
    %37 = vector.shape_cast %36 : vector<1x6x32xbf16> to vector<6x32xbf16>
    %cst_25 = arith.constant dense<0.000000e+00> : vector<64x32xf32>
    %38 = tpu.matmul %35, %37, %cst_25 {dimension_numbers = #tpu.dot_dimension_numbers<[1], [0], [0], [1], [0, 0, 1, 1], [], []>} : vector<64x6xbf16>, vector<6x32xbf16>, vector<64x32xf32> -> vector<64x32xf32>
    %39 = arith.addf %34, %38 : vector<64x32xf32>
    %40 = vector.extract_strided_slice %3 {offsets = [448, 0], sizes = [64, 6], strides = [1, 1]} : vector<576x6xbf16> to vector<64x6xbf16>
    %c7 = arith.constant 7 : index
    %c0_26 = arith.constant 0 : index
    %c0_27 = arith.constant 0 : index
    %41 = vector.load %arg2[%c7, %c0_26, %c0_27] : memref<9x6x32xbf16, #tpu.memory_space<vmem>>, vector<1x6x32xbf16>
    %42 = vector.shape_cast %41 : vector<1x6x32xbf16> to vector<6x32xbf16>
    %cst_28 = arith.constant dense<0.000000e+00> : vector<64x32xf32>
    %43 = tpu.matmul %40, %42, %cst_28 {dimension_numbers = #tpu.dot_dimension_numbers<[1], [0], [0], [1], [0, 0, 1, 1], [], []>} : vector<64x6xbf16>, vector<6x32xbf16>, vector<64x32xf32> -> vector<64x32xf32>
    %44 = arith.addf %39, %43 : vector<64x32xf32>
    %45 = vector.extract_strided_slice %3 {offsets = [512, 0], sizes = [64, 6], strides = [1, 1]} : vector<576x6xbf16> to vector<64x6xbf16>
    %c8 = arith.constant 8 : index
    %c0_29 = arith.constant 0 : index
    %c0_30 = arith.constant 0 : index
    %46 = vector.load %arg2[%c8, %c0_29, %c0_30] : memref<9x6x32xbf16, #tpu.memory_space<vmem>>, vector<1x6x32xbf16>
    %47 = vector.shape_cast %46 : vector<1x6x32xbf16> to vector<6x32xbf16>
    %cst_31 = arith.constant dense<0.000000e+00> : vector<64x32xf32>
    %48 = tpu.matmul %45, %47, %cst_31 {dimension_numbers = #tpu.dot_dimension_numbers<[1], [0], [0], [1], [0, 0, 1, 1], [], []>} : vector<64x6xbf16>, vector<6x32xbf16>, vector<64x32xf32> -> vector<64x32xf32>
    %49 = arith.addf %44, %48 : vector<64x32xf32>
    %c0_32 = arith.constant 0 : index
    %c0_33 = arith.constant 0 : index
    %50 = vector.load %arg3[%c0_32, %c0_33] : memref<1x32xf32, #tpu.memory_space<vmem>>, vector<1x32xf32>
    %51 = vector.broadcast %50 : vector<1x32xf32> to vector<64x32xf32>
    %52 = arith.addf %49, %51 : vector<64x32xf32>
    %cst_34 = arith.constant 0.000000e+00 : f32
    %53 = vector.broadcast %cst_34 : f32 to vector<64x32xf32>
    %54 = arith.maximumf %52, %53 : vector<64x32xf32>
    %55 = arith.truncf %54 : vector<64x32xf32> to vector<64x32xbf16>
    %c0_35 = arith.constant 0 : index
    %c0_36 = arith.constant 0 : index
    %56 = vector.load %arg4[%c0_35, %c0_36] : memref<144x64xbf16, #tpu.memory_space<vmem>>, vector<144x64xbf16>
    %cst_37 = arith.constant dense<0.000000e+00> : vector<144x32xf32>
    %57 = tpu.matmul %56, %55, %cst_37 {dimension_numbers = #tpu.dot_dimension_numbers<[1], [0], [0], [1], [0, 0, 1, 1], [], []>} : vector<144x64xbf16>, vector<64x32xbf16>, vector<144x32xf32> -> vector<144x32xf32>
    %58 = arith.truncf %57 : vector<144x32xf32> to vector<144x32xbf16>
    %cst_38 = arith.constant 0.000000e+00 : f32
    %59 = vector.broadcast %cst_38 : f32 to vector<16x64xf32>
    %60 = vector.extract_strided_slice %58 {offsets = [0, 0], sizes = [16, 32], strides = [1, 1]} : vector<144x32xbf16> to vector<16x32xbf16>
    %c0_39 = arith.constant 0 : index
    %c0_40 = arith.constant 0 : index
    %c0_41 = arith.constant 0 : index
    %61 = vector.load %arg5[%c0_39, %c0_40, %c0_41] : memref<9x32x64xbf16, #tpu.memory_space<vmem>>, vector<1x32x64xbf16>
    %62 = vector.shape_cast %61 : vector<1x32x64xbf16> to vector<32x64xbf16>
    %cst_42 = arith.constant dense<0.000000e+00> : vector<16x64xf32>
    %63 = tpu.matmul %60, %62, %cst_42 {dimension_numbers = #tpu.dot_dimension_numbers<[1], [0], [0], [1], [0, 0, 1, 1], [], []>} : vector<16x32xbf16>, vector<32x64xbf16>, vector<16x64xf32> -> vector<16x64xf32>
    %64 = arith.addf %59, %63 : vector<16x64xf32>
    %65 = vector.extract_strided_slice %58 {offsets = [16, 0], sizes = [16, 32], strides = [1, 1]} : vector<144x32xbf16> to vector<16x32xbf16>
    %c1_43 = arith.constant 1 : index
    %c0_44 = arith.constant 0 : index
    %c0_45 = arith.constant 0 : index
    %66 = vector.load %arg5[%c1_43, %c0_44, %c0_45] : memref<9x32x64xbf16, #tpu.memory_space<vmem>>, vector<1x32x64xbf16>
    %67 = vector.shape_cast %66 : vector<1x32x64xbf16> to vector<32x64xbf16>
    %cst_46 = arith.constant dense<0.000000e+00> : vector<16x64xf32>
    %68 = tpu.matmul %65, %67, %cst_46 {dimension_numbers = #tpu.dot_dimension_numbers<[1], [0], [0], [1], [0, 0, 1, 1], [], []>} : vector<16x32xbf16>, vector<32x64xbf16>, vector<16x64xf32> -> vector<16x64xf32>
    %69 = arith.addf %64, %68 : vector<16x64xf32>
    %70 = vector.extract_strided_slice %58 {offsets = [32, 0], sizes = [16, 32], strides = [1, 1]} : vector<144x32xbf16> to vector<16x32xbf16>
    %c2_47 = arith.constant 2 : index
    %c0_48 = arith.constant 0 : index
    %c0_49 = arith.constant 0 : index
    %71 = vector.load %arg5[%c2_47, %c0_48, %c0_49] : memref<9x32x64xbf16, #tpu.memory_space<vmem>>, vector<1x32x64xbf16>
    %72 = vector.shape_cast %71 : vector<1x32x64xbf16> to vector<32x64xbf16>
    %cst_50 = arith.constant dense<0.000000e+00> : vector<16x64xf32>
    %73 = tpu.matmul %70, %72, %cst_50 {dimension_numbers = #tpu.dot_dimension_numbers<[1], [0], [0], [1], [0, 0, 1, 1], [], []>} : vector<16x32xbf16>, vector<32x64xbf16>, vector<16x64xf32> -> vector<16x64xf32>
    %74 = arith.addf %69, %73 : vector<16x64xf32>
    %75 = vector.extract_strided_slice %58 {offsets = [48, 0], sizes = [16, 32], strides = [1, 1]} : vector<144x32xbf16> to vector<16x32xbf16>
    %c3_51 = arith.constant 3 : index
    %c0_52 = arith.constant 0 : index
    %c0_53 = arith.constant 0 : index
    %76 = vector.load %arg5[%c3_51, %c0_52, %c0_53] : memref<9x32x64xbf16, #tpu.memory_space<vmem>>, vector<1x32x64xbf16>
    %77 = vector.shape_cast %76 : vector<1x32x64xbf16> to vector<32x64xbf16>
    %cst_54 = arith.constant dense<0.000000e+00> : vector<16x64xf32>
    %78 = tpu.matmul %75, %77, %cst_54 {dimension_numbers = #tpu.dot_dimension_numbers<[1], [0], [0], [1], [0, 0, 1, 1], [], []>} : vector<16x32xbf16>, vector<32x64xbf16>, vector<16x64xf32> -> vector<16x64xf32>
    %79 = arith.addf %74, %78 : vector<16x64xf32>
    %80 = vector.extract_strided_slice %58 {offsets = [64, 0], sizes = [16, 32], strides = [1, 1]} : vector<144x32xbf16> to vector<16x32xbf16>
    %c4_55 = arith.constant 4 : index
    %c0_56 = arith.constant 0 : index
    %c0_57 = arith.constant 0 : index
    %81 = vector.load %arg5[%c4_55, %c0_56, %c0_57] : memref<9x32x64xbf16, #tpu.memory_space<vmem>>, vector<1x32x64xbf16>
    %82 = vector.shape_cast %81 : vector<1x32x64xbf16> to vector<32x64xbf16>
    %cst_58 = arith.constant dense<0.000000e+00> : vector<16x64xf32>
    %83 = tpu.matmul %80, %82, %cst_58 {dimension_numbers = #tpu.dot_dimension_numbers<[1], [0], [0], [1], [0, 0, 1, 1], [], []>} : vector<16x32xbf16>, vector<32x64xbf16>, vector<16x64xf32> -> vector<16x64xf32>
    %84 = arith.addf %79, %83 : vector<16x64xf32>
    %85 = vector.extract_strided_slice %58 {offsets = [80, 0], sizes = [16, 32], strides = [1, 1]} : vector<144x32xbf16> to vector<16x32xbf16>
    %c5_59 = arith.constant 5 : index
    %c0_60 = arith.constant 0 : index
    %c0_61 = arith.constant 0 : index
    %86 = vector.load %arg5[%c5_59, %c0_60, %c0_61] : memref<9x32x64xbf16, #tpu.memory_space<vmem>>, vector<1x32x64xbf16>
    %87 = vector.shape_cast %86 : vector<1x32x64xbf16> to vector<32x64xbf16>
    %cst_62 = arith.constant dense<0.000000e+00> : vector<16x64xf32>
    %88 = tpu.matmul %85, %87, %cst_62 {dimension_numbers = #tpu.dot_dimension_numbers<[1], [0], [0], [1], [0, 0, 1, 1], [], []>} : vector<16x32xbf16>, vector<32x64xbf16>, vector<16x64xf32> -> vector<16x64xf32>
    %89 = arith.addf %84, %88 : vector<16x64xf32>
    %90 = vector.extract_strided_slice %58 {offsets = [96, 0], sizes = [16, 32], strides = [1, 1]} : vector<144x32xbf16> to vector<16x32xbf16>
    %c6_63 = arith.constant 6 : index
    %c0_64 = arith.constant 0 : index
    %c0_65 = arith.constant 0 : index
    %91 = vector.load %arg5[%c6_63, %c0_64, %c0_65] : memref<9x32x64xbf16, #tpu.memory_space<vmem>>, vector<1x32x64xbf16>
    %92 = vector.shape_cast %91 : vector<1x32x64xbf16> to vector<32x64xbf16>
    %cst_66 = arith.constant dense<0.000000e+00> : vector<16x64xf32>
    %93 = tpu.matmul %90, %92, %cst_66 {dimension_numbers = #tpu.dot_dimension_numbers<[1], [0], [0], [1], [0, 0, 1, 1], [], []>} : vector<16x32xbf16>, vector<32x64xbf16>, vector<16x64xf32> -> vector<16x64xf32>
    %94 = arith.addf %89, %93 : vector<16x64xf32>
    %95 = vector.extract_strided_slice %58 {offsets = [112, 0], sizes = [16, 32], strides = [1, 1]} : vector<144x32xbf16> to vector<16x32xbf16>
    %c7_67 = arith.constant 7 : index
    %c0_68 = arith.constant 0 : index
    %c0_69 = arith.constant 0 : index
    %96 = vector.load %arg5[%c7_67, %c0_68, %c0_69] : memref<9x32x64xbf16, #tpu.memory_space<vmem>>, vector<1x32x64xbf16>
    %97 = vector.shape_cast %96 : vector<1x32x64xbf16> to vector<32x64xbf16>
    %cst_70 = arith.constant dense<0.000000e+00> : vector<16x64xf32>
    %98 = tpu.matmul %95, %97, %cst_70 {dimension_numbers = #tpu.dot_dimension_numbers<[1], [0], [0], [1], [0, 0, 1, 1], [], []>} : vector<16x32xbf16>, vector<32x64xbf16>, vector<16x64xf32> -> vector<16x64xf32>
    %99 = arith.addf %94, %98 : vector<16x64xf32>
    %100 = vector.extract_strided_slice %58 {offsets = [128, 0], sizes = [16, 32], strides = [1, 1]} : vector<144x32xbf16> to vector<16x32xbf16>
    %c8_71 = arith.constant 8 : index
    %c0_72 = arith.constant 0 : index
    %c0_73 = arith.constant 0 : index
    %101 = vector.load %arg5[%c8_71, %c0_72, %c0_73] : memref<9x32x64xbf16, #tpu.memory_space<vmem>>, vector<1x32x64xbf16>
    %102 = vector.shape_cast %101 : vector<1x32x64xbf16> to vector<32x64xbf16>
    %cst_74 = arith.constant dense<0.000000e+00> : vector<16x64xf32>
    %103 = tpu.matmul %100, %102, %cst_74 {dimension_numbers = #tpu.dot_dimension_numbers<[1], [0], [0], [1], [0, 0, 1, 1], [], []>} : vector<16x32xbf16>, vector<32x64xbf16>, vector<16x64xf32> -> vector<16x64xf32>
    %104 = arith.addf %99, %103 : vector<16x64xf32>
    %c0_75 = arith.constant 0 : index
    %c0_76 = arith.constant 0 : index
    %105 = vector.load %arg6[%c0_75, %c0_76] : memref<1x64xf32, #tpu.memory_space<vmem>>, vector<1x64xf32>
    %106 = vector.broadcast %105 : vector<1x64xf32> to vector<16x64xf32>
    %107 = arith.addf %104, %106 : vector<16x64xf32>
    %cst_77 = arith.constant 0.000000e+00 : f32
    %108 = vector.broadcast %cst_77 : f32 to vector<16x64xf32>
    %109 = arith.maximumf %107, %108 : vector<16x64xf32>
    %110 = arith.truncf %109 : vector<16x64xf32> to vector<16x64xbf16>
    %c0_78 = arith.constant 0 : index
    %c0_79 = arith.constant 0 : index
    %111 = vector.load %arg7[%c0_78, %c0_79] : memref<72x16xbf16, #tpu.memory_space<vmem>>, vector<72x16xbf16>
    %cst_80 = arith.constant dense<0.000000e+00> : vector<72x64xf32>
    %112 = tpu.matmul %111, %110, %cst_80 {dimension_numbers = #tpu.dot_dimension_numbers<[1], [0], [0], [1], [0, 0, 1, 1], [], []>} : vector<72x16xbf16>, vector<16x64xbf16>, vector<72x64xf32> -> vector<72x64xf32>
    %113 = arith.truncf %112 : vector<72x64xf32> to vector<72x64xbf16>
    %cst_81 = arith.constant 0.000000e+00 : f32
    %114 = vector.broadcast %cst_81 : f32 to vector<8x128xf32>
    %115 = vector.extract_strided_slice %113 {offsets = [0, 0], sizes = [8, 64], strides = [1, 1]} : vector<72x64xbf16> to vector<8x64xbf16>
    %c0_82 = arith.constant 0 : index
    %c0_83 = arith.constant 0 : index
    %c0_84 = arith.constant 0 : index
    %116 = vector.load %arg8[%c0_82, %c0_83, %c0_84] : memref<9x64x128xbf16, #tpu.memory_space<vmem>>, vector<1x64x128xbf16>
    %117 = vector.shape_cast %116 : vector<1x64x128xbf16> to vector<64x128xbf16>
    %cst_85 = arith.constant dense<0.000000e+00> : vector<8x128xf32>
    %118 = tpu.matmul %115, %117, %cst_85 {dimension_numbers = #tpu.dot_dimension_numbers<[1], [0], [0], [1], [0, 0, 1, 1], [], []>} : vector<8x64xbf16>, vector<64x128xbf16>, vector<8x128xf32> -> vector<8x128xf32>
    %119 = arith.addf %114, %118 : vector<8x128xf32>
    %120 = vector.extract_strided_slice %113 {offsets = [8, 0], sizes = [8, 64], strides = [1, 1]} : vector<72x64xbf16> to vector<8x64xbf16>
    %c1_86 = arith.constant 1 : index
    %c0_87 = arith.constant 0 : index
    %c0_88 = arith.constant 0 : index
    %121 = vector.load %arg8[%c1_86, %c0_87, %c0_88] : memref<9x64x128xbf16, #tpu.memory_space<vmem>>, vector<1x64x128xbf16>
    %122 = vector.shape_cast %121 : vector<1x64x128xbf16> to vector<64x128xbf16>
    %cst_89 = arith.constant dense<0.000000e+00> : vector<8x128xf32>
    %123 = tpu.matmul %120, %122, %cst_89 {dimension_numbers = #tpu.dot_dimension_numbers<[1], [0], [0], [1], [0, 0, 1, 1], [], []>} : vector<8x64xbf16>, vector<64x128xbf16>, vector<8x128xf32> -> vector<8x128xf32>
    %124 = arith.addf %119, %123 : vector<8x128xf32>
    %125 = vector.extract_strided_slice %113 {offsets = [16, 0], sizes = [8, 64], strides = [1, 1]} : vector<72x64xbf16> to vector<8x64xbf16>
    %c2_90 = arith.constant 2 : index
    %c0_91 = arith.constant 0 : index
    %c0_92 = arith.constant 0 : index
    %126 = vector.load %arg8[%c2_90, %c0_91, %c0_92] : memref<9x64x128xbf16, #tpu.memory_space<vmem>>, vector<1x64x128xbf16>
    %127 = vector.shape_cast %126 : vector<1x64x128xbf16> to vector<64x128xbf16>
    %cst_93 = arith.constant dense<0.000000e+00> : vector<8x128xf32>
    %128 = tpu.matmul %125, %127, %cst_93 {dimension_numbers = #tpu.dot_dimension_numbers<[1], [0], [0], [1], [0, 0, 1, 1], [], []>} : vector<8x64xbf16>, vector<64x128xbf16>, vector<8x128xf32> -> vector<8x128xf32>
    %129 = arith.addf %124, %128 : vector<8x128xf32>
    %130 = vector.extract_strided_slice %113 {offsets = [24, 0], sizes = [8, 64], strides = [1, 1]} : vector<72x64xbf16> to vector<8x64xbf16>
    %c3_94 = arith.constant 3 : index
    %c0_95 = arith.constant 0 : index
    %c0_96 = arith.constant 0 : index
    %131 = vector.load %arg8[%c3_94, %c0_95, %c0_96] : memref<9x64x128xbf16, #tpu.memory_space<vmem>>, vector<1x64x128xbf16>
    %132 = vector.shape_cast %131 : vector<1x64x128xbf16> to vector<64x128xbf16>
    %cst_97 = arith.constant dense<0.000000e+00> : vector<8x128xf32>
    %133 = tpu.matmul %130, %132, %cst_97 {dimension_numbers = #tpu.dot_dimension_numbers<[1], [0], [0], [1], [0, 0, 1, 1], [], []>} : vector<8x64xbf16>, vector<64x128xbf16>, vector<8x128xf32> -> vector<8x128xf32>
    %134 = arith.addf %129, %133 : vector<8x128xf32>
    %135 = vector.extract_strided_slice %113 {offsets = [32, 0], sizes = [8, 64], strides = [1, 1]} : vector<72x64xbf16> to vector<8x64xbf16>
    %c4_98 = arith.constant 4 : index
    %c0_99 = arith.constant 0 : index
    %c0_100 = arith.constant 0 : index
    %136 = vector.load %arg8[%c4_98, %c0_99, %c0_100] : memref<9x64x128xbf16, #tpu.memory_space<vmem>>, vector<1x64x128xbf16>
    %137 = vector.shape_cast %136 : vector<1x64x128xbf16> to vector<64x128xbf16>
    %cst_101 = arith.constant dense<0.000000e+00> : vector<8x128xf32>
    %138 = tpu.matmul %135, %137, %cst_101 {dimension_numbers = #tpu.dot_dimension_numbers<[1], [0], [0], [1], [0, 0, 1, 1], [], []>} : vector<8x64xbf16>, vector<64x128xbf16>, vector<8x128xf32> -> vector<8x128xf32>
    %139 = arith.addf %134, %138 : vector<8x128xf32>
    %140 = vector.extract_strided_slice %113 {offsets = [40, 0], sizes = [8, 64], strides = [1, 1]} : vector<72x64xbf16> to vector<8x64xbf16>
    %c5_102 = arith.constant 5 : index
    %c0_103 = arith.constant 0 : index
    %c0_104 = arith.constant 0 : index
    %141 = vector.load %arg8[%c5_102, %c0_103, %c0_104] : memref<9x64x128xbf16, #tpu.memory_space<vmem>>, vector<1x64x128xbf16>
    %142 = vector.shape_cast %141 : vector<1x64x128xbf16> to vector<64x128xbf16>
    %cst_105 = arith.constant dense<0.000000e+00> : vector<8x128xf32>
    %143 = tpu.matmul %140, %142, %cst_105 {dimension_numbers = #tpu.dot_dimension_numbers<[1], [0], [0], [1], [0, 0, 1, 1], [], []>} : vector<8x64xbf16>, vector<64x128xbf16>, vector<8x128xf32> -> vector<8x128xf32>
    %144 = arith.addf %139, %143 : vector<8x128xf32>
    %145 = vector.extract_strided_slice %113 {offsets = [48, 0], sizes = [8, 64], strides = [1, 1]} : vector<72x64xbf16> to vector<8x64xbf16>
    %c6_106 = arith.constant 6 : index
    %c0_107 = arith.constant 0 : index
    %c0_108 = arith.constant 0 : index
    %146 = vector.load %arg8[%c6_106, %c0_107, %c0_108] : memref<9x64x128xbf16, #tpu.memory_space<vmem>>, vector<1x64x128xbf16>
    %147 = vector.shape_cast %146 : vector<1x64x128xbf16> to vector<64x128xbf16>
    %cst_109 = arith.constant dense<0.000000e+00> : vector<8x128xf32>
    %148 = tpu.matmul %145, %147, %cst_109 {dimension_numbers = #tpu.dot_dimension_numbers<[1], [0], [0], [1], [0, 0, 1, 1], [], []>} : vector<8x64xbf16>, vector<64x128xbf16>, vector<8x128xf32> -> vector<8x128xf32>
    %149 = arith.addf %144, %148 : vector<8x128xf32>
    %150 = vector.extract_strided_slice %113 {offsets = [56, 0], sizes = [8, 64], strides = [1, 1]} : vector<72x64xbf16> to vector<8x64xbf16>
    %c7_110 = arith.constant 7 : index
    %c0_111 = arith.constant 0 : index
    %c0_112 = arith.constant 0 : index
    %151 = vector.load %arg8[%c7_110, %c0_111, %c0_112] : memref<9x64x128xbf16, #tpu.memory_space<vmem>>, vector<1x64x128xbf16>
    %152 = vector.shape_cast %151 : vector<1x64x128xbf16> to vector<64x128xbf16>
    %cst_113 = arith.constant dense<0.000000e+00> : vector<8x128xf32>
    %153 = tpu.matmul %150, %152, %cst_113 {dimension_numbers = #tpu.dot_dimension_numbers<[1], [0], [0], [1], [0, 0, 1, 1], [], []>} : vector<8x64xbf16>, vector<64x128xbf16>, vector<8x128xf32> -> vector<8x128xf32>
    %154 = arith.addf %149, %153 : vector<8x128xf32>
    %155 = vector.extract_strided_slice %113 {offsets = [64, 0], sizes = [8, 64], strides = [1, 1]} : vector<72x64xbf16> to vector<8x64xbf16>
    %c8_114 = arith.constant 8 : index
    %c0_115 = arith.constant 0 : index
    %c0_116 = arith.constant 0 : index
    %156 = vector.load %arg8[%c8_114, %c0_115, %c0_116] : memref<9x64x128xbf16, #tpu.memory_space<vmem>>, vector<1x64x128xbf16>
    %157 = vector.shape_cast %156 : vector<1x64x128xbf16> to vector<64x128xbf16>
    %cst_117 = arith.constant dense<0.000000e+00> : vector<8x128xf32>
    %158 = tpu.matmul %155, %157, %cst_117 {dimension_numbers = #tpu.dot_dimension_numbers<[1], [0], [0], [1], [0, 0, 1, 1], [], []>} : vector<8x64xbf16>, vector<64x128xbf16>, vector<8x128xf32> -> vector<8x128xf32>
    %159 = arith.addf %154, %158 : vector<8x128xf32>
    %c0_118 = arith.constant 0 : index
    %c0_119 = arith.constant 0 : index
    %160 = vector.load %arg9[%c0_118, %c0_119] : memref<1x128xf32, #tpu.memory_space<vmem>>, vector<1x128xf32>
    %161 = vector.broadcast %160 : vector<1x128xf32> to vector<8x128xf32>
    %162 = arith.addf %159, %161 : vector<8x128xf32>
    %cst_120 = arith.constant 0.000000e+00 : f32
    %163 = vector.broadcast %cst_120 : f32 to vector<8x128xf32>
    %164 = arith.maximumf %162, %163 : vector<8x128xf32>
    %165 = vector.extract_strided_slice %164 {offsets = [0, 0], sizes = [4, 128], strides = [1, 1]} : vector<8x128xf32> to vector<4x128xf32>
    %cst_121 = arith.constant dense<0.000000e+00> : vector<128xf32>
    %166 = vector.multi_reduction <add>, %165, %cst_121 [0] : vector<4x128xf32> to vector<128xf32>
    %167 = vector.shape_cast %166 : vector<128xf32> to vector<1x128xf32>
    %cst_122 = arith.constant 4.000000e+00 : f32
    %168 = vector.broadcast %cst_122 : f32 to vector<1x128xf32>
    %169 = arith.divf %167, %168 : vector<1x128xf32>
    %170 = vector.extract_strided_slice %169 {offsets = [0, 0], sizes = [1, 64], strides = [1, 1]} : vector<1x128xf32> to vector<1x64xf32>
    %c0_123 = arith.constant 0 : index
    %c0_124 = arith.constant 0 : index
    %171 = vector.load %arg10[%c0_123, %c0_124] : memref<64x128xf32, #tpu.memory_space<vmem>>, vector<64x128xf32>
    %cst_125 = arith.constant dense<0.000000e+00> : vector<1x128xf32>
    %172 = tpu.matmul %170, %171, %cst_125 {dimension_numbers = #tpu.dot_dimension_numbers<[1], [0], [0], [1], [0, 0, 1, 1], [], []>} : vector<1x64xf32>, vector<64x128xf32>, vector<1x128xf32> -> vector<1x128xf32>
    %c0_126 = arith.constant 0 : index
    %c0_127 = arith.constant 0 : index
    %173 = vector.load %arg11[%c0_126, %c0_127] : memref<1x128xf32, #tpu.memory_space<vmem>>, vector<1x128xf32>
    %174 = arith.addf %172, %173 : vector<1x128xf32>
    %175 = arith.mulf %174, %174 : vector<1x128xf32>
    %cst_128 = arith.constant dense<0.000000e+00> : vector<1xf32>
    %176 = vector.multi_reduction <add>, %175, %cst_128 [1] : vector<1x128xf32> to vector<1xf32>
    %177 = vector.shape_cast %176 : vector<1xf32> to vector<1x1xf32>
    %cst_129 = arith.constant 1.000000e-24 : f32
    %178 = vector.broadcast %cst_129 : f32 to vector<1x1xf32>
    %179 = arith.maximumf %177, %178 : vector<1x1xf32>
    %180 = math.rsqrt %179 : vector<1x1xf32>
    %181 = vector.broadcast %180 : vector<1x1xf32> to vector<1x128xf32>
    %182 = arith.mulf %174, %181 : vector<1x128xf32>
    %c0_130 = arith.constant 0 : index
    %c0_131 = arith.constant 0 : index
    %183 = vector.load %arg12[%c0_130, %c0_131] : memref<2x128xf32, #tpu.memory_space<vmem>>, vector<1x128xf32>
    tpu.vector_store %arg12[%c0_130, %c0_131], %182 {strides = array<i32>} : memref<2x128xf32, #tpu.memory_space<vmem>>, vector<1x128xf32>,
    %184 = vector.extract_strided_slice %169 {offsets = [0, 64], sizes = [1, 64], strides = [1, 1]} : vector<1x128xf32> to vector<1x64xf32>
    %c0_132 = arith.constant 0 : index
    %c0_133 = arith.constant 0 : index
    %185 = vector.load %arg10[%c0_132, %c0_133] : memref<64x128xf32, #tpu.memory_space<vmem>>, vector<64x128xf32>
    %cst_134 = arith.constant dense<0.000000e+00> : vector<1x128xf32>
    %186 = tpu.matmul %184, %185, %cst_134 {dimension_numbers = #tpu.dot_dimension_numbers<[1], [0], [0], [1], [0, 0, 1, 1], [], []>} : vector<1x64xf32>, vector<64x128xf32>, vector<1x128xf32> -> vector<1x128xf32>
    %c0_135 = arith.constant 0 : index
    %c0_136 = arith.constant 0 : index
    %187 = vector.load %arg11[%c0_135, %c0_136] : memref<1x128xf32, #tpu.memory_space<vmem>>, vector<1x128xf32>
    %188 = arith.addf %186, %187 : vector<1x128xf32>
    %189 = arith.mulf %188, %188 : vector<1x128xf32>
    %cst_137 = arith.constant dense<0.000000e+00> : vector<1xf32>
    %190 = vector.multi_reduction <add>, %189, %cst_137 [1] : vector<1x128xf32> to vector<1xf32>
    %191 = vector.shape_cast %190 : vector<1xf32> to vector<1x1xf32>
    %cst_138 = arith.constant 1.000000e-24 : f32
    %192 = vector.broadcast %cst_138 : f32 to vector<1x1xf32>
    %193 = arith.maximumf %191, %192 : vector<1x1xf32>
    %194 = math.rsqrt %193 : vector<1x1xf32>
    %195 = vector.broadcast %194 : vector<1x1xf32> to vector<1x128xf32>
    %196 = arith.mulf %188, %195 : vector<1x128xf32>
    %c1_139 = arith.constant 1 : index
    %c0_140 = arith.constant 0 : index
    %197 = vector.load %arg12[%c1_139, %c0_140] : memref<2x128xf32, #tpu.memory_space<vmem>>, vector<1x128xf32>
    tpu.vector_store %arg12[%c1_139, %c0_140], %196 {strides = array<i32>} : memref<2x128xf32, #tpu.memory_space<vmem>>, vector<1x128xf32>,
    return
  }
}

</mosaic_0001>

<llo_original>
// kernel: lightweight_cnn_forward.1
$region0: #{lightweight_cnn_forward.1}
  #allocation0 [shape = 'u32[]', space=smem, size = 0x4, offset = 0x4, fixed_abs, tag = 'smem constant byte address 0x4 - core index']
  #allocation1 [shape = 'u32[144,128]{1,0:T(1,128)}', space=vmem, size = 0x12000, scoped, tag = 'internal scratch']
  %s0 = inlined_call_operand.vmem [shape: bf16[256,6], index: 0, kind: input, shape index: {}]
  %s1 = inlined_call_operand.hbm [shape: bf16[576,256], index: 1, kind: input, shape index: {}]
  %s2 = inlined_call_operand.hbm [shape: bf16[9,6,32], index: 2, kind: input, shape index: {}]
  %s3 = inlined_call_operand.vmem [shape: f32[1,32], index: 3, kind: input, shape index: {}]
  %s4 = inlined_call_operand.vmem [shape: bf16[144,64], index: 4, kind: input, shape index: {}]
  %s5 = inlined_call_operand.vmem [shape: bf16[9,32,64], index: 5, kind: input, shape index: {}]
  %s6 = inlined_call_operand.vmem [shape: f32[1,64], index: 6, kind: input, shape index: {}]
  %s7 = inlined_call_operand.vmem [shape: bf16[72,16], index: 7, kind: input, shape index: {}]
  %s8 = inlined_call_operand.vmem [shape: bf16[9,64,128], index: 8, kind: input, shape index: {}]
  %s9 = inlined_call_operand.vmem [shape: f32[1,128], index: 9, kind: input, shape index: {}]
  %s10 = inlined_call_operand.hbm [shape: f32[64,128], index: 10, kind: input, shape index: {}]
  %s11 = inlined_call_operand.vmem [shape: f32[1,128], index: 11, kind: input, shape index: {}]
  %s12 = inlined_call_operand.hbm [shape: f32[2,128], index: 12, kind: output, shape index: {}]
  %s13 = sld [smem:[#allocation0]]
  $region70: #{lightweight_cnn_forward.1} parent=0
    _
  %s15 = ssub.s32 1, %s13
  %s16 = scalar_select 0, %s15, %s13
  $region1: #{lightweight_cnn_forward.1} parent=0
    #allocation2 [shape = 'u8[294912]{0}', space=vmem, size = 0x48000, scoped, tag = 'input window, operand 1, single buffered']
    #allocation3 [shape = 's32[1]{0}', space=sflag, size = 0x4, scoped, tag = 'scoped memory for lightweight_cnn_forward.1']
    #allocation4 [shape = 's32[1]{0}', space=sflag, size = 0x4, scoped, tag = 'scoped memory for lightweight_cnn_forward.1']
    #allocation5 [shape = 'u8[18432]{0}', space=vmem, size = 0x4800, scoped, tag = 'input window, operand 2, single buffered']
    #allocation6 [shape = 's32[1]{0}', space=sflag, size = 0x4, scoped, tag = 'scoped memory for lightweight_cnn_forward.1']
    #allocation7 [shape = 'u8[32768]{0}', space=vmem, size = 0x8000, scoped, tag = 'input window, operand 10, single buffered']
    #allocation8 [shape = 'u8[1024]{0}', space=vmem, size = 0x400, scoped, tag = 'output window, operand 0, single buffered']
    %17 = vsyncpa [#allocation3], 0
    %18 = vsyncpa [#allocation6], 0
    %19 = vsyncpa [#allocation4], 0
    // Predicated region
    $region2: #{lightweight_cnn_forward.1} parent=1 // pred_check
      _
    $region3: #{lightweight_cnn_forward.1} parent=1 // pred_check_branch
      %21 = sbr.rel (0) target = $region5
    $region4: #{lightweight_cnn_forward.1} parent=1 // pred_region
      _
    $region5: #{lightweight_cnn_forward.1} parent=1 // pred_fallthru
      _
    // Predicated region
    $region6: #{lightweight_cnn_forward.1} parent=1 // pred_check
      _
    $region7: #{lightweight_cnn_forward.1} parent=1 // pred_check_branch
      %23 = sbr.rel (0) target = $region9
    $region8: #{lightweight_cnn_forward.1} parent=1 // pred_region
      %s25 = ssub.s32 9216, 9216
      %26 = vsyncadd [#allocation3], %s25
      %s27 = sshll.u32 [#allocation2], 4
      %s28 = int_to_ptr.vmem [resolvable:$true] %s27
      %33 = dma.hbm_to_vmem [thread:$0]  %s1, 9216, %s28, [#allocation3], 128, 128, 8
    $region9: #{lightweight_cnn_forward.1} parent=1 // pred_fallthru
      _
    // Predicated region
    $region10: #{lightweight_cnn_forward.1} parent=1 // pred_check
      _
    $region11: #{lightweight_cnn_forward.1} parent=1 // pred_check_branch
      %35 = sbr.rel (0) target = $region13
    $region12: #{lightweight_cnn_forward.1} parent=1 // pred_region
      %s37 = ssub.s32 576, 576
      %38 = vsyncadd [#allocation6], %s37
      %s39 = sshll.u32 [#allocation5], 4
      %s40 = int_to_ptr.vmem [resolvable:$true] %s39
      %45 = dma.hbm_to_vmem [thread:$0]  %s2, 576, %s40, [#allocation6], 64, 64, 4
    $region13: #{lightweight_cnn_forward.1} parent=1 // pred_fallthru
      _
    // Predicated region
    $region14: #{lightweight_cnn_forward.1} parent=1 // pred_check
      _
    $region15: #{lightweight_cnn_forward.1} parent=1 // pred_check_branch
      %47 = sbr.rel (0) target = $region17
    $region16: #{lightweight_cnn_forward.1} parent=1 // pred_region
      _
    $region17: #{lightweight_cnn_forward.1} parent=1 // pred_fallthru
      _
    // Predicated region
    $region18: #{lightweight_cnn_forward.1} parent=1 // pred_check
      _
    $region19: #{lightweight_cnn_forward.1} parent=1 // pred_check_branch
      %49 = sbr.rel (0) target = $region21
    $region20: #{lightweight_cnn_forward.1} parent=1 // pred_region
      _
    $region21: #{lightweight_cnn_forward.1} parent=1 // pred_fallthru
      _
    // Predicated region
    $region22: #{lightweight_cnn_forward.1} parent=1 // pred_check
      _
    $region23: #{lightweight_cnn_forward.1} parent=1 // pred_check_branch
      %51 = sbr.rel (0) target = $region25
    $region24: #{lightweight_cnn_forward.1} parent=1 // pred_region
      _
    $region25: #{lightweight_cnn_forward.1} parent=1 // pred_fallthru
      _
    // Predicated region
    $region26: #{lightweight_cnn_forward.1} parent=1 // pred_check
      _
    $region27: #{lightweight_cnn_forward.1} parent=1 // pred_check_branch
      %53 = sbr.rel (0) target = $region29
    $region28: #{lightweight_cnn_forward.1} parent=1 // pred_region
      _
    $region29: #{lightweight_cnn_forward.1} parent=1 // pred_fallthru
      _
    // Predicated region
    $region30: #{lightweight_cnn_forward.1} parent=1 // pred_check
      _
    $region31: #{lightweight_cnn_forward.1} parent=1 // pred_check_branch
      %55 = sbr.rel (0) target = $region33
    $region32: #{lightweight_cnn_forward.1} parent=1 // pred_region
      _
    $region33: #{lightweight_cnn_forward.1} parent=1 // pred_fallthru
      _
    // Predicated region
    $region34: #{lightweight_cnn_forward.1} parent=1 // pred_check
      _
    $region35: #{lightweight_cnn_forward.1} parent=1 // pred_check_branch
      %57 = sbr.rel (0) target = $region37
    $region36: #{lightweight_cnn_forward.1} parent=1 // pred_region
      _
    $region37: #{lightweight_cnn_forward.1} parent=1 // pred_fallthru
      _
    // Predicated region
    $region38: #{lightweight_cnn_forward.1} parent=1 // pred_check
      _
    $region39: #{lightweight_cnn_forward.1} parent=1 // pred_check_branch
      %59 = sbr.rel (0) target = $region41
    $region40: #{lightweight_cnn_forward.1} parent=1 // pred_region
      _
    $region41: #{lightweight_cnn_forward.1} parent=1 // pred_fallthru
      _
    // Predicated region
    $region42: #{lightweight_cnn_forward.1} parent=1 // pred_check
      _
    $region43: #{lightweight_cnn_forward.1} parent=1 // pred_check_branch
      %61 = sbr.rel (0) target = $region45
    $region44: #{lightweight_cnn_forward.1} parent=1 // pred_region
      %s63 = ssub.s32 1024, 1024
      %64 = vsyncadd [#allocation6], %s63
      %s65 = sshll.u32 [#allocation7], 4
      %s66 = int_to_ptr.vmem [resolvable:$true] %s65
      %71 = dma.hbm_to_vmem [thread:$0]  %s10, 1024, %s66, [#allocation6], 128, 128, 8
    $region45: #{lightweight_cnn_forward.1} parent=1 // pred_fallthru
      _
    // Predicated region
    $region46: #{lightweight_cnn_forward.1} parent=1 // pred_check
      _
    $region47: #{lightweight_cnn_forward.1} parent=1 // pred_check_branch
      %73 = sbr.rel (0) target = $region49
    $region48: #{lightweight_cnn_forward.1} parent=1 // pred_region
      _
    $region49: #{lightweight_cnn_forward.1} parent=1 // pred_fallthru
      _
    // Predicated region
    $region50: #{lightweight_cnn_forward.1} parent=1 // pred_check
      _
    $region51: #{lightweight_cnn_forward.1} parent=1 // pred_check_branch
      %75 = sbr.rel (0) target = $region53
    $region52: #{lightweight_cnn_forward.1} parent=1 // pred_region
      %76 = dma.done [#allocation3], 9216
    $region53: #{lightweight_cnn_forward.1} parent=1 // pred_fallthru
      _
    // Predicated region
    $region54: #{lightweight_cnn_forward.1} parent=1 // pred_check
      _
    $region55: #{lightweight_cnn_forward.1} parent=1 // pred_check_branch
      %78 = sbr.rel (0) target = $region57
    $region56: #{lightweight_cnn_forward.1} parent=1 // pred_region
      %79 = dma.done [#allocation6], 576
    $region57: #{lightweight_cnn_forward.1} parent=1 // pred_fallthru
      _
    // Predicated region
    $region58: #{lightweight_cnn_forward.1} parent=1 // pred_check
      _
    $region59: #{lightweight_cnn_forward.1} parent=1 // pred_check_branch
      %81 = sbr.rel (0) target = $region61
    $region60: #{lightweight_cnn_forward.1} parent=1 // pred_region
      %82 = dma.done [#allocation6], 1024
    $region61: #{lightweight_cnn_forward.1} parent=1 // pred_fallthru
      _
    %v84 = vld [vmem:[%s0] sm:$0xf]
    %v85 = vld [vmem:[%s0 + $0x4] sm:$0xf]
    %v86 = vld [vmem:[%s0 + $0x8] sm:$0xf]
    %v87 = vld [vmem:[%s0 + $0xc] sm:$0xf]
    %v88 = vld [vmem:[%s0 + $0x10] sm:$0xf]
    %v89 = vld [vmem:[%s0 + $0x14] sm:$0xf]
    %v90 = vld [vmem:[%s0 + $0x18] sm:$0xf]
    %v91 = vld [vmem:[%s0 + $0x1c] sm:$0xf]
    %v92 = vld [vmem:[%s0 + $0x20] sm:$0xf]
    %v93 = vld [vmem:[%s0 + $0x24] sm:$0xf]
    %v94 = vld [vmem:[%s0 + $0x28] sm:$0xf]
    %v95 = vld [vmem:[%s0 + $0x2c] sm:$0xf]
    %v96 = vld [vmem:[%s0 + $0x30] sm:$0xf]
    %v97 = vld [vmem:[%s0 + $0x34] sm:$0xf]
    %v98 = vld [vmem:[%s0 + $0x38] sm:$0xf]
    %v99 = vld [vmem:[%s0 + $0x3c] sm:$0xf]
    %v100 = vld [vmem:[%s0 + $0x40] sm:$0xf]
    %v101 = vld [vmem:[%s0 + $0x44] sm:$0xf]
    %v102 = vld [vmem:[%s0 + $0x48] sm:$0xf]
    %v103 = vld [vmem:[%s0 + $0x4c] sm:$0xf]
    %v104 = vld [vmem:[%s0 + $0x50] sm:$0xf]
    %v105 = vld [vmem:[%s0 + $0x54] sm:$0xf]
    %v106 = vld [vmem:[%s0 + $0x58] sm:$0xf]
    %v107 = vld [vmem:[%s0 + $0x5c] sm:$0xf]
    %v108 = vld [vmem:[%s0 + $0x60] sm:$0xf]
    %v109 = vld [vmem:[%s0 + $0x64] sm:$0xf]
    %v110 = vld [vmem:[%s0 + $0x68] sm:$0xf]
    %v111 = vld [vmem:[%s0 + $0x6c] sm:$0xf]
    %v112 = vld [vmem:[%s0 + $0x70] sm:$0xf]
    %v113 = vld [vmem:[%s0 + $0x74] sm:$0xf]
    %v114 = vld [vmem:[%s0 + $0x78] sm:$0xf]
    %v115 = vld [vmem:[%s0 + $0x7c] sm:$0xf]
    %v116 = vld [vmem:[#allocation2] sm:$0xff]
    %v117 = vld [vmem:[#allocation2 + $0x8] sm:$0xff]
    %v118 = vld [vmem:[#allocation2 + $0x10] sm:$0xff]
    %v119 = vld [vmem:[#allocation2 + $0x18] sm:$0xff]
    %v120 = vld [vmem:[#allocation2 + $0x20] sm:$0xff]
    %v121 = vld [vmem:[#allocation2 + $0x28] sm:$0xff]
    %v122 = vld [vmem:[#allocation2 + $0x30] sm:$0xff]
    %v123 = vld [vmem:[#allocation2 + $0x38] sm:$0xff]
    %v124 = vld [vmem:[#allocation2 + $0x40] sm:$0xff]
    %v125 = vld [vmem:[#allocation2 + $0x48] sm:$0xff]
    %v126 = vld [vmem:[#allocation2 + $0x50] sm:$0xff]
    %v127 = vld [vmem:[#allocation2 + $0x58] sm:$0xff]
    %v128 = vld [vmem:[#allocation2 + $0x60] sm:$0xff]
    %v129 = vld [vmem:[#allocation2 + $0x68] sm:$0xff]
    %v130 = vld [vmem:[#allocation2 + $0x70] sm:$0xff]
    %v131 = vld [vmem:[#allocation2 + $0x78] sm:$0xff]
    %v132 = vld [vmem:[#allocation2 + $0x80] sm:$0xff]
    %v133 = vld [vmem:[#allocation2 + $0x88] sm:$0xff]
    %v134 = vld [vmem:[#allocation2 + $0x90] sm:$0xff]
    %v135 = vld [vmem:[#allocation2 + $0x98] sm:$0xff]
    %v136 = vld [vmem:[#allocation2 + $0xa0] sm:$0xff]
    %v137 = vld [vmem:[#allocation2 + $0xa8] sm:$0xff]
    %v138 = vld [vmem:[#allocation2 + $0xb0] sm:$0xff]
    %v139 = vld [vmem:[#allocation2 + $0xb8] sm:$0xff]
    %v140 = vld [vmem:[#allocation2 + $0xc0] sm:$0xff]
    %v141 = vld [vmem:[#allocation2 + $0xc8] sm:$0xff]
    %v142 = vld [vmem:[#allocation2 + $0xd0] sm:$0xff]
    %v143 = vld [vmem:[#allocation2 + $0xd8] sm:$0xff]
    %v144 = vld [vmem:[#allocation2 + $0xe0] sm:$0xff]
    %v145 = vld [vmem:[#allocation2 + $0xe8] sm:$0xff]
    %v146 = vld [vmem:[#allocation2 + $0xf0] sm:$0xff]
    %v147 = vld [vmem:[#allocation2 + $0xf8] sm:$0xff]
    %v148 = vld [vmem:[#allocation2 + $0x100] sm:$0xff]
    %v149 = vld [vmem:[#allocation2 + $0x108] sm:$0xff]
    %v150 = vld [vmem:[#allocation2 + $0x110] sm:$0xff]
    %v151 = vld [vmem:[#allocation2 + $0x118] sm:$0xff]
    %v152 = vld [vmem:[#allocation2 + $0x120] sm:$0xff]
    %v153 = vld [vmem:[#allocation2 + $0x128] sm:$0xff]
    %v154 = vld [vmem:[#allocation2 + $0x130] sm:$0xff]
    %v155 = vld [vmem:[#allocation2 + $0x138] sm:$0xff]
    %v156 = vld [vmem:[#allocation2 + $0x140] sm:$0xff]
    %v157 = vld [vmem:[#allocation2 + $0x148] sm:$0xff]
    %v158 = vld [vmem:[#allocation2 + $0x150] sm:$0xff]
    %v159 = vld [vmem:[#allocation2 + $0x158] sm:$0xff]
    %v160 = vld [vmem:[#allocation2 + $0x160] sm:$0xff]
    %v161 = vld [vmem:[#allocation2 + $0x168] sm:$0xff]
    %v162 = vld [vmem:[#allocation2 + $0x170] sm:$0xff]
    %v163 = vld [vmem:[#allocation2 + $0x178] sm:$0xff]
    %v164 = vld [vmem:[#allocation2 + $0x180] sm:$0xff]
    %v165 = vld [vmem:[#allocation2 + $0x188] sm:$0xff]
    %v166 = vld [vmem:[#allocation2 + $0x190] sm:$0xff]
    %v167 = vld [vmem:[#allocation2 + $0x198] sm:$0xff]
    %v168 = vld [vmem:[#allocation2 + $0x1a0] sm:$0xff]
    %v169 = vld [vmem:[#allocation2 + $0x1a8] sm:$0xff]
    %v170 = vld [vmem:[#allocation2 + $0x1b0] sm:$0xff]
    %v171 = vld [vmem:[#allocation2 + $0x1b8] sm:$0xff]
    %v172 = vld [vmem:[#allocation2 + $0x1c0] sm:$0xff]
    %v173 = vld [vmem:[#allocation2 + $0x1c8] sm:$0xff]
    %v174 = vld [vmem:[#allocation2 + $0x1d0] sm:$0xff]
    %v175 = vld [vmem:[#allocation2 + $0x1d8] sm:$0xff]
    %v176 = vld [vmem:[#allocation2 + $0x1e0] sm:$0xff]
    %v177 = vld [vmem:[#allocation2 + $0x1e8] sm:$0xff]
    %v178 = vld [vmem:[#allocation2 + $0x1f0] sm:$0xff]
    %v179 = vld [vmem:[#allocation2 + $0x1f8] sm:$0xff]
    %v180 = vld [vmem:[#allocation2 + $0x200] sm:$0xff]
    %v181 = vld [vmem:[#allocation2 + $0x208] sm:$0xff]
    %v182 = vld [vmem:[#allocation2 + $0x210] sm:$0xff]
    %v183 = vld [vmem:[#allocation2 + $0x218] sm:$0xff]
    %v184 = vld [vmem:[#allocation2 + $0x220] sm:$0xff]
    %v185 = vld [vmem:[#allocation2 + $0x228] sm:$0xff]
    %v186 = vld [vmem:[#allocation2 + $0x230] sm:$0xff]
    %v187 = vld [vmem:[#allocation2 + $0x238] sm:$0xff]
    %v260 = vunpack.c.l.b16 %v116
    %v261 = vunpack.c.h.b16 %v116
    %v262 = vunpack.c.l.b16 %v117
    %v263 = vunpack.c.h.b16 %v117
    %v264 = vunpack.c.l.b16 %v118
    %v265 = vunpack.c.h.b16 %v118
    %v266 = vunpack.c.l.b16 %v119
    %v267 = vunpack.c.h.b16 %v119
    %v268 = vunpack.c.l.b16 %v120
    %v269 = vunpack.c.h.b16 %v120
    %v270 = vunpack.c.l.b16 %v121
    %v271 = vunpack.c.h.b16 %v121
    %v272 = vunpack.c.l.b16 %v122
    %v273 = vunpack.c.h.b16 %v122
    %v274 = vunpack.c.l.b16 %v123
    %v275 = vunpack.c.h.b16 %v123
    %v276 = vunpack.c.l.b16 %v124
    %v277 = vunpack.c.h.b16 %v124
    %v278 = vunpack.c.l.b16 %v125
    %v279 = vunpack.c.h.b16 %v125
    %v280 = vunpack.c.l.b16 %v126
    %v281 = vunpack.c.h.b16 %v126
    %v282 = vunpack.c.l.b16 %v127
    %v283 = vunpack.c.h.b16 %v127
    %v284 = vunpack.c.l.b16 %v128
    %v285 = vunpack.c.h.b16 %v128
    %v286 = vunpack.c.l.b16 %v129
    %v287 = vunpack.c.h.b16 %v129
    %v288 = vunpack.c.l.b16 %v130
    %v289 = vunpack.c.h.b16 %v130
    %v290 = vunpack.c.l.b16 %v131
    %v291 = vunpack.c.h.b16 %v131
    %v292 = vunpack.c.l.b16 %v132
    %v293 = vunpack.c.h.b16 %v132
    %v294 = vunpack.c.l.b16 %v133
    %v295 = vunpack.c.h.b16 %v133
    %v296 = vunpack.c.l.b16 %v134
    %v297 = vunpack.c.h.b16 %v134
    %v298 = vunpack.c.l.b16 %v135
    %v299 = vunpack.c.h.b16 %v135
    %v300 = vunpack.c.l.b16 %v136
    %v301 = vunpack.c.h.b16 %v136
    %v302 = vunpack.c.l.b16 %v137
    %v303 = vunpack.c.h.b16 %v137
    %v304 = vunpack.c.l.b16 %v138
    %v305 = vunpack.c.h.b16 %v138
    %v306 = vunpack.c.l.b16 %v139
    %v307 = vunpack.c.h.b16 %v139
    %v308 = vunpack.c.l.b16 %v140
    %v309 = vunpack.c.h.b16 %v140
    %v310 = vunpack.c.l.b16 %v141
    %v311 = vunpack.c.h.b16 %v141
    %v312 = vunpack.c.l.b16 %v142
    %v313 = vunpack.c.h.b16 %v142
    %v314 = vunpack.c.l.b16 %v143
    %v315 = vunpack.c.h.b16 %v143
    %v316 = vunpack.c.l.b16 %v144
    %v317 = vunpack.c.h.b16 %v144
    %v318 = vunpack.c.l.b16 %v145
    %v319 = vunpack.c.h.b16 %v145
    %v320 = vunpack.c.l.b16 %v146
    %v321 = vunpack.c.h.b16 %v146
    %v322 = vunpack.c.l.b16 %v147
    %v323 = vunpack.c.h.b16 %v147
    %v324 = vunpack.c.l.b16 %v148
    %v325 = vunpack.c.h.b16 %v148
    %v326 = vunpack.c.l.b16 %v149
    %v327 = vunpack.c.h.b16 %v149
    %v328 = vunpack.c.l.b16 %v150
    %v329 = vunpack.c.h.b16 %v150
    %v330 = vunpack.c.l.b16 %v151
    %v331 = vunpack.c.h.b16 %v151
    %v332 = vunpack.c.l.b16 %v152
    %v333 = vunpack.c.h.b16 %v152
    %v334 = vunpack.c.l.b16 %v153
    %v335 = vunpack.c.h.b16 %v153
    %v336 = vunpack.c.l.b16 %v154
    %v337 = vunpack.c.h.b16 %v154
    %v338 = vunpack.c.l.b16 %v155
    %v339 = vunpack.c.h.b16 %v155
    %v340 = vunpack.c.l.b16 %v156
    %v341 = vunpack.c.h.b16 %v156
    %v342 = vunpack.c.l.b16 %v157
    %v343 = vunpack.c.h.b16 %v157
    %v344 = vunpack.c.l.b16 %v158
    %v345 = vunpack.c.h.b16 %v158
    %v346 = vunpack.c.l.b16 %v159
    %v347 = vunpack.c.h.b16 %v159
    %v348 = vunpack.c.l.b16 %v160
    %v349 = vunpack.c.h.b16 %v160
    %v350 = vunpack.c.l.b16 %v161
    %v351 = vunpack.c.h.b16 %v161
    %v352 = vunpack.c.l.b16 %v162
    %v353 = vunpack.c.h.b16 %v162
    %v354 = vunpack.c.l.b16 %v163
    %v355 = vunpack.c.h.b16 %v163
    %v356 = vunpack.c.l.b16 %v164
    %v357 = vunpack.c.h.b16 %v164
    %v358 = vunpack.c.l.b16 %v165
    %v359 = vunpack.c.h.b16 %v165
    %v360 = vunpack.c.l.b16 %v166
    %v361 = vunpack.c.h.b16 %v166
    %v362 = vunpack.c.l.b16 %v167
    %v363 = vunpack.c.h.b16 %v167
    %v364 = vunpack.c.l.b16 %v168
    %v365 = vunpack.c.h.b16 %v168
    %v366 = vunpack.c.l.b16 %v169
    %v367 = vunpack.c.h.b16 %v169
    %v368 = vunpack.c.l.b16 %v170
    %v369 = vunpack.c.h.b16 %v170
    %v370 = vunpack.c.l.b16 %v171
    %v371 = vunpack.c.h.b16 %v171
    %v372 = vunpack.c.l.b16 %v172
    %v373 = vunpack.c.h.b16 %v172
    %v374 = vunpack.c.l.b16 %v173
    %v375 = vunpack.c.h.b16 %v173
    %v376 = vunpack.c.l.b16 %v174
    %v377 = vunpack.c.h.b16 %v174
    %v378 = vunpack.c.l.b16 %v175
    %v379 = vunpack.c.h.b16 %v175
    %v380 = vunpack.c.l.b16 %v176
    %v381 = vunpack.c.h.b16 %v176
    %v382 = vunpack.c.l.b16 %v177
    %v383 = vunpack.c.h.b16 %v177
    %v384 = vunpack.c.l.b16 %v178
    %v385 = vunpack.c.h.b16 %v178
    %v386 = vunpack.c.l.b16 %v179
    %v387 = vunpack.c.h.b16 %v179
    %v388 = vunpack.c.l.b16 %v180
    %v389 = vunpack.c.h.b16 %v180
    %v390 = vunpack.c.l.b16 %v181
    %v391 = vunpack.c.h.b16 %v181
    %v392 = vunpack.c.l.b16 %v182
    %v393 = vunpack.c.h.b16 %v182
    %v394 = vunpack.c.l.b16 %v183
    %v395 = vunpack.c.h.b16 %v183
    %v396 = vunpack.c.l.b16 %v184
    %v397 = vunpack.c.h.b16 %v184
    %v398 = vunpack.c.l.b16 %v185
    %v399 = vunpack.c.h.b16 %v185
    %v400 = vunpack.c.l.b16 %v186
    %v401 = vunpack.c.h.b16 %v186
    %v402 = vunpack.c.l.b16 %v187
    %v403 = vunpack.c.h.b16 %v187
    %v404 = vpack.c.b16 %v262, %v260
    %v405 = vpack.c.b16 %v263, %v261
    %v406 = vpack.c.b16 %v266, %v264
    %v407 = vpack.c.b16 %v267, %v265
    %v408 = vpack.c.b16 %v270, %v268
    %v409 = vpack.c.b16 %v271, %v269
    %v410 = vpack.c.b16 %v274, %v272
    %v411 = vpack.c.b16 %v275, %v273
    %v412 = vpack.c.b16 %v278, %v276
    %v413 = vpack.c.b16 %v279, %v277
    %v414 = vpack.c.b16 %v282, %v280
    %v415 = vpack.c.b16 %v283, %v281
    %v416 = vpack.c.b16 %v286, %v284
    %v417 = vpack.c.b16 %v287, %v285
    %v418 = vpack.c.b16 %v290, %v288
    %v419 = vpack.c.b16 %v291, %v289
    %v420 = vpack.c.b16 %v294, %v292
    %v421 = vpack.c.b16 %v295, %v293
    %v422 = vpack.c.b16 %v298, %v296
    %v423 = vpack.c.b16 %v299, %v297
    %v424 = vpack.c.b16 %v302, %v300
    %v425 = vpack.c.b16 %v303, %v301
    %v426 = vpack.c.b16 %v306, %v304
    %v427 = vpack.c.b16 %v307, %v305
    %v428 = vpack.c.b16 %v310, %v308
    %v429 = vpack.c.b16 %v311, %v309
    %v430 = vpack.c.b16 %v314, %v312
    %v431 = vpack.c.b16 %v315, %v313
    %v432 = vpack.c.b16 %v318, %v316
    %v433 = vpack.c.b16 %v319, %v317
    %v434 = vpack.c.b16 %v322, %v320
    %v435 = vpack.c.b16 %v323, %v321
    %v436 = vpack.c.b16 %v326, %v324
    %v437 = vpack.c.b16 %v327, %v325
    %v438 = vpack.c.b16 %v330, %v328
    %v439 = vpack.c.b16 %v331, %v329
    %v440 = vpack.c.b16 %v334, %v332
    %v441 = vpack.c.b16 %v335, %v333
    %v442 = vpack.c.b16 %v338, %v336
    %v443 = vpack.c.b16 %v339, %v337
    %v444 = vpack.c.b16 %v342, %v340
    %v445 = vpack.c.b16 %v343, %v341
    %v446 = vpack.c.b16 %v346, %v344
    %v447 = vpack.c.b16 %v347, %v345
    %v448 = vpack.c.b16 %v350, %v348
    %v449 = vpack.c.b16 %v351, %v349
    %v450 = vpack.c.b16 %v354, %v352
    %v451 = vpack.c.b16 %v355, %v353
    %v452 = vpack.c.b16 %v358, %v356
    %v453 = vpack.c.b16 %v359, %v357
    %v454 = vpack.c.b16 %v362, %v360
    %v455 = vpack.c.b16 %v363, %v361
    %v456 = vpack.c.b16 %v366, %v364
    %v457 = vpack.c.b16 %v367, %v365
    %v458 = vpack.c.b16 %v370, %v368
    %v459 = vpack.c.b16 %v371, %v369
    %v460 = vpack.c.b16 %v374, %v372
    %v461 = vpack.c.b16 %v375, %v373
    %v462 = vpack.c.b16 %v378, %v376
    %v463 = vpack.c.b16 %v379, %v377
    %v464 = vpack.c.b16 %v382, %v380
    %v465 = vpack.c.b16 %v383, %v381
    %v466 = vpack.c.b16 %v386, %v384
    %v467 = vpack.c.b16 %v387, %v385
    %v468 = vpack.c.b16 %v390, %v388
    %v469 = vpack.c.b16 %v391, %v389
    %v470 = vpack.c.b16 %v394, %v392
    %v471 = vpack.c.b16 %v395, %v393
    %v472 = vpack.c.b16 %v398, %v396
    %v473 = vpack.c.b16 %v399, %v397
    %v474 = vpack.c.b16 %v402, %v400
    %v475 = vpack.c.b16 %v403, %v401
    %v580 = vunpack.c.l.b16 %v84
    %v581 = vunpack.c.l.b16 %v85
    %v582 = vunpack.c.l.b16 %v86
    %v583 = vunpack.c.l.b16 %v87
    %v584 = vunpack.c.l.b16 %v88
    %v585 = vunpack.c.l.b16 %v89
    %v586 = vunpack.c.l.b16 %v90
    %v587 = vunpack.c.l.b16 %v91
    %v588 = vunpack.c.l.b16 %v92
    %v589 = vunpack.c.l.b16 %v93
    %v590 = vunpack.c.l.b16 %v94
    %v591 = vunpack.c.l.b16 %v95
    %v592 = vunpack.c.l.b16 %v96
    %v593 = vunpack.c.l.b16 %v97
    %v594 = vunpack.c.l.b16 %v98
    %v595 = vunpack.c.l.b16 %v99
    %v596 = vunpack.c.l.b16 %v100
    %v597 = vunpack.c.l.b16 %v101
    %v598 = vunpack.c.l.b16 %v102
    %v599 = vunpack.c.l.b16 %v103
    %v600 = vunpack.c.l.b16 %v104
    %v601 = vunpack.c.l.b16 %v105
    %v602 = vunpack.c.l.b16 %v106
    %v603 = vunpack.c.l.b16 %v107
    %v604 = vunpack.c.l.b16 %v108
    %v605 = vunpack.c.l.b16 %v109
    %v606 = vunpack.c.l.b16 %v110
    %v607 = vunpack.c.l.b16 %v111
    %v608 = vunpack.c.l.b16 %v112
    %v609 = vunpack.c.l.b16 %v113
    %v610 = vunpack.c.l.b16 %v114
    %v611 = vunpack.c.l.b16 %v115
    %v612 = vpack.c.b16 %v581, %v580
    %v613 = vpack.c.b16 %v583, %v582
    %v614 = vpack.c.b16 %v585, %v584
    %v615 = vpack.c.b16 %v587, %v586
    %v616 = vpack.c.b16 %v589, %v588
    %v617 = vpack.c.b16 %v591, %v590
    %v618 = vpack.c.b16 %v593, %v592
    %v619 = vpack.c.b16 %v595, %v594
    %v620 = vpack.c.b16 %v597, %v596
    %v621 = vpack.c.b16 %v599, %v598
    %v622 = vpack.c.b16 %v601, %v600
    %v623 = vpack.c.b16 %v603, %v602
    %v624 = vpack.c.b16 %v605, %v604
    %v625 = vpack.c.b16 %v607, %v606
    %v626 = vpack.c.b16 %v609, %v608
    %v627 = vpack.c.b16 %v611, %v610
    %644 = vmatprep.subr.bf16.mxu0 0
    %645 = vmatpush1.bf16.msra.mxu0 %v612
    %646 = vmatprep.subr.bf16.mxu0 0
    %647 = vmatpush1.bf16.msra.mxu0 %v613
    %648 = vmatprep.subr.bf16.mxu0 0
    %649 = vmatpush1.bf16.msra.mxu0 %v614
    %650 = vmatprep.subr.bf16.mxu0 0
    %651 = vmatpush1.bf16.msra.mxu0 %v615
    %652 = vmatprep.subr.bf16.mxu0 0
    %653 = vmatpush1.bf16.msra.mxu0 %v616
    %654 = vmatprep.subr.bf16.mxu0 0
    %655 = vmatpush1.bf16.msra.mxu0 %v617
    %656 = vmatprep.subr.bf16.mxu0 0
    %657 = vmatpush1.bf16.msra.mxu0 %v618
    %658 = vmatprep.subr.bf16.mxu0 0
    %659 = vmatpush1.bf16.msra.mxu0 %v619
    %660 = vmatprep.subr.bf16.mxu0 0
    %661 = vmatpush1.bf16.msra.mxu0 %v620
    %662 = vmatprep.subr.bf16.mxu0 0
    %663 = vmatpush1.bf16.msra.mxu0 %v621
    %664 = vmatprep.subr.bf16.mxu0 0
    %665 = vmatpush1.bf16.msra.mxu0 %v622
    %666 = vmatprep.subr.bf16.mxu0 0
    %667 = vmatpush1.bf16.msra.mxu0 %v623
    %668 = vmatprep.subr.bf16.mxu0 0
    %669 = vmatpush1.bf16.msra.mxu0 %v624
    %670 = vmatprep.subr.bf16.mxu0 0
    %671 = vmatpush1.bf16.msra.mxu0 %v625
    %672 = vmatprep.subr.bf16.mxu0 0
    %673 = vmatpush1.bf16.msra.mxu0 %v626
    %674 = vmatprep.subr.bf16.mxu0 0
    %675 = vmatpush1.bf16.msra.mxu0 %v627
    %676 = vmatprep.mubr.bf16.mxu0 %v405
    %677 = vmatmul.mubr.bf16.gmra.mrb[0].mxu0 %v404
    %v678 = vpop.f32.mrb[0].mxu0
    %v679 = vadd.f32 0.0, %v678
    %v680 = vpop.f32.mrb[0].mxu0
    %v681 = vpop.f32.mrb[0].mxu0
    %v682 = vadd.f32 0.0, %v681
    %v683 = vpop.f32.mrb[0].mxu0
    %684 = vmatprep.mubr.bf16.mxu0 %v407
    %685 = vmatmul.mubr.bf16.gmra.mrb[0].mxu0 %v406
    %v686 = vpop.f32.mrb[0].mxu0
    %v687 = vadd.f32 0.0, %v686
    %v688 = vpop.f32.mrb[0].mxu0
    %v689 = vpop.f32.mrb[0].mxu0
    %v690 = vadd.f32 0.0, %v689
    %v691 = vpop.f32.mrb[0].mxu0
    %692 = vmatprep.mubr.bf16.mxu0 %v409
    %693 = vmatmul.mubr.bf16.gmra.mrb[0].mxu0 %v408
    %v694 = vpop.f32.mrb[0].mxu0
    %v695 = vadd.f32 0.0, %v694
    %v696 = vpop.f32.mrb[0].mxu0
    %v697 = vpop.f32.mrb[0].mxu0
    %v698 = vadd.f32 0.0, %v697
    %v699 = vpop.f32.mrb[0].mxu0
    %700 = vmatprep.mubr.bf16.mxu0 %v411
    %701 = vmatmul.mubr.bf16.gmra.mrb[0].mxu0 %v410
    %v702 = vpop.f32.mrb[0].mxu0
    %v703 = vadd.f32 0.0, %v702
    %v704 = vpop.f32.mrb[0].mxu0
    %v705 = vpop.f32.mrb[0].mxu0
    %v706 = vadd.f32 0.0, %v705
    %v707 = vpop.f32.mrb[0].mxu0
    %708 = vmatprep.mubr.bf16.mxu0 %v413
    %709 = vmatmul.mubr.bf16.gmra.mrb[0].mxu0 %v412
    %v710 = vpop.f32.mrb[0].mxu0
    %v711 = vadd.f32 0.0, %v710
    %v712 = vpop.f32.mrb[0].mxu0
    %v713 = vpop.f32.mrb[0].mxu0
    %v714 = vadd.f32 0.0, %v713
    %v715 = vpop.f32.mrb[0].mxu0
    %716 = vmatprep.mubr.bf16.mxu0 %v415
    %717 = vmatmul.mubr.bf16.gmra.mrb[0].mxu0 %v414
    %v718 = vpop.f32.mrb[0].mxu0
    %v719 = vadd.f32 0.0, %v718
    %v720 = vpop.f32.mrb[0].mxu0
    %v721 = vpop.f32.mrb[0].mxu0
    %v722 = vadd.f32 0.0, %v721
    %v723 = vpop.f32.mrb[0].mxu0
    %724 = vmatprep.mubr.bf16.mxu0 %v417
    %725 = vmatmul.mubr.bf16.gmra.mrb[0].mxu0 %v416
    %v726 = vpop.f32.mrb[0].mxu0
    %v727 = vadd.f32 0.0, %v726
    %v728 = vpop.f32.mrb[0].mxu0
    %v729 = vpop.f32.mrb[0].mxu0
    %v730 = vadd.f32 0.0, %v729
    %v731 = vpop.f32.mrb[0].mxu0
    %732 = vmatprep.mubr.bf16.mxu0 %v419
    %733 = vmatmul.mubr.bf16.gmra.mrb[0].mxu0 %v418
    %v734 = vpop.f32.mrb[0].mxu0
    %v735 = vadd.f32 0.0, %v734
    %v736 = vpop.f32.mrb[0].mxu0
    %v737 = vpop.f32.mrb[0].mxu0
    %v738 = vadd.f32 0.0, %v737
    %v739 = vpop.f32.mrb[0].mxu0
    %740 = vmatprep.mubr.bf16.mxu0 %v421
    %741 = vmatmul.mubr.bf16.gmra.mrb[0].mxu0 %v420
    %v742 = vpop.f32.mrb[0].mxu0
    %v743 = vadd.f32 0.0, %v742
    %v744 = vpop.f32.mrb[0].mxu0
    %v745 = vpop.f32.mrb[0].mxu0
    %v746 = vadd.f32 0.0, %v745
    %v747 = vpop.f32.mrb[0].mxu0
    %748 = vmatprep.mubr.bf16.mxu0 %v423
    %749 = vmatmul.mubr.bf16.gmra.mrb[0].mxu0 %v422
    %v750 = vpop.f32.mrb[0].mxu0
    %v751 = vadd.f32 0.0, %v750
    %v752 = vpop.f32.mrb[0].mxu0
    %v753 = vpop.f32.mrb[0].mxu0
    %v754 = vadd.f32 0.0, %v753
    %v755 = vpop.f32.mrb[0].mxu0
    %756 = vmatprep.mubr.bf16.mxu0 %v425
    %757 = vmatmul.mubr.bf16.gmra.mrb[0].mxu0 %v424
    %v758 = vpop.f32.mrb[0].mxu0
    %v759 = vadd.f32 0.0, %v758
    %v760 = vpop.f32.mrb[0].mxu0
    %v761 = vpop.f32.mrb[0].mxu0
    %v762 = vadd.f32 0.0, %v761
    %v763 = vpop.f32.mrb[0].mxu0
    %764 = vmatprep.mubr.bf16.mxu0 %v427
    %765 = vmatmul.mubr.bf16.gmra.mrb[0].mxu0 %v426
    %v766 = vpop.f32.mrb[0].mxu0
    %v767 = vadd.f32 0.0, %v766
    %v768 = vpop.f32.mrb[0].mxu0
    %v769 = vpop.f32.mrb[0].mxu0
    %v770 = vadd.f32 0.0, %v769
    %v771 = vpop.f32.mrb[0].mxu0
    %772 = vmatprep.mubr.bf16.mxu0 %v429
    %773 = vmatmul.mubr.bf16.gmra.mrb[0].mxu0 %v428
    %v774 = vpop.f32.mrb[0].mxu0
    %v775 = vadd.f32 0.0, %v774
    %v776 = vpop.f32.mrb[0].mxu0
    %v777 = vpop.f32.mrb[0].mxu0
    %v778 = vadd.f32 0.0, %v777
    %v779 = vpop.f32.mrb[0].mxu0
    %780 = vmatprep.mubr.bf16.mxu0 %v431
    %781 = vmatmul.mubr.bf16.gmra.mrb[0].mxu0 %v430
    %v782 = vpop.f32.mrb[0].mxu0
    %v783 = vadd.f32 0.0, %v782
    %v784 = vpop.f32.mrb[0].mxu0
    %v785 = vpop.f32.mrb[0].mxu0
    %v786 = vadd.f32 0.0, %v785
    %v787 = vpop.f32.mrb[0].mxu0
    %788 = vmatprep.mubr.bf16.mxu0 %v433
    %789 = vmatmul.mubr.bf16.gmra.mrb[0].mxu0 %v432
    %v790 = vpop.f32.mrb[0].mxu0
    %v791 = vadd.f32 0.0, %v790
    %v792 = vpop.f32.mrb[0].mxu0
    %v793 = vpop.f32.mrb[0].mxu0
    %v794 = vadd.f32 0.0, %v793
    %v795 = vpop.f32.mrb[0].mxu0
    %796 = vmatprep.mubr.bf16.mxu0 %v435
    %797 = vmatmul.mubr.bf16.gmra.mrb[0].mxu0 %v434
    %v798 = vpop.f32.mrb[0].mxu0
    %v799 = vadd.f32 0.0, %v798
    %v800 = vpop.f32.mrb[0].mxu0
    %v801 = vpop.f32.mrb[0].mxu0
    %v802 = vadd.f32 0.0, %v801
    %v803 = vpop.f32.mrb[0].mxu0
    %804 = vmatprep.mubr.bf16.mxu0 %v437
    %805 = vmatmul.mubr.bf16.gmra.mrb[0].mxu0 %v436
    %v806 = vpop.f32.mrb[0].mxu0
    %v807 = vadd.f32 0.0, %v806
    %v808 = vpop.f32.mrb[0].mxu0
    %v809 = vpop.f32.mrb[0].mxu0
    %v810 = vadd.f32 0.0, %v809
    %v811 = vpop.f32.mrb[0].mxu0
    %812 = vmatprep.mubr.bf16.mxu0 %v439
    %813 = vmatmul.mubr.bf16.gmra.mrb[0].mxu0 %v438
    %v814 = vpop.f32.mrb[0].mxu0
    %v815 = vadd.f32 0.0, %v814
    %v816 = vpop.f32.mrb[0].mxu0
    %v817 = vpop.f32.mrb[0].mxu0
    %v818 = vadd.f32 0.0, %v817
    %v819 = vpop.f32.mrb[0].mxu0
    %820 = vmatprep.mubr.bf16.mxu0 %v441
    %821 = vmatmul.mubr.bf16.gmra.mrb[0].mxu0 %v440
    %v822 = vpop.f32.mrb[0].mxu0
    %v823 = vadd.f32 0.0, %v822
    %v824 = vpop.f32.mrb[0].mxu0
    %v825 = vpop.f32.mrb[0].mxu0
    %v826 = vadd.f32 0.0, %v825
    %v827 = vpop.f32.mrb[0].mxu0
    %828 = vmatprep.mubr.bf16.mxu0 %v443
    %829 = vmatmul.mubr.bf16.gmra.mrb[0].mxu0 %v442
    %v830 = vpop.f32.mrb[0].mxu0
    %v831 = vadd.f32 0.0, %v830
    %v832 = vpop.f32.mrb[0].mxu0
    %v833 = vpop.f32.mrb[0].mxu0
    %v834 = vadd.f32 0.0, %v833
    %v835 = vpop.f32.mrb[0].mxu0
    %836 = vmatprep.mubr.bf16.mxu0 %v445
    %837 = vmatmul.mubr.bf16.gmra.mrb[0].mxu0 %v444
    %v838 = vpop.f32.mrb[0].mxu0
    %v839 = vadd.f32 0.0, %v838
    %v840 = vpop.f32.mrb[0].mxu0
    %v841 = vpop.f32.mrb[0].mxu0
    %v842 = vadd.f32 0.0, %v841
    %v843 = vpop.f32.mrb[0].mxu0
    %844 = vmatprep.mubr.bf16.mxu0 %v447
    %845 = vmatmul.mubr.bf16.gmra.mrb[0].mxu0 %v446
    %v846 = vpop.f32.mrb[0].mxu0
    %v847 = vadd.f32 0.0, %v846
    %v848 = vpop.f32.mrb[0].mxu0
    %v849 = vpop.f32.mrb[0].mxu0
    %v850 = vadd.f32 0.0, %v849
    %v851 = vpop.f32.mrb[0].mxu0
    %852 = vmatprep.mubr.bf16.mxu0 %v449
    %853 = vmatmul.mubr.bf16.gmra.mrb[0].mxu0 %v448
    %v854 = vpop.f32.mrb[0].mxu0
    %v855 = vadd.f32 0.0, %v854
    %v856 = vpop.f32.mrb[0].mxu0
    %v857 = vpop.f32.mrb[0].mxu0
    %v858 = vadd.f32 0.0, %v857
    %v859 = vpop.f32.mrb[0].mxu0
    %860 = vmatprep.mubr.bf16.mxu0 %v451
    %861 = vmatmul.mubr.bf16.gmra.mrb[0].mxu0 %v450
    %v862 = vpop.f32.mrb[0].mxu0
    %v863 = vadd.f32 0.0, %v862
    %v864 = vpop.f32.mrb[0].mxu0
    %v865 = vpop.f32.mrb[0].mxu0
    %v866 = vadd.f32 0.0, %v865
    %v867 = vpop.f32.mrb[0].mxu0
    %868 = vmatprep.mubr.bf16.mxu0 %v453
    %869 = vmatmul.mubr.bf16.gmra.mrb[0].mxu0 %v452
    %v870 = vpop.f32.mrb[0].mxu0
    %v871 = vadd.f32 0.0, %v870
    %v872 = vpop.f32.mrb[0].mxu0
    %v873 = vpop.f32.mrb[0].mxu0
    %v874 = vadd.f32 0.0, %v873
    %v875 = vpop.f32.mrb[0].mxu0
    %876 = vmatprep.mubr.bf16.mxu0 %v455
    %877 = vmatmul.mubr.bf16.gmra.mrb[0].mxu0 %v454
    %v878 = vpop.f32.mrb[0].mxu0
    %v879 = vadd.f32 0.0, %v878
    %v880 = vpop.f32.mrb[0].mxu0
    %v881 = vpop.f32.mrb[0].mxu0
    %v882 = vadd.f32 0.0, %v881
    %v883 = vpop.f32.mrb[0].mxu0
    %884 = vmatprep.mubr.bf16.mxu0 %v457
    %885 = vmatmul.mubr.bf16.gmra.mrb[0].mxu0 %v456
    %v886 = vpop.f32.mrb[0].mxu0
    %v887 = vadd.f32 0.0, %v886
    %v888 = vpop.f32.mrb[0].mxu0
    %v889 = vpop.f32.mrb[0].mxu0
    %v890 = vadd.f32 0.0, %v889
    %v891 = vpop.f32.mrb[0].mxu0
    %892 = vmatprep.mubr.bf16.mxu0 %v459
    %893 = vmatmul.mubr.bf16.gmra.mrb[0].mxu0 %v458
    %v894 = vpop.f32.mrb[0].mxu0
    %v895 = vadd.f32 0.0, %v894
    %v896 = vpop.f32.mrb[0].mxu0
    %v897 = vpop.f32.mrb[0].mxu0
    %v898 = vadd.f32 0.0, %v897
    %v899 = vpop.f32.mrb[0].mxu0
    %900 = vmatprep.mubr.bf16.mxu0 %v461
    %901 = vmatmul.mubr.bf16.gmra.mrb[0].mxu0 %v460
    %v902 = vpop.f32.mrb[0].mxu0
    %v903 = vadd.f32 0.0, %v902
    %v904 = vpop.f32.mrb[0].mxu0
    %v905 = vpop.f32.mrb[0].mxu0
    %v906 = vadd.f32 0.0, %v905
    %v907 = vpop.f32.mrb[0].mxu0
    %908 = vmatprep.mubr.bf16.mxu0 %v463
    %909 = vmatmul.mubr.bf16.gmra.mrb[0].mxu0 %v462
    %v910 = vpop.f32.mrb[0].mxu0
    %v911 = vadd.f32 0.0, %v910
    %v912 = vpop.f32.mrb[0].mxu0
    %v913 = vpop.f32.mrb[0].mxu0
    %v914 = vadd.f32 0.0, %v913
    %v915 = vpop.f32.mrb[0].mxu0
    %916 = vmatprep.mubr.bf16.mxu0 %v465
    %917 = vmatmul.mubr.bf16.gmra.mrb[0].mxu0 %v464
    %v918 = vpop.f32.mrb[0].mxu0
    %v919 = vadd.f32 0.0, %v918
    %v920 = vpop.f32.mrb[0].mxu0
    %v921 = vpop.f32.mrb[0].mxu0
    %v922 = vadd.f32 0.0, %v921
    %v923 = vpop.f32.mrb[0].mxu0
    %924 = vmatprep.mubr.bf16.mxu0 %v467
    %925 = vmatmul.mubr.bf16.gmra.mrb[0].mxu0 %v466
    %v926 = vpop.f32.mrb[0].mxu0
    %v927 = vadd.f32 0.0, %v926
    %v928 = vpop.f32.mrb[0].mxu0
    %v929 = vpop.f32.mrb[0].mxu0
    %v930 = vadd.f32 0.0, %v929
    %v931 = vpop.f32.mrb[0].mxu0
    %932 = vmatprep.mubr.bf16.mxu0 %v469
    %933 = vmatmul.mubr.bf16.gmra.mrb[0].mxu0 %v468
    %v934 = vpop.f32.mrb[0].mxu0
    %v935 = vadd.f32 0.0, %v934
    %v936 = vpop.f32.mrb[0].mxu0
    %v937 = vpop.f32.mrb[0].mxu0
    %v938 = vadd.f32 0.0, %v937
    %v939 = vpop.f32.mrb[0].mxu0
    %940 = vmatprep.mubr.bf16.mxu0 %v471
    %941 = vmatmul.mubr.bf16.gmra.mrb[0].mxu0 %v470
    %v942 = vpop.f32.mrb[0].mxu0
    %v943 = vadd.f32 0.0, %v942
    %v944 = vpop.f32.mrb[0].mxu0
    %v945 = vpop.f32.mrb[0].mxu0
    %v946 = vadd.f32 0.0, %v945
    %v947 = vpop.f32.mrb[0].mxu0
    %948 = vmatprep.mubr.bf16.mxu0 %v473
    %949 = vmatmul.mubr.bf16.gmra.mrb[0].mxu0 %v472
    %v950 = vpop.f32.mrb[0].mxu0
    %v951 = vadd.f32 0.0, %v950
    %v952 = vpop.f32.mrb[0].mxu0
    %v953 = vpop.f32.mrb[0].mxu0
    %v954 = vadd.f32 0.0, %v953
    %v955 = vpop.f32.mrb[0].mxu0
    %956 = vmatprep.mubr.bf16.mxu0 %v475
    %957 = vmatmul.mubr.bf16.gmra.mrb[0].mxu0 %v474
    %v958 = vpop.f32.mrb[0].mxu0
    %v959 = vadd.f32 0.0, %v958
    %v960 = vpop.f32.mrb[0].mxu0
    %v961 = vpop.f32.mrb[0].mxu0
    %v962 = vadd.f32 0.0, %v961
    %v963 = vpop.f32.mrb[0].mxu0
    %964 = vdwg.mxu0
    %v965 = vpack.c.bf16 %v682, %v679
    %v966 = vpack.c.bf16 %v690, %v687
    %v967 = vpack.c.bf16 %v698, %v695
    %v968 = vpack.c.bf16 %v706, %v703
    %v969 = vpack.c.bf16 %v714, %v711
    %v970 = vpack.c.bf16 %v722, %v719
    %v971 = vpack.c.bf16 %v730, %v727
    %v972 = vpack.c.bf16 %v738, %v735
    %v973 = vpack.c.bf16 %v746, %v743
    %v974 = vpack.c.bf16 %v754, %v751
    %v975 = vpack.c.bf16 %v762, %v759
    %v976 = vpack.c.bf16 %v770, %v767
    %v977 = vpack.c.bf16 %v778, %v775
    %v978 = vpack.c.bf16 %v786, %v783
    %v979 = vpack.c.bf16 %v794, %v791
    %v980 = vpack.c.bf16 %v802, %v799
    %v981 = vpack.c.bf16 %v810, %v807
    %v982 = vpack.c.bf16 %v818, %v815
    %v983 = vpack.c.bf16 %v826, %v823
    %v984 = vpack.c.bf16 %v834, %v831
    %v985 = vpack.c.bf16 %v842, %v839
    %v986 = vpack.c.bf16 %v850, %v847
    %v987 = vpack.c.bf16 %v858, %v855
    %v988 = vpack.c.bf16 %v866, %v863
    %v989 = vpack.c.bf16 %v874, %v871
    %v990 = vpack.c.bf16 %v882, %v879
    %v991 = vpack.c.bf16 %v890, %v887
    %v992 = vpack.c.bf16 %v898, %v895
    %v993 = vpack.c.bf16 %v906, %v903
    %v994 = vpack.c.bf16 %v914, %v911
    %v995 = vpack.c.bf16 %v922, %v919
    %v996 = vpack.c.bf16 %v930, %v927
    %v997 = vpack.c.bf16 %v938, %v935
    %v998 = vpack.c.bf16 %v946, %v943
    %v999 = vpack.c.bf16 %v954, %v951
    %v1000 = vpack.c.bf16 %v962, %v959
    %v1001 = vld [vmem:[#allocation5] sm:$0x7]
    %s1002 = scalar_lea.vmem [#allocation5], 4
    %v1003 = vld [vmem:[%s1002] sm:$0x7]
    %vm1004 = vcmask 48128
    %v1006 = vsel %vm1004, %v969, 0
    %v1009 = vsel %vm1004, %v970, 0
    %v1012 = vsel %vm1004, %v971, 0
    %v1015 = vsel %vm1004, %v972, 0
    %vm1017 = vcmask 1042432
    %v1019 = vsel %vm1017, %v1003, 0
    %1021 = vmatprep.subr.bf16.mxu0 0
    %1022 = vmatpush1.bf16.msra.mxu0 %v1019
    %1023 = vmatprep.subr.bf16.mxu0 0
    %1024 = vmatpush1.bf16.msra.mxu0 0
    %1025 = vmatprep.subr.bf16.mxu0 0
    %1026 = vmatpush1.bf16.msra.mxu0 0
    %1027 = vmatprep.subr.bf16.mxu0 0
    %1028 = vmatpush1.bf16.msra.mxu0 0
    %1029 = vmatprep.subr.bf16.mxu0 0
    %1030 = vmatpush1.bf16.msra.mxu0 0
    %1031 = vmatprep.subr.bf16.mxu0 0
    %1032 = vmatpush1.bf16.msra.mxu0 0
    %1033 = vmatprep.subr.bf16.mxu0 0
    %1034 = vmatpush1.bf16.msra.mxu0 0
    %1035 = vmatprep.subr.bf16.mxu0 0
    %1036 = vmatpush1.bf16.msra.mxu0 0
    %1037 = vmatprep.subr.bf16.mxu0 0
    %1038 = vmatpush1.bf16.msra.mxu0 0
    %1039 = vmatprep.subr.bf16.mxu0 0
    %1040 = vmatpush1.bf16.msra.mxu0 0
    %1041 = vmatprep.subr.bf16.mxu0 0
    %1042 = vmatpush1.bf16.msra.mxu0 0
    %1043 = vmatprep.subr.bf16.mxu0 0
    %1044 = vmatpush1.bf16.msra.mxu0 0
    %1045 = vmatprep.subr.bf16.mxu0 0
    %1046 = vmatpush1.bf16.msra.mxu0 0
    %1047 = vmatprep.subr.bf16.mxu0 0
    %1048 = vmatpush1.bf16.msra.mxu0 0
    %1049 = vmatprep.subr.bf16.mxu0 0
    %1050 = vmatpush1.bf16.msra.mxu0 0
    %1051 = vmatprep.subr.bf16.mxu0 0
    %1052 = vmatpush1.bf16.msra.mxu0 0
    %1053 = vmatprep.mubr.bf16.mxu0 0
    %1054 = vmatmul.mubr.bf16.gmra.mrb[0].mxu0 %v1006
    %v1055 = vpop.f32.mrb[0].mxu0
    %v1056 = vadd.f32 0.0, %v1055
    %v1057 = vpop.f32.mrb[0].mxu0
    %v1058 = vpop.f32.mrb[0].mxu0
    %v1059 = vadd.f32 0.0, %v1058
    %v1060 = vpop.f32.mrb[0].mxu0
    %1061 = vmatprep.mubr.bf16.mxu0 0
    %1062 = vmatmul.mubr.bf16.gmra.mrb[0].mxu0 %v1009
    %v1063 = vpop.f32.mrb[0].mxu0
    %v1064 = vadd.f32 0.0, %v1063
    %v1065 = vpop.f32.mrb[0].mxu0
    %v1066 = vpop.f32.mrb[0].mxu0
    %v1067 = vadd.f32 0.0, %v1066
    %v1068 = vpop.f32.mrb[0].mxu0
    %1069 = vmatprep.mubr.bf16.mxu0 0
    %1070 = vmatmul.mubr.bf16.gmra.mrb[0].mxu0 %v1012
    %v1071 = vpop.f32.mrb[0].mxu0
    %v1072 = vadd.f32 0.0, %v1071
    %v1073 = vpop.f32.mrb[0].mxu0
    %v1074 = vpop.f32.mrb[0].mxu0
    %v1075 = vadd.f32 0.0, %v1074
    %v1076 = vpop.f32.mrb[0].mxu0
    %1077 = vmatprep.mubr.bf16.mxu0 0
    %1078 = vmatmul.mubr.bf16.gmra.mrb[0].mxu0 %v1015
    %v1079 = vpop.f32.mrb[0].mxu0
    %v1080 = vadd.f32 0.0, %v1079
    %v1081 = vpop.f32.mrb[0].mxu0
    %v1082 = vpop.f32.mrb[0].mxu0
    %v1083 = vadd.f32 0.0, %v1082
    %v1084 = vpop.f32.mrb[0].mxu0
    %1085 = vdwg.mxu0
    %v1087 = vsel %vm1004, %v965, 0
    %v1090 = vsel %vm1004, %v966, 0
    %v1093 = vsel %vm1004, %v967, 0
    %v1096 = vsel %vm1004, %v968, 0
    %v1099 = vsel %vm1017, %v1001, 0
    %1101 = vmatprep.subr.bf16.mxu0 0
    %1102 = vmatpush1.bf16.msra.mxu0 %v1099
    %1103 = vmatprep.subr.bf16.mxu0 0
    %1104 = vmatpush1.bf16.msra.mxu0 0
    %1105 = vmatprep.subr.bf16.mxu0 0
    %1106 = vmatpush1.bf16.msra.mxu0 0
    %1107 = vmatprep.subr.bf16.mxu0 0
    %1108 = vmatpush1.bf16.msra.mxu0 0
    %1109 = vmatprep.subr.bf16.mxu0 0
    %1110 = vmatpush1.bf16.msra.mxu0 0
    %1111 = vmatprep.subr.bf16.mxu0 0
    %1112 = vmatpush1.bf16.msra.mxu0 0
    %1113 = vmatprep.subr.bf16.mxu0 0
    %1114 = vmatpush1.bf16.msra.mxu0 0
    %1115 = vmatprep.subr.bf16.mxu0 0
    %1116 = vmatpush1.bf16.msra.mxu0 0
    %1117 = vmatprep.subr.bf16.mxu0 0
    %1118 = vmatpush1.bf16.msra.mxu0 0
    %1119 = vmatprep.subr.bf16.mxu0 0
    %1120 = vmatpush1.bf16.msra.mxu0 0
    %1121 = vmatprep.subr.bf16.mxu0 0
    %1122 = vmatpush1.bf16.msra.mxu0 0
    %1123 = vmatprep.subr.bf16.mxu0 0
    %1124 = vmatpush1.bf16.msra.mxu0 0
    %1125 = vmatprep.subr.bf16.mxu0 0
    %1126 = vmatpush1.bf16.msra.mxu0 0
    %1127 = vmatprep.subr.bf16.mxu0 0
    %1128 = vmatpush1.bf16.msra.mxu0 0
    %1129 = vmatprep.subr.bf16.mxu0 0
    %1130 = vmatpush1.bf16.msra.mxu0 0
    %1131 = vmatprep.subr.bf16.mxu0 0
    %1132 = vmatpush1.bf16.msra.mxu0 0
    %1133 = vmatprep.mubr.bf16.mxu0 0
    %1134 = vmatmul.mubr.bf16.gmra.mrb[0].mxu0 %v1087
    %v1135 = vpop.f32.mrb[0].mxu0
    %v1136 = vadd.f32 %v1056, %v1135
    %v1137 = vpop.f32.mrb[0].mxu0
    %v1138 = vpop.f32.mrb[0].mxu0
    %v1139 = vadd.f32 %v1059, %v1138
    %v1140 = vpop.f32.mrb[0].mxu0
    %1141 = vmatprep.mubr.bf16.mxu0 0
    %1142 = vmatmul.mubr.bf16.gmra.mrb[0].mxu0 %v1090
    %v1143 = vpop.f32.mrb[0].mxu0
    %v1144 = vadd.f32 %v1064, %v1143
    %v1145 = vpop.f32.mrb[0].mxu0
    %v1146 = vpop.f32.mrb[0].mxu0
    %v1147 = vadd.f32 %v1067, %v1146
    %v1148 = vpop.f32.mrb[0].mxu0
    %1149 = vmatprep.mubr.bf16.mxu0 0
    %1150 = vmatmul.mubr.bf16.gmra.mrb[0].mxu0 %v1093
    %v1151 = vpop.f32.mrb[0].mxu0
    %v1152 = vadd.f32 %v1072, %v1151
    %v1153 = vpop.f32.mrb[0].mxu0
    %v1154 = vpop.f32.mrb[0].mxu0
    %v1155 = vadd.f32 %v1075, %v1154
    %v1156 = vpop.f32.mrb[0].mxu0
    %1157 = vmatprep.mubr.bf16.mxu0 0
    %1158 = vmatmul.mubr.bf16.gmra.mrb[0].mxu0 %v1096
    %v1159 = vpop.f32.mrb[0].mxu0
    %v1160 = vadd.f32 %v1080, %v1159
    %v1161 = vpop.f32.mrb[0].mxu0
    %v1162 = vpop.f32.mrb[0].mxu0
    %v1163 = vadd.f32 %v1083, %v1162
    %v1164 = vpop.f32.mrb[0].mxu0
    %1165 = vdwg.mxu0
    %s1166 = scalar_lea.vmem [#allocation5], 8
    %v1167 = vld [vmem:[%s1166] sm:$0x7]
    %v1169 = vsel %vm1004, %v973, 0
    %v1172 = vsel %vm1004, %v974, 0
    %v1175 = vsel %vm1004, %v975, 0
    %v1178 = vsel %vm1004, %v976, 0
    %v1181 = vsel %vm1017, %v1167, 0
    %1183 = vmatprep.subr.bf16.mxu0 0
    %1184 = vmatpush1.bf16.msra.mxu0 %v1181
    %1185 = vmatprep.subr.bf16.mxu0 0
    %1186 = vmatpush1.bf16.msra.mxu0 0
    %1187 = vmatprep.subr.bf16.mxu0 0
    %1188 = vmatpush1.bf16.msra.mxu0 0
    %1189 = vmatprep.subr.bf16.mxu0 0
    %1190 = vmatpush1.bf16.msra.mxu0 0
    %1191 = vmatprep.subr.bf16.mxu0 0
    %1192 = vmatpush1.bf16.msra.mxu0 0
    %1193 = vmatprep.subr.bf16.mxu0 0
    %1194 = vmatpush1.bf16.msra.mxu0 0
    %1195 = vmatprep.subr.bf16.mxu0 0
    %1196 = vmatpush1.bf16.msra.mxu0 0
    %1197 = vmatprep.subr.bf16.mxu0 0
    %1198 = vmatpush1.bf16.msra.mxu0 0
    %1199 = vmatprep.subr.bf16.mxu0 0
    %1200 = vmatpush1.bf16.msra.mxu0 0
    %1201 = vmatprep.subr.bf16.mxu0 0
    %1202 = vmatpush1.bf16.msra.mxu0 0
    %1203 = vmatprep.subr.bf16.mxu0 0
    %1204 = vmatpush1.bf16.msra.mxu0 0
    %1205 = vmatprep.subr.bf16.mxu0 0
    %1206 = vmatpush1.bf16.msra.mxu0 0
    %1207 = vmatprep.subr.bf16.mxu0 0
    %1208 = vmatpush1.bf16.msra.mxu0 0
    %1209 = vmatprep.subr.bf16.mxu0 0
    %1210 = vmatpush1.bf16.msra.mxu0 0
    %1211 = vmatprep.subr.bf16.mxu0 0
    %1212 = vmatpush1.bf16.msra.mxu0 0
    %1213 = vmatprep.subr.bf16.mxu0 0
    %1214 = vmatpush1.bf16.msra.mxu0 0
    %1215 = vmatprep.mubr.bf16.mxu0 0
    %1216 = vmatmul.mubr.bf16.gmra.mrb[0].mxu0 %v1169
    %v1217 = vpop.f32.mrb[0].mxu0
    %v1218 = vadd.f32 0.0, %v1217
    %v1219 = vpop.f32.mrb[0].mxu0
    %v1220 = vpop.f32.mrb[0].mxu0
    %v1221 = vadd.f32 0.0, %v1220
    %v1222 = vpop.f32.mrb[0].mxu0
    %1223 = vmatprep.mubr.bf16.mxu0 0
    %1224 = vmatmul.mubr.bf16.gmra.mrb[0].mxu0 %v1172
    %v1225 = vpop.f32.mrb[0].mxu0
    %v1226 = vadd.f32 0.0, %v1225
    %v1227 = vpop.f32.mrb[0].mxu0
    %v1228 = vpop.f32.mrb[0].mxu0
    %v1229 = vadd.f32 0.0, %v1228
    %v1230 = vpop.f32.mrb[0].mxu0
    %1231 = vmatprep.mubr.bf16.mxu0 0
    %1232 = vmatmul.mubr.bf16.gmra.mrb[0].mxu0 %v1175
    %v1233 = vpop.f32.mrb[0].mxu0
    %v1234 = vadd.f32 0.0, %v1233
    %v1235 = vpop.f32.mrb[0].mxu0
    %v1236 = vpop.f32.mrb[0].mxu0
    %v1237 = vadd.f32 0.0, %v1236
    %v1238 = vpop.f32.mrb[0].mxu0
    %1239 = vmatprep.mubr.bf16.mxu0 0
    %1240 = vmatmul.mubr.bf16.gmra.mrb[0].mxu0 %v1178
    %v1241 = vpop.f32.mrb[0].mxu0
    %v1242 = vadd.f32 0.0, %v1241
    %v1243 = vpop.f32.mrb[0].mxu0
    %v1244 = vpop.f32.mrb[0].mxu0
    %v1245 = vadd.f32 0.0, %v1244
    %v1246 = vpop.f32.mrb[0].mxu0
    %1247 = vdwg.mxu0
    %v1248 = vadd.f32 %v1136, %v1218
    %v1249 = vadd.f32 %v1139, %v1221
    %v1250 = vadd.f32 %v1144, %v1226
    %v1251 = vadd.f32 %v1147, %v1229
    %v1252 = vadd.f32 %v1152, %v1234
    %v1253 = vadd.f32 %v1155, %v1237
    %v1254 = vadd.f32 %v1160, %v1242
    %v1255 = vadd.f32 %v1163, %v1245
    %s1256 = scalar_lea.vmem [#allocation5], 12
    %v1257 = vld [vmem:[%s1256] sm:$0x7]
    %v1259 = vsel %vm1004, %v977, 0
    %v1262 = vsel %vm1004, %v978, 0
    %v1265 = vsel %vm1004, %v979, 0
    %v1268 = vsel %vm1004, %v980, 0
    %v1271 = vsel %vm1017, %v1257, 0
    %1273 = vmatprep.subr.bf16.mxu0 0
    %1274 = vmatpush1.bf16.msra.mxu0 %v1271
    %1275 = vmatprep.subr.bf16.mxu0 0
    %1276 = vmatpush1.bf16.msra.mxu0 0
    %1277 = vmatprep.subr.bf16.mxu0 0
    %1278 = vmatpush1.bf16.msra.mxu0 0
    %1279 = vmatprep.subr.bf16.mxu0 0
    %1280 = vmatpush1.bf16.msra.mxu0 0
    %1281 = vmatprep.subr.bf16.mxu0 0
    %1282 = vmatpush1.bf16.msra.mxu0 0
    %1283 = vmatprep.subr.bf16.mxu0 0
    %1284 = vmatpush1.bf16.msra.mxu0 0
    %1285 = vmatprep.subr.bf16.mxu0 0
    %1286 = vmatpush1.bf16.msra.mxu0 0
    %1287 = vmatprep.subr.bf16.mxu0 0
    %1288 = vmatpush1.bf16.msra.mxu0 0
    %1289 = vmatprep.subr.bf16.mxu0 0
    %1290 = vmatpush1.bf16.msra.mxu0 0
    %1291 = vmatprep.subr.bf16.mxu0 0
    %1292 = vmatpush1.bf16.msra.mxu0 0
    %1293 = vmatprep.subr.bf16.mxu0 0
    %1294 = vmatpush1.bf16.msra.mxu0 0
    %1295 = vmatprep.subr.bf16.mxu0 0
    %1296 = vmatpush1.bf16.msra.mxu0 0
    %1297 = vmatprep.subr.bf16.mxu0 0
    %1298 = vmatpush1.bf16.msra.mxu0 0
    %1299 = vmatprep.subr.bf16.mxu0 0
    %1300 = vmatpush1.bf16.msra.mxu0 0
    %1301 = vmatprep.subr.bf16.mxu0 0
    %1302 = vmatpush1.bf16.msra.mxu0 0
    %1303 = vmatprep.subr.bf16.mxu0 0
    %1304 = vmatpush1.bf16.msra.mxu0 0
    %1305 = vmatprep.mubr.bf16.mxu0 0
    %1306 = vmatmul.mubr.bf16.gmra.mrb[0].mxu0 %v1259
    %v1307 = vpop.f32.mrb[0].mxu0
    %v1308 = vadd.f32 0.0, %v1307
    %v1309 = vpop.f32.mrb[0].mxu0
    %v1310 = vpop.f32.mrb[0].mxu0
    %v1311 = vadd.f32 0.0, %v1310
    %v1312 = vpop.f32.mrb[0].mxu0
    %1313 = vmatprep.mubr.bf16.mxu0 0
    %1314 = vmatmul.mubr.bf16.gmra.mrb[0].mxu0 %v1262
    %v1315 = vpop.f32.mrb[0].mxu0
    %v1316 = vadd.f32 0.0, %v1315
    %v1317 = vpop.f32.mrb[0].mxu0
    %v1318 = vpop.f32.mrb[0].mxu0
    %v1319 = vadd.f32 0.0, %v1318
    %v1320 = vpop.f32.mrb[0].mxu0
    %1321 = vmatprep.mubr.bf16.mxu0 0
    %1322 = vmatmul.mubr.bf16.gmra.mrb[0].mxu0 %v1265
    %v1323 = vpop.f32.mrb[0].mxu0
    %v1324 = vadd.f32 0.0, %v1323
    %v1325 = vpop.f32.mrb[0].mxu0
    %v1326 = vpop.f32.mrb[0].mxu0
    %v1327 = vadd.f32 0.0, %v1326
    %v1328 = vpop.f32.mrb[0].mxu0
    %1329 = vmatprep.mubr.bf16.mxu0 0
    %1330 = vmatmul.mubr.bf16.gmra.mrb[0].mxu0 %v1268
    %v1331 = vpop.f32.mrb[0].mxu0
    %v1332 = vadd.f32 0.0, %v1331
    %v1333 = vpop.f32.mrb[0].mxu0
    %v1334 = vpop.f32.mrb[0].mxu0
    %v1335 = vadd.f32 0.0, %v1334
    %v1336 = vpop.f32.mrb[0].mxu0
    %1337 = vdwg.mxu0
    %v1338 = vadd.f32 %v1248, %v1308
    %v1339 = vadd.f32 %v1249, %v1311
    %v1340 = vadd.f32 %v1250, %v1316
    %v1341 = vadd.f32 %v1251, %v1319
    %v1342 = vadd.f32 %v1252, %v1324
    %v1343 = vadd.f32 %v1253, %v1327
    %v1344 = vadd.f32 %v1254, %v1332
    %v1345 = vadd.f32 %v1255, %v1335
    %s1346 = scalar_lea.vmem [#allocation5], 16
    %v1347 = vld [vmem:[%s1346] sm:$0x7]
    %v1349 = vsel %vm1004, %v981, 0
    %v1352 = vsel %vm1004, %v982, 0
    %v1355 = vsel %vm1004, %v983, 0
    %v1358 = vsel %vm1004, %v984, 0
    %v1361 = vsel %vm1017, %v1347, 0
    %1363 = vmatprep.subr.bf16.mxu0 0
    %1364 = vmatpush1.bf16.msra.mxu0 %v1361
    %1365 = vmatprep.subr.bf16.mxu0 0
    %1366 = vmatpush1.bf16.msra.mxu0 0
    %1367 = vmatprep.subr.bf16.mxu0 0
    %1368 = vmatpush1.bf16.msra.mxu0 0
    %1369 = vmatprep.subr.bf16.mxu0 0
    %1370 = vmatpush1.bf16.msra.mxu0 0
    %1371 = vmatprep.subr.bf16.mxu0 0
    %1372 = vmatpush1.bf16.msra.mxu0 0
    %1373 = vmatprep.subr.bf16.mxu0 0
    %1374 = vmatpush1.bf16.msra.mxu0 0
    %1375 = vmatprep.subr.bf16.mxu0 0
    %1376 = vmatpush1.bf16.msra.mxu0 0
    %1377 = vmatprep.subr.bf16.mxu0 0
    %1378 = vmatpush1.bf16.msra.mxu0 0
    %1379 = vmatprep.subr.bf16.mxu0 0
    %1380 = vmatpush1.bf16.msra.mxu0 0
    %1381 = vmatprep.subr.bf16.mxu0 0
    %1382 = vmatpush1.bf16.msra.mxu0 0
    %1383 = vmatprep.subr.bf16.mxu0 0
    %1384 = vmatpush1.bf16.msra.mxu0 0
    %1385 = vmatprep.subr.bf16.mxu0 0
    %1386 = vmatpush1.bf16.msra.mxu0 0
    %1387 = vmatprep.subr.bf16.mxu0 0
    %1388 = vmatpush1.bf16.msra.mxu0 0
    %1389 = vmatprep.subr.bf16.mxu0 0
    %1390 = vmatpush1.bf16.msra.mxu0 0
    %1391 = vmatprep.subr.bf16.mxu0 0
    %1392 = vmatpush1.bf16.msra.mxu0 0
    %1393 = vmatprep.subr.bf16.mxu0 0
    %1394 = vmatpush1.bf16.msra.mxu0 0
    %1395 = vmatprep.mubr.bf16.mxu0 0
    %1396 = vmatmul.mubr.bf16.gmra.mrb[0].mxu0 %v1349
    %v1397 = vpop.f32.mrb[0].mxu0
    %v1398 = vadd.f32 0.0, %v1397
    %v1399 = vpop.f32.mrb[0].mxu0
    %v1400 = vpop.f32.mrb[0].mxu0
    %v1401 = vadd.f32 0.0, %v1400
    %v1402 = vpop.f32.mrb[0].mxu0
    %1403 = vmatprep.mubr.bf16.mxu0 0
    %1404 = vmatmul.mubr.bf16.gmra.mrb[0].mxu0 %v1352
    %v1405 = vpop.f32.mrb[0].mxu0
    %v1406 = vadd.f32 0.0, %v1405
    %v1407 = vpop.f32.mrb[0].mxu0
    %v1408 = vpop.f32.mrb[0].mxu0
    %v1409 = vadd.f32 0.0, %v1408
    %v1410 = vpop.f32.mrb[0].mxu0
    %1411 = vmatprep.mubr.bf16.mxu0 0
    %1412 = vmatmul.mubr.bf16.gmra.mrb[0].mxu0 %v1355
    %v1413 = vpop.f32.mrb[0].mxu0
    %v1414 = vadd.f32 0.0, %v1413
    %v1415 = vpop.f32.mrb[0].mxu0
    %v1416 = vpop.f32.mrb[0].mxu0
    %v1417 = vadd.f32 0.0, %v1416
    %v1418 = vpop.f32.mrb[0].mxu0
    %1419 = vmatprep.mubr.bf16.mxu0 0
    %1420 = vmatmul.mubr.bf16.gmra.mrb[0].mxu0 %v1358
    %v1421 = vpop.f32.mrb[0].mxu0
    %v1422 = vadd.f32 0.0, %v1421
    %v1423 = vpop.f32.mrb[0].mxu0
    %v1424 = vpop.f32.mrb[0].mxu0
    %v1425 = vadd.f32 0.0, %v1424
    %v1426 = vpop.f32.mrb[0].mxu0
    %1427 = vdwg.mxu0
    %v1428 = vadd.f32 %v1338, %v1398
    %v1429 = vadd.f32 %v1339, %v1401
    %v1430 = vadd.f32 %v1340, %v1406
    %v1431 = vadd.f32 %v1341, %v1409
    %v1432 = vadd.f32 %v1342, %v1414
    %v1433 = vadd.f32 %v1343, %v1417
    %v1434 = vadd.f32 %v1344, %v1422
    %v1435 = vadd.f32 %v1345, %v1425
    %s1436 = scalar_lea.vmem [#allocation5], 20
    %v1437 = vld [vmem:[%s1436] sm:$0x7]
    %v1439 = vsel %vm1004, %v985, 0
    %v1442 = vsel %vm1004, %v986, 0
    %v1445 = vsel %vm1004, %v987, 0
    %v1448 = vsel %vm1004, %v988, 0
    %v1451 = vsel %vm1017, %v1437, 0
    %1453 = vmatprep.subr.bf16.mxu0 0
    %1454 = vmatpush1.bf16.msra.mxu0 %v1451
    %1455 = vmatprep.subr.bf16.mxu0 0
    %1456 = vmatpush1.bf16.msra.mxu0 0
    %1457 = vmatprep.subr.bf16.mxu0 0
    %1458 = vmatpush1.bf16.msra.mxu0 0
    %1459 = vmatprep.subr.bf16.mxu0 0
    %1460 = vmatpush1.bf16.msra.mxu0 0
    %1461 = vmatprep.subr.bf16.mxu0 0
    %1462 = vmatpush1.bf16.msra.mxu0 0
    %1463 = vmatprep.subr.bf16.mxu0 0
    %1464 = vmatpush1.bf16.msra.mxu0 0
    %1465 = vmatprep.subr.bf16.mxu0 0
    %1466 = vmatpush1.bf16.msra.mxu0 0
    %1467 = vmatprep.subr.bf16.mxu0 0
    %1468 = vmatpush1.bf16.msra.mxu0 0
    %1469 = vmatprep.subr.bf16.mxu0 0
    %1470 = vmatpush1.bf16.msra.mxu0 0
    %1471 = vmatprep.subr.bf16.mxu0 0
    %1472 = vmatpush1.bf16.msra.mxu0 0
    %1473 = vmatprep.subr.bf16.mxu0 0
    %1474 = vmatpush1.bf16.msra.mxu0 0
    %1475 = vmatprep.subr.bf16.mxu0 0
    %1476 = vmatpush1.bf16.msra.mxu0 0
    %1477 = vmatprep.subr.bf16.mxu0 0
    %1478 = vmatpush1.bf16.msra.mxu0 0
    %1479 = vmatprep.subr.bf16.mxu0 0
    %1480 = vmatpush1.bf16.msra.mxu0 0
    %1481 = vmatprep.subr.bf16.mxu0 0
    %1482 = vmatpush1.bf16.msra.mxu0 0
    %1483 = vmatprep.subr.bf16.mxu0 0
    %1484 = vmatpush1.bf16.msra.mxu0 0
    %1485 = vmatprep.mubr.bf16.mxu0 0
    %1486 = vmatmul.mubr.bf16.gmra.mrb[0].mxu0 %v1439
    %v1487 = vpop.f32.mrb[0].mxu0
    %v1488 = vadd.f32 0.0, %v1487
    %v1489 = vpop.f32.mrb[0].mxu0
    %v1490 = vpop.f32.mrb[0].mxu0
    %v1491 = vadd.f32 0.0, %v1490
    %v1492 = vpop.f32.mrb[0].mxu0
    %1493 = vmatprep.mubr.bf16.mxu0 0
    %1494 = vmatmul.mubr.bf16.gmra.mrb[0].mxu0 %v1442
    %v1495 = vpop.f32.mrb[0].mxu0
    %v1496 = vadd.f32 0.0, %v1495
    %v1497 = vpop.f32.mrb[0].mxu0
    %v1498 = vpop.f32.mrb[0].mxu0
    %v1499 = vadd.f32 0.0, %v1498
    %v1500 = vpop.f32.mrb[0].mxu0
    %1501 = vmatprep.mubr.bf16.mxu0 0
    %1502 = vmatmul.mubr.bf16.gmra.mrb[0].mxu0 %v1445
    %v1503 = vpop.f32.mrb[0].mxu0
    %v1504 = vadd.f32 0.0, %v1503
    %v1505 = vpop.f32.mrb[0].mxu0
    %v1506 = vpop.f32.mrb[0].mxu0
    %v1507 = vadd.f32 0.0, %v1506
    %v1508 = vpop.f32.mrb[0].mxu0
    %1509 = vmatprep.mubr.bf16.mxu0 0
    %1510 = vmatmul.mubr.bf16.gmra.mrb[0].mxu0 %v1448
    %v1511 = vpop.f32.mrb[0].mxu0
    %v1512 = vadd.f32 0.0, %v1511
    %v1513 = vpop.f32.mrb[0].mxu0
    %v1514 = vpop.f32.mrb[0].mxu0
    %v1515 = vadd.f32 0.0, %v1514
    %v1516 = vpop.f32.mrb[0].mxu0
    %1517 = vdwg.mxu0
    %v1518 = vadd.f32 %v1428, %v1488
    %v1519 = vadd.f32 %v1429, %v1491
    %v1520 = vadd.f32 %v1430, %v1496
    %v1521 = vadd.f32 %v1431, %v1499
    %v1522 = vadd.f32 %v1432, %v1504
    %v1523 = vadd.f32 %v1433, %v1507
    %v1524 = vadd.f32 %v1434, %v1512
    %v1525 = vadd.f32 %v1435, %v1515
    %s1526 = scalar_lea.vmem [#allocation5], 24
    %v1527 = vld [vmem:[%s1526] sm:$0x7]
    %v1529 = vsel %vm1004, %v989, 0
    %v1532 = vsel %vm1004, %v990, 0
    %v1535 = vsel %vm1004, %v991, 0
    %v1538 = vsel %vm1004, %v992, 0
    %v1541 = vsel %vm1017, %v1527, 0
    %1543 = vmatprep.subr.bf16.mxu0 0
    %1544 = vmatpush1.bf16.msra.mxu0 %v1541
    %1545 = vmatprep.subr.bf16.mxu0 0
    %1546 = vmatpush1.bf16.msra.mxu0 0
    %1547 = vmatprep.subr.bf16.mxu0 0
    %1548 = vmatpush1.bf16.msra.mxu0 0
    %1549 = vmatprep.subr.bf16.mxu0 0
    %1550 = vmatpush1.bf16.msra.mxu0 0
    %1551 = vmatprep.subr.bf16.mxu0 0
    %1552 = vmatpush1.bf16.msra.mxu0 0
    %1553 = vmatprep.subr.bf16.mxu0 0
    %1554 = vmatpush1.bf16.msra.mxu0 0
    %1555 = vmatprep.subr.bf16.mxu0 0
    %1556 = vmatpush1.bf16.msra.mxu0 0
    %1557 = vmatprep.subr.bf16.mxu0 0
    %1558 = vmatpush1.bf16.msra.mxu0 0
    %1559 = vmatprep.subr.bf16.mxu0 0
    %1560 = vmatpush1.bf16.msra.mxu0 0
    %1561 = vmatprep.subr.bf16.mxu0 0
    %1562 = vmatpush1.bf16.msra.mxu0 0
    %1563 = vmatprep.subr.bf16.mxu0 0
    %1564 = vmatpush1.bf16.msra.mxu0 0
    %1565 = vmatprep.subr.bf16.mxu0 0
    %1566 = vmatpush1.bf16.msra.mxu0 0
    %1567 = vmatprep.subr.bf16.mxu0 0
    %1568 = vmatpush1.bf16.msra.mxu0 0
    %1569 = vmatprep.subr.bf16.mxu0 0
    %1570 = vmatpush1.bf16.msra.mxu0 0
    %1571 = vmatprep.subr.bf16.mxu0 0
    %1572 = vmatpush1.bf16.msra.mxu0 0
    %1573 = vmatprep.subr.bf16.mxu0 0
    %1574 = vmatpush1.bf16.msra.mxu0 0
    %1575 = vmatprep.mubr.bf16.mxu0 0
    %1576 = vmatmul.mubr.bf16.gmra.mrb[0].mxu0 %v1529
    %v1577 = vpop.f32.mrb[0].mxu0
    %v1578 = vadd.f32 0.0, %v1577
    %v1579 = vpop.f32.mrb[0].mxu0
    %v1580 = vpop.f32.mrb[0].mxu0
    %v1581 = vadd.f32 0.0, %v1580
    %v1582 = vpop.f32.mrb[0].mxu0
    %1583 = vmatprep.mubr.bf16.mxu0 0
    %1584 = vmatmul.mubr.bf16.gmra.mrb[0].mxu0 %v1532
    %v1585 = vpop.f32.mrb[0].mxu0
    %v1586 = vadd.f32 0.0, %v1585
    %v1587 = vpop.f32.mrb[0].mxu0
    %v1588 = vpop.f32.mrb[0].mxu0
    %v1589 = vadd.f32 0.0, %v1588
    %v1590 = vpop.f32.mrb[0].mxu0
    %1591 = vmatprep.mubr.bf16.mxu0 0
    %1592 = vmatmul.mubr.bf16.gmra.mrb[0].mxu0 %v1535
    %v1593 = vpop.f32.mrb[0].mxu0
    %v1594 = vadd.f32 0.0, %v1593
    %v1595 = vpop.f32.mrb[0].mxu0
    %v1596 = vpop.f32.mrb[0].mxu0
    %v1597 = vadd.f32 0.0, %v1596
    %v1598 = vpop.f32.mrb[0].mxu0
    %1599 = vmatprep.mubr.bf16.mxu0 0
    %1600 = vmatmul.mubr.bf16.gmra.mrb[0].mxu0 %v1538
    %v1601 = vpop.f32.mrb[0].mxu0
    %v1602 = vadd.f32 0.0, %v1601
    %v1603 = vpop.f32.mrb[0].mxu0
    %v1604 = vpop.f32.mrb[0].mxu0
    %v1605 = vadd.f32 0.0, %v1604
    %v1606 = vpop.f32.mrb[0].mxu0
    %1607 = vdwg.mxu0
    %v1608 = vadd.f32 %v1518, %v1578
    %v1609 = vadd.f32 %v1519, %v1581
    %v1610 = vadd.f32 %v1520, %v1586
    %v1611 = vadd.f32 %v1521, %v1589
    %v1612 = vadd.f32 %v1522, %v1594
    %v1613 = vadd.f32 %v1523, %v1597
    %v1614 = vadd.f32 %v1524, %v1602
    %v1615 = vadd.f32 %v1525, %v1605
    %s1616 = scalar_lea.vmem [#allocation5], 28
    %v1617 = vld [vmem:[%s1616] sm:$0x7]
    %v1619 = vsel %vm1004, %v993, 0
    %v1622 = vsel %vm1004, %v994, 0
    %v1625 = vsel %vm1004, %v995, 0
    %v1628 = vsel %vm1004, %v996, 0
    %v1631 = vsel %vm1017, %v1617, 0
    %1633 = vmatprep.subr.bf16.mxu0 0
    %1634 = vmatpush1.bf16.msra.mxu0 %v1631
    %1635 = vmatprep.subr.bf16.mxu0 0
    %1636 = vmatpush1.bf16.msra.mxu0 0
    %1637 = vmatprep.subr.bf16.mxu0 0
    %1638 = vmatpush1.bf16.msra.mxu0 0
    %1639 = vmatprep.subr.bf16.mxu0 0
    %1640 = vmatpush1.bf16.msra.mxu0 0
    %1641 = vmatprep.subr.bf16.mxu0 0
    %1642 = vmatpush1.bf16.msra.mxu0 0
    %1643 = vmatprep.subr.bf16.mxu0 0
    %1644 = vmatpush1.bf16.msra.mxu0 0
    %1645 = vmatprep.subr.bf16.mxu0 0
    %1646 = vmatpush1.bf16.msra.mxu0 0
    %1647 = vmatprep.subr.bf16.mxu0 0
    %1648 = vmatpush1.bf16.msra.mxu0 0
    %1649 = vmatprep.subr.bf16.mxu0 0
    %1650 = vmatpush1.bf16.msra.mxu0 0
    %1651 = vmatprep.subr.bf16.mxu0 0
    %1652 = vmatpush1.bf16.msra.mxu0 0
    %1653 = vmatprep.subr.bf16.mxu0 0
    %1654 = vmatpush1.bf16.msra.mxu0 0
    %1655 = vmatprep.subr.bf16.mxu0 0
    %1656 = vmatpush1.bf16.msra.mxu0 0
    %1657 = vmatprep.subr.bf16.mxu0 0
    %1658 = vmatpush1.bf16.msra.mxu0 0
    %1659 = vmatprep.subr.bf16.mxu0 0
    %1660 = vmatpush1.bf16.msra.mxu0 0
    %1661 = vmatprep.subr.bf16.mxu0 0
    %1662 = vmatpush1.bf16.msra.mxu0 0
    %1663 = vmatprep.subr.bf16.mxu0 0
    %1664 = vmatpush1.bf16.msra.mxu0 0
    %1665 = vmatprep.mubr.bf16.mxu0 0
    %1666 = vmatmul.mubr.bf16.gmra.mrb[0].mxu0 %v1619
    %v1667 = vpop.f32.mrb[0].mxu0
    %v1668 = vadd.f32 0.0, %v1667
    %v1669 = vpop.f32.mrb[0].mxu0
    %v1670 = vpop.f32.mrb[0].mxu0
    %v1671 = vadd.f32 0.0, %v1670
    %v1672 = vpop.f32.mrb[0].mxu0
    %1673 = vmatprep.mubr.bf16.mxu0 0
    %1674 = vmatmul.mubr.bf16.gmra.mrb[0].mxu0 %v1622
    %v1675 = vpop.f32.mrb[0].mxu0
    %v1676 = vadd.f32 0.0, %v1675
    %v1677 = vpop.f32.mrb[0].mxu0
    %v1678 = vpop.f32.mrb[0].mxu0
    %v1679 = vadd.f32 0.0, %v1678
    %v1680 = vpop.f32.mrb[0].mxu0
    %1681 = vmatprep.mubr.bf16.mxu0 0
    %1682 = vmatmul.mubr.bf16.gmra.mrb[0].mxu0 %v1625
    %v1683 = vpop.f32.mrb[0].mxu0
    %v1684 = vadd.f32 0.0, %v1683
    %v1685 = vpop.f32.mrb[0].mxu0
    %v1686 = vpop.f32.mrb[0].mxu0
    %v1687 = vadd.f32 0.0, %v1686
    %v1688 = vpop.f32.mrb[0].mxu0
    %1689 = vmatprep.mubr.bf16.mxu0 0
    %1690 = vmatmul.mubr.bf16.gmra.mrb[0].mxu0 %v1628
    %v1691 = vpop.f32.mrb[0].mxu0
    %v1692 = vadd.f32 0.0, %v1691
    %v1693 = vpop.f32.mrb[0].mxu0
    %v1694 = vpop.f32.mrb[0].mxu0
    %v1695 = vadd.f32 0.0, %v1694
    %v1696 = vpop.f32.mrb[0].mxu0
    %1697 = vdwg.mxu0
    %v1698 = vadd.f32 %v1608, %v1668
    %v1699 = vadd.f32 %v1609, %v1671
    %v1700 = vadd.f32 %v1610, %v1676
    %v1701 = vadd.f32 %v1611, %v1679
    %v1702 = vadd.f32 %v1612, %v1684
    %v1703 = vadd.f32 %v1613, %v1687
    %v1704 = vadd.f32 %v1614, %v1692
    %v1705 = vadd.f32 %v1615, %v1695
    %s1706 = scalar_lea.vmem [#allocation5], 32
    %v1707 = vld [vmem:[%s1706] sm:$0x7]
    %v1709 = vsel %vm1004, %v997, 0
    %v1712 = vsel %vm1004, %v998, 0
    %v1715 = vsel %vm1004, %v999, 0
    %v1718 = vsel %vm1004, %v1000, 0
    %v1721 = vsel %vm1017, %v1707, 0
    %1723 = vmatprep.subr.bf16.mxu0 0
    %1724 = vmatpush1.bf16.msra.mxu0 %v1721
    %1725 = vmatprep.subr.bf16.mxu0 0
    %1726 = vmatpush1.bf16.msra.mxu0 0
    %1727 = vmatprep.subr.bf16.mxu0 0
    %1728 = vmatpush1.bf16.msra.mxu0 0
    %1729 = vmatprep.subr.bf16.mxu0 0
    %1730 = vmatpush1.bf16.msra.mxu0 0
    %1731 = vmatprep.subr.bf16.mxu0 0
    %1732 = vmatpush1.bf16.msra.mxu0 0
    %1733 = vmatprep.subr.bf16.mxu0 0
    %1734 = vmatpush1.bf16.msra.mxu0 0
    %1735 = vmatprep.subr.bf16.mxu0 0
    %1736 = vmatpush1.bf16.msra.mxu0 0
    %1737 = vmatprep.subr.bf16.mxu0 0
    %1738 = vmatpush1.bf16.msra.mxu0 0
    %1739 = vmatprep.subr.bf16.mxu0 0
    %1740 = vmatpush1.bf16.msra.mxu0 0
    %1741 = vmatprep.subr.bf16.mxu0 0
    %1742 = vmatpush1.bf16.msra.mxu0 0
    %1743 = vmatprep.subr.bf16.mxu0 0
    %1744 = vmatpush1.bf16.msra.mxu0 0
    %1745 = vmatprep.subr.bf16.mxu0 0
    %1746 = vmatpush1.bf16.msra.mxu0 0
    %1747 = vmatprep.subr.bf16.mxu0 0
    %1748 = vmatpush1.bf16.msra.mxu0 0
    %1749 = vmatprep.subr.bf16.mxu0 0
    %1750 = vmatpush1.bf16.msra.mxu0 0
    %1751 = vmatprep.subr.bf16.mxu0 0
    %1752 = vmatpush1.bf16.msra.mxu0 0
    %1753 = vmatprep.subr.bf16.mxu0 0
    %1754 = vmatpush1.bf16.msra.mxu0 0
    %1755 = vmatprep.mubr.bf16.mxu0 0
    %1756 = vmatmul.mubr.bf16.gmra.mrb[0].mxu0 %v1709
    %v1757 = vpop.f32.mrb[0].mxu0
    %v1758 = vadd.f32 0.0, %v1757
    %v1759 = vpop.f32.mrb[0].mxu0
    %v1760 = vpop.f32.mrb[0].mxu0
    %v1761 = vadd.f32 0.0, %v1760
    %v1762 = vpop.f32.mrb[0].mxu0
    %1763 = vmatprep.mubr.bf16.mxu0 0
    %1764 = vmatmul.mubr.bf16.gmra.mrb[0].mxu0 %v1712
    %v1765 = vpop.f32.mrb[0].mxu0
    %v1766 = vadd.f32 0.0, %v1765
    %v1767 = vpop.f32.mrb[0].mxu0
    %v1768 = vpop.f32.mrb[0].mxu0
    %v1769 = vadd.f32 0.0, %v1768
    %v1770 = vpop.f32.mrb[0].mxu0
    %1771 = vmatprep.mubr.bf16.mxu0 0
    %1772 = vmatmul.mubr.bf16.gmra.mrb[0].mxu0 %v1715
    %v1773 = vpop.f32.mrb[0].mxu0
    %v1774 = vadd.f32 0.0, %v1773
    %v1775 = vpop.f32.mrb[0].mxu0
    %v1776 = vpop.f32.mrb[0].mxu0
    %v1777 = vadd.f32 0.0, %v1776
    %v1778 = vpop.f32.mrb[0].mxu0
    %1779 = vmatprep.mubr.bf16.mxu0 0
    %1780 = vmatmul.mubr.bf16.gmra.mrb[0].mxu0 %v1718
    %v1781 = vpop.f32.mrb[0].mxu0
    %v1782 = vadd.f32 0.0, %v1781
    %v1783 = vpop.f32.mrb[0].mxu0
    %v1784 = vpop.f32.mrb[0].mxu0
    %v1785 = vadd.f32 0.0, %v1784
    %v1786 = vpop.f32.mrb[0].mxu0
    %1787 = vdwg.mxu0
    %v1788 = vadd.f32 %v1698, %v1758
    %v1789 = vadd.f32 %v1699, %v1761
    %v1790 = vadd.f32 %v1700, %v1766
    %v1791 = vadd.f32 %v1701, %v1769
    %v1792 = vadd.f32 %v1702, %v1774
    %v1793 = vadd.f32 %v1703, %v1777
    %v1794 = vadd.f32 %v1704, %v1782
    %v1795 = vadd.f32 %v1705, %v1785
    %v1796 = vld [vmem:[%s3] sm:$0x1]
    %v1798 = vlaneseq
    %v1799 = vshrl.u32 %v1798, 7
    %v1800 = vsub.s32 0, %v1799
    %v1801 = vrot.slane %v1796, %v1800
    %v1803 = vadd.f32 %v1788, %v1801
    %v1804 = vadd.f32 %v1789, %v1801
    %v1805 = vadd.f32 %v1790, %v1801
    %v1806 = vadd.f32 %v1791, %v1801
    %v1807 = vadd.f32 %v1792, %v1801
    %v1808 = vadd.f32 %v1793, %v1801
    %v1809 = vadd.f32 %v1794, %v1801
    %v1810 = vadd.f32 %v1795, %v1801
    %v1811 = vmax.f32 %v1803, 0.0
    %v1812 = vmax.f32 %v1804, 0.0
    %v1813 = vmax.f32 %v1805, 0.0
    %v1814 = vmax.f32 %v1806, 0.0
    %v1815 = vmax.f32 %v1807, 0.0
    %v1816 = vmax.f32 %v1808, 0.0
    %v1817 = vmax.f32 %v1809, 0.0
    %v1818 = vmax.f32 %v1810, 0.0
    %v1819 = vpack.c.bf16 %v1812, %v1811
    %v1820 = vpack.c.bf16 %v1814, %v1813
    %v1821 = vpack.c.bf16 %v1816, %v1815
    %v1822 = vpack.c.bf16 %v1818, %v1817
    %v1823 = vld [vmem:[%s4] sm:$0xf]
    %v1824 = vld [vmem:[%s4 + $0x4] sm:$0xf]
    %v1825 = vld [vmem:[%s4 + $0x8] sm:$0xf]
    %v1826 = vld [vmem:[%s4 + $0xc] sm:$0xf]
    %v1827 = vld [vmem:[%s4 + $0x10] sm:$0xf]
    %v1828 = vld [vmem:[%s4 + $0x14] sm:$0xf]
    %v1829 = vld [vmem:[%s4 + $0x18] sm:$0xf]
    %v1830 = vld [vmem:[%s4 + $0x1c] sm:$0xf]
    %v1831 = vld [vmem:[%s4 + $0x20] sm:$0xf]
    %v1832 = vld [vmem:[%s4 + $0x24] sm:$0xf]
    %v1833 = vld [vmem:[%s4 + $0x28] sm:$0xf]
    %v1834 = vld [vmem:[%s4 + $0x2c] sm:$0xf]
    %v1835 = vld [vmem:[%s4 + $0x30] sm:$0xf]
    %v1836 = vld [vmem:[%s4 + $0x34] sm:$0xf]
    %v1837 = vld [vmem:[%s4 + $0x38] sm:$0xf]
    %v1838 = vld [vmem:[%s4 + $0x3c] sm:$0xf]
    %v1839 = vld [vmem:[%s4 + $0x40] sm:$0xf]
    %v1840 = vld [vmem:[%s4 + $0x44] sm:$0xf]
    %v1859 = vunpack.c.l.b16 %v1823
    %v1860 = vunpack.c.l.b16 %v1824
    %v1861 = vunpack.c.l.b16 %v1825
    %v1862 = vunpack.c.l.b16 %v1826
    %v1863 = vunpack.c.l.b16 %v1827
    %v1864 = vunpack.c.l.b16 %v1828
    %v1865 = vunpack.c.l.b16 %v1829
    %v1866 = vunpack.c.l.b16 %v1830
    %v1867 = vunpack.c.l.b16 %v1831
    %v1868 = vunpack.c.l.b16 %v1832
    %v1869 = vunpack.c.l.b16 %v1833
    %v1870 = vunpack.c.l.b16 %v1834
    %v1871 = vunpack.c.l.b16 %v1835
    %v1872 = vunpack.c.l.b16 %v1836
    %v1873 = vunpack.c.l.b16 %v1837
    %v1874 = vunpack.c.l.b16 %v1838
    %v1875 = vunpack.c.l.b16 %v1839
    %v1876 = vunpack.c.l.b16 %v1840
    %v1877 = vpack.c.b16 %v1860, %v1859
    %v1878 = vpack.c.b16 %v1862, %v1861
    %v1879 = vpack.c.b16 %v1864, %v1863
    %v1880 = vpack.c.b16 %v1866, %v1865
    %v1881 = vpack.c.b16 %v1868, %v1867
    %v1882 = vpack.c.b16 %v1870, %v1869
    %v1883 = vpack.c.b16 %v1872, %v1871
    %v1884 = vpack.c.b16 %v1874, %v1873
    %v1885 = vpack.c.b16 %v1876, %v1875
    %vm1886 = vcmask 523264
    %v1888 = vsel %vm1886, %v1877, 0
    %v1891 = vsel %vm1886, %v1878, 0
    %v1894 = vsel %vm1886, %v1879, 0
    %v1897 = vsel %vm1886, %v1880, 0
    %v1900 = vsel %vm1886, %v1881, 0
    %v1903 = vsel %vm1886, %v1882, 0
    %v1906 = vsel %vm1886, %v1883, 0
    %v1909 = vsel %vm1886, %v1884, 0
    %v1912 = vsel %vm1886, %v1885, 0
    %1914 = vmatprep.subr.bf16.mxu0 0
    %1915 = vmatpush1.bf16.msra.mxu0 %v1819
    %1916 = vmatprep.subr.bf16.mxu0 0
    %1917 = vmatpush1.bf16.msra.mxu0 %v1820
    %1918 = vmatprep.subr.bf16.mxu0 0
    %1919 = vmatpush1.bf16.msra.mxu0 %v1821
    %1920 = vmatprep.subr.bf16.mxu0 0
    %1921 = vmatpush1.bf16.msra.mxu0 %v1822
    %1922 = vmatprep.subr.bf16.mxu0 0
    %1923 = vmatpush1.bf16.msra.mxu0 0
    %1924 = vmatprep.subr.bf16.mxu0 0
    %1925 = vmatpush1.bf16.msra.mxu0 0
    %1926 = vmatprep.subr.bf16.mxu0 0
    %1927 = vmatpush1.bf16.msra.mxu0 0
    %1928 = vmatprep.subr.bf16.mxu0 0
    %1929 = vmatpush1.bf16.msra.mxu0 0
    %1930 = vmatprep.subr.bf16.mxu0 0
    %1931 = vmatpush1.bf16.msra.mxu0 0
    %1932 = vmatprep.subr.bf16.mxu0 0
    %1933 = vmatpush1.bf16.msra.mxu0 0
    %1934 = vmatprep.subr.bf16.mxu0 0
    %1935 = vmatpush1.bf16.msra.mxu0 0
    %1936 = vmatprep.subr.bf16.mxu0 0
    %1937 = vmatpush1.bf16.msra.mxu0 0
    %1938 = vmatprep.subr.bf16.mxu0 0
    %1939 = vmatpush1.bf16.msra.mxu0 0
    %1940 = vmatprep.subr.bf16.mxu0 0
    %1941 = vmatpush1.bf16.msra.mxu0 0
    %1942 = vmatprep.subr.bf16.mxu0 0
    %1943 = vmatpush1.bf16.msra.mxu0 0
    %1944 = vmatprep.subr.bf16.mxu0 0
    %1945 = vmatpush1.bf16.msra.mxu0 0
    %1946 = vmatprep.mubr.bf16.mxu0 0
    %1947 = vmatmul.mubr.bf16.gmra.mrb[0].mxu0 %v1888
    %v1948 = vpop.f32.mrb[0].mxu0
    %v1949 = vadd.f32 0.0, %v1948
    %v1950 = vpop.f32.mrb[0].mxu0
    %v1951 = vpop.f32.mrb[0].mxu0
    %v1952 = vadd.f32 0.0, %v1951
    %v1953 = vpop.f32.mrb[0].mxu0
    %1954 = vmatprep.mubr.bf16.mxu0 0
    %1955 = vmatmul.mubr.bf16.gmra.mrb[0].mxu0 %v1891
    %v1956 = vpop.f32.mrb[0].mxu0
    %v1957 = vadd.f32 0.0, %v1956
    %v1958 = vpop.f32.mrb[0].mxu0
    %v1959 = vpop.f32.mrb[0].mxu0
    %v1960 = vadd.f32 0.0, %v1959
    %v1961 = vpop.f32.mrb[0].mxu0
    %1962 = vmatprep.mubr.bf16.mxu0 0
    %1963 = vmatmul.mubr.bf16.gmra.mrb[0].mxu0 %v1894
    %v1964 = vpop.f32.mrb[0].mxu0
    %v1965 = vadd.f32 0.0, %v1964
    %v1966 = vpop.f32.mrb[0].mxu0
    %v1967 = vpop.f32.mrb[0].mxu0
    %v1968 = vadd.f32 0.0, %v1967
    %v1969 = vpop.f32.mrb[0].mxu0
    %1970 = vmatprep.mubr.bf16.mxu0 0
    %1971 = vmatmul.mubr.bf16.gmra.mrb[0].mxu0 %v1897
    %v1972 = vpop.f32.mrb[0].mxu0
    %v1973 = vadd.f32 0.0, %v1972
    %v1974 = vpop.f32.mrb[0].mxu0
    %v1975 = vpop.f32.mrb[0].mxu0
    %v1976 = vadd.f32 0.0, %v1975
    %v1977 = vpop.f32.mrb[0].mxu0
    %1978 = vmatprep.mubr.bf16.mxu0 0
    %1979 = vmatmul.mubr.bf16.gmra.mrb[0].mxu0 %v1900
    %v1980 = vpop.f32.mrb[0].mxu0
    %v1981 = vadd.f32 0.0, %v1980
    %v1982 = vpop.f32.mrb[0].mxu0
    %v1983 = vpop.f32.mrb[0].mxu0
    %v1984 = vadd.f32 0.0, %v1983
    %v1985 = vpop.f32.mrb[0].mxu0
    %1986 = vmatprep.mubr.bf16.mxu0 0
    %1987 = vmatmul.mubr.bf16.gmra.mrb[0].mxu0 %v1903
    %v1988 = vpop.f32.mrb[0].mxu0
    %v1989 = vadd.f32 0.0, %v1988
    %v1990 = vpop.f32.mrb[0].mxu0
    %v1991 = vpop.f32.mrb[0].mxu0
    %v1992 = vadd.f32 0.0, %v1991
    %v1993 = vpop.f32.mrb[0].mxu0
    %1994 = vmatprep.mubr.bf16.mxu0 0
    %1995 = vmatmul.mubr.bf16.gmra.mrb[0].mxu0 %v1906
    %v1996 = vpop.f32.mrb[0].mxu0
    %v1997 = vadd.f32 0.0, %v1996
    %v1998 = vpop.f32.mrb[0].mxu0
    %v1999 = vpop.f32.mrb[0].mxu0
    %v2000 = vadd.f32 0.0, %v1999
    %v2001 = vpop.f32.mrb[0].mxu0
    %2002 = vmatprep.mubr.bf16.mxu0 0
    %2003 = vmatmul.mubr.bf16.gmra.mrb[0].mxu0 %v1909
    %v2004 = vpop.f32.mrb[0].mxu0
    %v2005 = vadd.f32 0.0, %v2004
    %v2006 = vpop.f32.mrb[0].mxu0
    %v2007 = vpop.f32.mrb[0].mxu0
    %v2008 = vadd.f32 0.0, %v2007
    %v2009 = vpop.f32.mrb[0].mxu0
    %2010 = vmatprep.mubr.bf16.mxu0 0
    %2011 = vmatmul.mubr.bf16.gmra.mrb[0].mxu0 %v1912
    %v2012 = vpop.f32.mrb[0].mxu0
    %v2013 = vadd.f32 0.0, %v2012
    %v2014 = vpop.f32.mrb[0].mxu0
    %v2015 = vpop.f32.mrb[0].mxu0
    %v2016 = vadd.f32 0.0, %v2015
    %v2017 = vpop.f32.mrb[0].mxu0
    %2018 = vdwg.mxu0
    %v2019 = vpack.c.bf16 %v1952, %v1949
    %v2020 = vpack.c.bf16 %v1960, %v1957
    %v2021 = vpack.c.bf16 %v1968, %v1965
    %v2022 = vpack.c.bf16 %v1976, %v1973
    %v2023 = vpack.c.bf16 %v1984, %v1981
    %v2024 = vpack.c.bf16 %v1992, %v1989
    %v2025 = vpack.c.bf16 %v2000, %v1997
    %v2026 = vpack.c.bf16 %v2008, %v2005
    %v2027 = vpack.c.bf16 %v2016, %v2013
    %v2028 = vld [vmem:[%s5] sm:$0xf]
    %v2029 = vld [vmem:[%s5 + $0x4] sm:$0xf]
    %v2030 = vld [vmem:[%s5 + $0x8] sm:$0xf]
    %v2031 = vld [vmem:[%s5 + $0xc] sm:$0xf]
    %s2032 = scalar_lea.vmem %s5, 16
    %v2033 = vld [vmem:[%s2032] sm:$0xf]
    %v2034 = vld [vmem:[%s2032 + $0x4] sm:$0xf]
    %v2035 = vld [vmem:[%s2032 + $0x8] sm:$0xf]
    %v2036 = vld [vmem:[%s2032 + $0xc] sm:$0xf]
    %v2041 = vunpack.c.l.b16 %v2033
    %v2042 = vunpack.c.l.b16 %v2034
    %v2043 = vunpack.c.l.b16 %v2035
    %v2044 = vunpack.c.l.b16 %v2036
    %v2045 = vpack.c.b16 %v2042, %v2041
    %v2046 = vpack.c.b16 %v2044, %v2043
    %vm2049 = vcmask 261120
    %v2051 = vsel %vm2049, %v2020, 0
    %2053 = vmatprep.subr.bf16.mxu0 0
    %2054 = vmatpush1.bf16.msra.mxu0 %v2045
    %2055 = vmatprep.subr.bf16.mxu0 0
    %2056 = vmatpush1.bf16.msra.mxu0 %v2046
    %2057 = vmatprep.subr.bf16.mxu0 0
    %2058 = vmatpush1.bf16.msra.mxu0 0
    %2059 = vmatprep.subr.bf16.mxu0 0
    %2060 = vmatpush1.bf16.msra.mxu0 0
    %2061 = vmatprep.subr.bf16.mxu0 0
    %2062 = vmatpush1.bf16.msra.mxu0 0
    %2063 = vmatprep.subr.bf16.mxu0 0
    %2064 = vmatpush1.bf16.msra.mxu0 0
    %2065 = vmatprep.subr.bf16.mxu0 0
    %2066 = vmatpush1.bf16.msra.mxu0 0
    %2067 = vmatprep.subr.bf16.mxu0 0
    %2068 = vmatpush1.bf16.msra.mxu0 0
    %2069 = vmatprep.subr.bf16.mxu0 0
    %2070 = vmatpush1.bf16.msra.mxu0 0
    %2071 = vmatprep.subr.bf16.mxu0 0
    %2072 = vmatpush1.bf16.msra.mxu0 0
    %2073 = vmatprep.subr.bf16.mxu0 0
    %2074 = vmatpush1.bf16.msra.mxu0 0
    %2075 = vmatprep.subr.bf16.mxu0 0
    %2076 = vmatpush1.bf16.msra.mxu0 0
    %2077 = vmatprep.subr.bf16.mxu0 0
    %2078 = vmatpush1.bf16.msra.mxu0 0
    %2079 = vmatprep.subr.bf16.mxu0 0
    %2080 = vmatpush1.bf16.msra.mxu0 0
    %2081 = vmatprep.subr.bf16.mxu0 0
    %2082 = vmatpush1.bf16.msra.mxu0 0
    %2083 = vmatprep.subr.bf16.mxu0 0
    %2084 = vmatpush1.bf16.msra.mxu0 0
    %2085 = vmatprep.mubr.bf16.mxu0 0
    %2086 = vmatmul.mubr.bf16.gmra.mrb[0].mxu0 %v2051
    %v2087 = vpop.f32.mrb[0].mxu0
    %v2088 = vadd.f32 0.0, %v2087
    %v2089 = vpop.f32.mrb[0].mxu0
    %v2090 = vpop.f32.mrb[0].mxu0
    %v2091 = vadd.f32 0.0, %v2090
    %v2092 = vpop.f32.mrb[0].mxu0
    %2093 = vdwg.mxu0
    %v2098 = vunpack.c.l.b16 %v2028
    %v2099 = vunpack.c.l.b16 %v2029
    %v2100 = vunpack.c.l.b16 %v2030
    %v2101 = vunpack.c.l.b16 %v2031
    %v2102 = vpack.c.b16 %v2099, %v2098
    %v2103 = vpack.c.b16 %v2101, %v2100
    %v2107 = vsel %vm2049, %v2019, 0
    %2109 = vmatprep.subr.bf16.mxu0 0
    %2110 = vmatpush1.bf16.msra.mxu0 %v2102
    %2111 = vmatprep.subr.bf16.mxu0 0
    %2112 = vmatpush1.bf16.msra.mxu0 %v2103
    %2113 = vmatprep.subr.bf16.mxu0 0
    %2114 = vmatpush1.bf16.msra.mxu0 0
    %2115 = vmatprep.subr.bf16.mxu0 0
    %2116 = vmatpush1.bf16.msra.mxu0 0
    %2117 = vmatprep.subr.bf16.mxu0 0
    %2118 = vmatpush1.bf16.msra.mxu0 0
    %2119 = vmatprep.subr.bf16.mxu0 0
    %2120 = vmatpush1.bf16.msra.mxu0 0
    %2121 = vmatprep.subr.bf16.mxu0 0
    %2122 = vmatpush1.bf16.msra.mxu0 0
    %2123 = vmatprep.subr.bf16.mxu0 0
    %2124 = vmatpush1.bf16.msra.mxu0 0
    %2125 = vmatprep.subr.bf16.mxu0 0
    %2126 = vmatpush1.bf16.msra.mxu0 0
    %2127 = vmatprep.subr.bf16.mxu0 0
    %2128 = vmatpush1.bf16.msra.mxu0 0
    %2129 = vmatprep.subr.bf16.mxu0 0
    %2130 = vmatpush1.bf16.msra.mxu0 0
    %2131 = vmatprep.subr.bf16.mxu0 0
    %2132 = vmatpush1.bf16.msra.mxu0 0
    %2133 = vmatprep.subr.bf16.mxu0 0
    %2134 = vmatpush1.bf16.msra.mxu0 0
    %2135 = vmatprep.subr.bf16.mxu0 0
    %2136 = vmatpush1.bf16.msra.mxu0 0
    %2137 = vmatprep.subr.bf16.mxu0 0
    %2138 = vmatpush1.bf16.msra.mxu0 0
    %2139 = vmatprep.subr.bf16.mxu0 0
    %2140 = vmatpush1.bf16.msra.mxu0 0
    %2141 = vmatprep.mubr.bf16.mxu0 0
    %2142 = vmatmul.mubr.bf16.gmra.mrb[0].mxu0 %v2107
    %v2143 = vpop.f32.mrb[0].mxu0
    %v2144 = vadd.f32 %v2088, %v2143
    %v2145 = vpop.f32.mrb[0].mxu0
    %v2146 = vpop.f32.mrb[0].mxu0
    %v2147 = vadd.f32 %v2091, %v2146
    %v2148 = vpop.f32.mrb[0].mxu0
    %2149 = vdwg.mxu0
    %s2150 = scalar_lea.vmem %s5, 32
    %v2151 = vld [vmem:[%s2150] sm:$0xf]
    %v2152 = vld [vmem:[%s2150 + $0x4] sm:$0xf]
    %v2153 = vld [vmem:[%s2150 + $0x8] sm:$0xf]
    %v2154 = vld [vmem:[%s2150 + $0xc] sm:$0xf]
    %v2159 = vunpack.c.l.b16 %v2151
    %v2160 = vunpack.c.l.b16 %v2152
    %v2161 = vunpack.c.l.b16 %v2153
    %v2162 = vunpack.c.l.b16 %v2154
    %v2163 = vpack.c.b16 %v2160, %v2159
    %v2164 = vpack.c.b16 %v2162, %v2161
    %v2168 = vsel %vm2049, %v2021, 0
    %2170 = vmatprep.subr.bf16.mxu0 0
    %2171 = vmatpush1.bf16.msra.mxu0 %v2163
    %2172 = vmatprep.subr.bf16.mxu0 0
    %2173 = vmatpush1.bf16.msra.mxu0 %v2164
    %2174 = vmatprep.subr.bf16.mxu0 0
    %2175 = vmatpush1.bf16.msra.mxu0 0
    %2176 = vmatprep.subr.bf16.mxu0 0
    %2177 = vmatpush1.bf16.msra.mxu0 0
    %2178 = vmatprep.subr.bf16.mxu0 0
    %2179 = vmatpush1.bf16.msra.mxu0 0
    %2180 = vmatprep.subr.bf16.mxu0 0
    %2181 = vmatpush1.bf16.msra.mxu0 0
    %2182 = vmatprep.subr.bf16.mxu0 0
    %2183 = vmatpush1.bf16.msra.mxu0 0
    %2184 = vmatprep.subr.bf16.mxu0 0
    %2185 = vmatpush1.bf16.msra.mxu0 0
    %2186 = vmatprep.subr.bf16.mxu0 0
    %2187 = vmatpush1.bf16.msra.mxu0 0
    %2188 = vmatprep.subr.bf16.mxu0 0
    %2189 = vmatpush1.bf16.msra.mxu0 0
    %2190 = vmatprep.subr.bf16.mxu0 0
    %2191 = vmatpush1.bf16.msra.mxu0 0
    %2192 = vmatprep.subr.bf16.mxu0 0
    %2193 = vmatpush1.bf16.msra.mxu0 0
    %2194 = vmatprep.subr.bf16.mxu0 0
    %2195 = vmatpush1.bf16.msra.mxu0 0
    %2196 = vmatprep.subr.bf16.mxu0 0
    %2197 = vmatpush1.bf16.msra.mxu0 0
    %2198 = vmatprep.subr.bf16.mxu0 0
    %2199 = vmatpush1.bf16.msra.mxu0 0
    %2200 = vmatprep.subr.bf16.mxu0 0
    %2201 = vmatpush1.bf16.msra.mxu0 0
    %2202 = vmatprep.mubr.bf16.mxu0 0
    %2203 = vmatmul.mubr.bf16.gmra.mrb[0].mxu0 %v2168
    %v2204 = vpop.f32.mrb[0].mxu0
    %v2205 = vadd.f32 0.0, %v2204
    %v2206 = vpop.f32.mrb[0].mxu0
    %v2207 = vpop.f32.mrb[0].mxu0
    %v2208 = vadd.f32 0.0, %v2207
    %v2209 = vpop.f32.mrb[0].mxu0
    %2210 = vdwg.mxu0
    %v2211 = vadd.f32 %v2144, %v2205
    %v2212 = vadd.f32 %v2147, %v2208
    %s2213 = scalar_lea.vmem %s5, 48
    %v2214 = vld [vmem:[%s2213] sm:$0xf]
    %v2215 = vld [vmem:[%s2213 + $0x4] sm:$0xf]
    %v2216 = vld [vmem:[%s2213 + $0x8] sm:$0xf]
    %v2217 = vld [vmem:[%s2213 + $0xc] sm:$0xf]
    %v2222 = vunpack.c.l.b16 %v2214
    %v2223 = vunpack.c.l.b16 %v2215
    %v2224 = vunpack.c.l.b16 %v2216
    %v2225 = vunpack.c.l.b16 %v2217
    %v2226 = vpack.c.b16 %v2223, %v2222
    %v2227 = vpack.c.b16 %v2225, %v2224
    %v2231 = vsel %vm2049, %v2022, 0
    %2233 = vmatprep.subr.bf16.mxu0 0
    %2234 = vmatpush1.bf16.msra.mxu0 %v2226
    %2235 = vmatprep.subr.bf16.mxu0 0
    %2236 = vmatpush1.bf16.msra.mxu0 %v2227
    %2237 = vmatprep.subr.bf16.mxu0 0
    %2238 = vmatpush1.bf16.msra.mxu0 0
    %2239 = vmatprep.subr.bf16.mxu0 0
    %2240 = vmatpush1.bf16.msra.mxu0 0
    %2241 = vmatprep.subr.bf16.mxu0 0
    %2242 = vmatpush1.bf16.msra.mxu0 0
    %2243 = vmatprep.subr.bf16.mxu0 0
    %2244 = vmatpush1.bf16.msra.mxu0 0
    %2245 = vmatprep.subr.bf16.mxu0 0
    %2246 = vmatpush1.bf16.msra.mxu0 0
    %2247 = vmatprep.subr.bf16.mxu0 0
    %2248 = vmatpush1.bf16.msra.mxu0 0
    %2249 = vmatprep.subr.bf16.mxu0 0
    %2250 = vmatpush1.bf16.msra.mxu0 0
    %2251 = vmatprep.subr.bf16.mxu0 0
    %2252 = vmatpush1.bf16.msra.mxu0 0
    %2253 = vmatprep.subr.bf16.mxu0 0
    %2254 = vmatpush1.bf16.msra.mxu0 0
    %2255 = vmatprep.subr.bf16.mxu0 0
    %2256 = vmatpush1.bf16.msra.mxu0 0
    %2257 = vmatprep.subr.bf16.mxu0 0
    %2258 = vmatpush1.bf16.msra.mxu0 0
    %2259 = vmatprep.subr.bf16.mxu0 0
    %2260 = vmatpush1.bf16.msra.mxu0 0
    %2261 = vmatprep.subr.bf16.mxu0 0
    %2262 = vmatpush1.bf16.msra.mxu0 0
    %2263 = vmatprep.subr.bf16.mxu0 0
    %2264 = vmatpush1.bf16.msra.mxu0 0
    %2265 = vmatprep.mubr.bf16.mxu0 0
    %2266 = vmatmul.mubr.bf16.gmra.mrb[0].mxu0 %v2231
    %v2267 = vpop.f32.mrb[0].mxu0
    %v2268 = vadd.f32 0.0, %v2267
    %v2269 = vpop.f32.mrb[0].mxu0
    %v2270 = vpop.f32.mrb[0].mxu0
    %v2271 = vadd.f32 0.0, %v2270
    %v2272 = vpop.f32.mrb[0].mxu0
    %2273 = vdwg.mxu0
    %v2274 = vadd.f32 %v2211, %v2268
    %v2275 = vadd.f32 %v2212, %v2271
    %s2276 = scalar_lea.vmem %s5, 64
    %v2277 = vld [vmem:[%s2276] sm:$0xf]
    %v2278 = vld [vmem:[%s2276 + $0x4] sm:$0xf]
    %v2279 = vld [vmem:[%s2276 + $0x8] sm:$0xf]
    %v2280 = vld [vmem:[%s2276 + $0xc] sm:$0xf]
    %v2285 = vunpack.c.l.b16 %v2277
    %v2286 = vunpack.c.l.b16 %v2278
    %v2287 = vunpack.c.l.b16 %v2279
    %v2288 = vunpack.c.l.b16 %v2280
    %v2289 = vpack.c.b16 %v2286, %v2285
    %v2290 = vpack.c.b16 %v2288, %v2287
    %v2294 = vsel %vm2049, %v2023, 0
    %2296 = vmatprep.subr.bf16.mxu0 0
    %2297 = vmatpush1.bf16.msra.mxu0 %v2289
    %2298 = vmatprep.subr.bf16.mxu0 0
    %2299 = vmatpush1.bf16.msra.mxu0 %v2290
    %2300 = vmatprep.subr.bf16.mxu0 0
    %2301 = vmatpush1.bf16.msra.mxu0 0
    %2302 = vmatprep.subr.bf16.mxu0 0
    %2303 = vmatpush1.bf16.msra.mxu0 0
    %2304 = vmatprep.subr.bf16.mxu0 0
    %2305 = vmatpush1.bf16.msra.mxu0 0
    %2306 = vmatprep.subr.bf16.mxu0 0
    %2307 = vmatpush1.bf16.msra.mxu0 0
    %2308 = vmatprep.subr.bf16.mxu0 0
    %2309 = vmatpush1.bf16.msra.mxu0 0
    %2310 = vmatprep.subr.bf16.mxu0 0
    %2311 = vmatpush1.bf16.msra.mxu0 0
    %2312 = vmatprep.subr.bf16.mxu0 0
    %2313 = vmatpush1.bf16.msra.mxu0 0
    %2314 = vmatprep.subr.bf16.mxu0 0
    %2315 = vmatpush1.bf16.msra.mxu0 0
    %2316 = vmatprep.subr.bf16.mxu0 0
    %2317 = vmatpush1.bf16.msra.mxu0 0
    %2318 = vmatprep.subr.bf16.mxu0 0
    %2319 = vmatpush1.bf16.msra.mxu0 0
    %2320 = vmatprep.subr.bf16.mxu0 0
    %2321 = vmatpush1.bf16.msra.mxu0 0
    %2322 = vmatprep.subr.bf16.mxu0 0
    %2323 = vmatpush1.bf16.msra.mxu0 0
    %2324 = vmatprep.subr.bf16.mxu0 0
    %2325 = vmatpush1.bf16.msra.mxu0 0
    %2326 = vmatprep.subr.bf16.mxu0 0
    %2327 = vmatpush1.bf16.msra.mxu0 0
    %2328 = vmatprep.mubr.bf16.mxu0 0
    %2329 = vmatmul.mubr.bf16.gmra.mrb[0].mxu0 %v2294
    %v2330 = vpop.f32.mrb[0].mxu0
    %v2331 = vadd.f32 0.0, %v2330
    %v2332 = vpop.f32.mrb[0].mxu0
    %v2333 = vpop.f32.mrb[0].mxu0
    %v2334 = vadd.f32 0.0, %v2333
    %v2335 = vpop.f32.mrb[0].mxu0
    %2336 = vdwg.mxu0
    %v2337 = vadd.f32 %v2274, %v2331
    %v2338 = vadd.f32 %v2275, %v2334
    %s2339 = scalar_lea.vmem %s5, 80
    %v2340 = vld [vmem:[%s2339] sm:$0xf]
    %v2341 = vld [vmem:[%s2339 + $0x4] sm:$0xf]
    %v2342 = vld [vmem:[%s2339 + $0x8] sm:$0xf]
    %v2343 = vld [vmem:[%s2339 + $0xc] sm:$0xf]
    %v2348 = vunpack.c.l.b16 %v2340
    %v2349 = vunpack.c.l.b16 %v2341
    %v2350 = vunpack.c.l.b16 %v2342
    %v2351 = vunpack.c.l.b16 %v2343
    %v2352 = vpack.c.b16 %v2349, %v2348
    %v2353 = vpack.c.b16 %v2351, %v2350
    %v2357 = vsel %vm2049, %v2024, 0
    %2359 = vmatprep.subr.bf16.mxu0 0
    %2360 = vmatpush1.bf16.msra.mxu0 %v2352
    %2361 = vmatprep.subr.bf16.mxu0 0
    %2362 = vmatpush1.bf16.msra.mxu0 %v2353
    %2363 = vmatprep.subr.bf16.mxu0 0
    %2364 = vmatpush1.bf16.msra.mxu0 0
    %2365 = vmatprep.subr.bf16.mxu0 0
    %2366 = vmatpush1.bf16.msra.mxu0 0
    %2367 = vmatprep.subr.bf16.mxu0 0
    %2368 = vmatpush1.bf16.msra.mxu0 0
    %2369 = vmatprep.subr.bf16.mxu0 0
    %2370 = vmatpush1.bf16.msra.mxu0 0
    %2371 = vmatprep.subr.bf16.mxu0 0
    %2372 = vmatpush1.bf16.msra.mxu0 0
    %2373 = vmatprep.subr.bf16.mxu0 0
    %2374 = vmatpush1.bf16.msra.mxu0 0
    %2375 = vmatprep.subr.bf16.mxu0 0
    %2376 = vmatpush1.bf16.msra.mxu0 0
    %2377 = vmatprep.subr.bf16.mxu0 0
    %2378 = vmatpush1.bf16.msra.mxu0 0
    %2379 = vmatprep.subr.bf16.mxu0 0
    %2380 = vmatpush1.bf16.msra.mxu0 0
    %2381 = vmatprep.subr.bf16.mxu0 0
    %2382 = vmatpush1.bf16.msra.mxu0 0
    %2383 = vmatprep.subr.bf16.mxu0 0
    %2384 = vmatpush1.bf16.msra.mxu0 0
    %2385 = vmatprep.subr.bf16.mxu0 0
    %2386 = vmatpush1.bf16.msra.mxu0 0
    %2387 = vmatprep.subr.bf16.mxu0 0
    %2388 = vmatpush1.bf16.msra.mxu0 0
    %2389 = vmatprep.subr.bf16.mxu0 0
    %2390 = vmatpush1.bf16.msra.mxu0 0
    %2391 = vmatprep.mubr.bf16.mxu0 0
    %2392 = vmatmul.mubr.bf16.gmra.mrb[0].mxu0 %v2357
    %v2393 = vpop.f32.mrb[0].mxu0
    %v2394 = vadd.f32 0.0, %v2393
    %v2395 = vpop.f32.mrb[0].mxu0
    %v2396 = vpop.f32.mrb[0].mxu0
    %v2397 = vadd.f32 0.0, %v2396
    %v2398 = vpop.f32.mrb[0].mxu0
    %2399 = vdwg.mxu0
    %v2400 = vadd.f32 %v2337, %v2394
    %v2401 = vadd.f32 %v2338, %v2397
    %s2402 = scalar_lea.vmem %s5, 96
    %v2403 = vld [vmem:[%s2402] sm:$0xf]
    %v2404 = vld [vmem:[%s2402 + $0x4] sm:$0xf]
    %v2405 = vld [vmem:[%s2402 + $0x8] sm:$0xf]
    %v2406 = vld [vmem:[%s2402 + $0xc] sm:$0xf]
    %v2411 = vunpack.c.l.b16 %v2403
    %v2412 = vunpack.c.l.b16 %v2404
    %v2413 = vunpack.c.l.b16 %v2405
    %v2414 = vunpack.c.l.b16 %v2406
    %v2415 = vpack.c.b16 %v2412, %v2411
    %v2416 = vpack.c.b16 %v2414, %v2413
    %v2420 = vsel %vm2049, %v2025, 0
    %2422 = vmatprep.subr.bf16.mxu0 0
    %2423 = vmatpush1.bf16.msra.mxu0 %v2415
    %2424 = vmatprep.subr.bf16.mxu0 0
    %2425 = vmatpush1.bf16.msra.mxu0 %v2416
    %2426 = vmatprep.subr.bf16.mxu0 0
    %2427 = vmatpush1.bf16.msra.mxu0 0
    %2428 = vmatprep.subr.bf16.mxu0 0
    %2429 = vmatpush1.bf16.msra.mxu0 0
    %2430 = vmatprep.subr.bf16.mxu0 0
    %2431 = vmatpush1.bf16.msra.mxu0 0
    %2432 = vmatprep.subr.bf16.mxu0 0
    %2433 = vmatpush1.bf16.msra.mxu0 0
    %2434 = vmatprep.subr.bf16.mxu0 0
    %2435 = vmatpush1.bf16.msra.mxu0 0
    %2436 = vmatprep.subr.bf16.mxu0 0
    %2437 = vmatpush1.bf16.msra.mxu0 0
    %2438 = vmatprep.subr.bf16.mxu0 0
    %2439 = vmatpush1.bf16.msra.mxu0 0
    %2440 = vmatprep.subr.bf16.mxu0 0
    %2441 = vmatpush1.bf16.msra.mxu0 0
    %2442 = vmatprep.subr.bf16.mxu0 0
    %2443 = vmatpush1.bf16.msra.mxu0 0
    %2444 = vmatprep.subr.bf16.mxu0 0
    %2445 = vmatpush1.bf16.msra.mxu0 0
    %2446 = vmatprep.subr.bf16.mxu0 0
    %2447 = vmatpush1.bf16.msra.mxu0 0
    %2448 = vmatprep.subr.bf16.mxu0 0
    %2449 = vmatpush1.bf16.msra.mxu0 0
    %2450 = vmatprep.subr.bf16.mxu0 0
    %2451 = vmatpush1.bf16.msra.mxu0 0
    %2452 = vmatprep.subr.bf16.mxu0 0
    %2453 = vmatpush1.bf16.msra.mxu0 0
    %2454 = vmatprep.mubr.bf16.mxu0 0
    %2455 = vmatmul.mubr.bf16.gmra.mrb[0].mxu0 %v2420
    %v2456 = vpop.f32.mrb[0].mxu0
    %v2457 = vadd.f32 0.0, %v2456
    %v2458 = vpop.f32.mrb[0].mxu0
    %v2459 = vpop.f32.mrb[0].mxu0
    %v2460 = vadd.f32 0.0, %v2459
    %v2461 = vpop.f32.mrb[0].mxu0
    %2462 = vdwg.mxu0
    %v2463 = vadd.f32 %v2400, %v2457
    %v2464 = vadd.f32 %v2401, %v2460
    %s2465 = scalar_lea.vmem %s5, 112
    %v2466 = vld [vmem:[%s2465] sm:$0xf]
    %v2467 = vld [vmem:[%s2465 + $0x4] sm:$0xf]
    %v2468 = vld [vmem:[%s2465 + $0x8] sm:$0xf]
    %v2469 = vld [vmem:[%s2465 + $0xc] sm:$0xf]
    %v2474 = vunpack.c.l.b16 %v2466
    %v2475 = vunpack.c.l.b16 %v2467
    %v2476 = vunpack.c.l.b16 %v2468
    %v2477 = vunpack.c.l.b16 %v2469
    %v2478 = vpack.c.b16 %v2475, %v2474
    %v2479 = vpack.c.b16 %v2477, %v2476
    %v2483 = vsel %vm2049, %v2026, 0
    %2485 = vmatprep.subr.bf16.mxu0 0
    %2486 = vmatpush1.bf16.msra.mxu0 %v2478
    %2487 = vmatprep.subr.bf16.mxu0 0
    %2488 = vmatpush1.bf16.msra.mxu0 %v2479
    %2489 = vmatprep.subr.bf16.mxu0 0
    %2490 = vmatpush1.bf16.msra.mxu0 0
    %2491 = vmatprep.subr.bf16.mxu0 0
    %2492 = vmatpush1.bf16.msra.mxu0 0
    %2493 = vmatprep.subr.bf16.mxu0 0
    %2494 = vmatpush1.bf16.msra.mxu0 0
    %2495 = vmatprep.subr.bf16.mxu0 0
    %2496 = vmatpush1.bf16.msra.mxu0 0
    %2497 = vmatprep.subr.bf16.mxu0 0
    %2498 = vmatpush1.bf16.msra.mxu0 0
    %2499 = vmatprep.subr.bf16.mxu0 0
    %2500 = vmatpush1.bf16.msra.mxu0 0
    %2501 = vmatprep.subr.bf16.mxu0 0
    %2502 = vmatpush1.bf16.msra.mxu0 0
    %2503 = vmatprep.subr.bf16.mxu0 0
    %2504 = vmatpush1.bf16.msra.mxu0 0
    %2505 = vmatprep.subr.bf16.mxu0 0
    %2506 = vmatpush1.bf16.msra.mxu0 0
    %2507 = vmatprep.subr.bf16.mxu0 0
    %2508 = vmatpush1.bf16.msra.mxu0 0
    %2509 = vmatprep.subr.bf16.mxu0 0
    %2510 = vmatpush1.bf16.msra.mxu0 0
    %2511 = vmatprep.subr.bf16.mxu0 0
    %2512 = vmatpush1.bf16.msra.mxu0 0
    %2513 = vmatprep.subr.bf16.mxu0 0
    %2514 = vmatpush1.bf16.msra.mxu0 0
    %2515 = vmatprep.subr.bf16.mxu0 0
    %2516 = vmatpush1.bf16.msra.mxu0 0
    %2517 = vmatprep.mubr.bf16.mxu0 0
    %2518 = vmatmul.mubr.bf16.gmra.mrb[0].mxu0 %v2483
    %v2519 = vpop.f32.mrb[0].mxu0
    %v2520 = vadd.f32 0.0, %v2519
    %v2521 = vpop.f32.mrb[0].mxu0
    %v2522 = vpop.f32.mrb[0].mxu0
    %v2523 = vadd.f32 0.0, %v2522
    %v2524 = vpop.f32.mrb[0].mxu0
    %2525 = vdwg.mxu0
    %v2526 = vadd.f32 %v2463, %v2520
    %v2527 = vadd.f32 %v2464, %v2523
    %s2528 = scalar_lea.vmem %s5, 128
    %v2529 = vld [vmem:[%s2528] sm:$0xf]
    %v2530 = vld [vmem:[%s2528 + $0x4] sm:$0xf]
    %v2531 = vld [vmem:[%s2528 + $0x8] sm:$0xf]
    %v2532 = vld [vmem:[%s2528 + $0xc] sm:$0xf]
    %v2537 = vunpack.c.l.b16 %v2529
    %v2538 = vunpack.c.l.b16 %v2530
    %v2539 = vunpack.c.l.b16 %v2531
    %v2540 = vunpack.c.l.b16 %v2532
    %v2541 = vpack.c.b16 %v2538, %v2537
    %v2542 = vpack.c.b16 %v2540, %v2539
    %v2546 = vsel %vm2049, %v2027, 0
    %2548 = vmatprep.subr.bf16.mxu0 0
    %2549 = vmatpush1.bf16.msra.mxu0 %v2541
    %2550 = vmatprep.subr.bf16.mxu0 0
    %2551 = vmatpush1.bf16.msra.mxu0 %v2542
    %2552 = vmatprep.subr.bf16.mxu0 0
    %2553 = vmatpush1.bf16.msra.mxu0 0
    %2554 = vmatprep.subr.bf16.mxu0 0
    %2555 = vmatpush1.bf16.msra.mxu0 0
    %2556 = vmatprep.subr.bf16.mxu0 0
    %2557 = vmatpush1.bf16.msra.mxu0 0
    %2558 = vmatprep.subr.bf16.mxu0 0
    %2559 = vmatpush1.bf16.msra.mxu0 0
    %2560 = vmatprep.subr.bf16.mxu0 0
    %2561 = vmatpush1.bf16.msra.mxu0 0
    %2562 = vmatprep.subr.bf16.mxu0 0
    %2563 = vmatpush1.bf16.msra.mxu0 0
    %2564 = vmatprep.subr.bf16.mxu0 0
    %2565 = vmatpush1.bf16.msra.mxu0 0
    %2566 = vmatprep.subr.bf16.mxu0 0
    %2567 = vmatpush1.bf16.msra.mxu0 0
    %2568 = vmatprep.subr.bf16.mxu0 0
    %2569 = vmatpush1.bf16.msra.mxu0 0
    %2570 = vmatprep.subr.bf16.mxu0 0
    %2571 = vmatpush1.bf16.msra.mxu0 0
    %2572 = vmatprep.subr.bf16.mxu0 0
    %2573 = vmatpush1.bf16.msra.mxu0 0
    %2574 = vmatprep.subr.bf16.mxu0 0
    %2575 = vmatpush1.bf16.msra.mxu0 0
    %2576 = vmatprep.subr.bf16.mxu0 0
    %2577 = vmatpush1.bf16.msra.mxu0 0
    %2578 = vmatprep.subr.bf16.mxu0 0
    %2579 = vmatpush1.bf16.msra.mxu0 0
    %2580 = vmatprep.mubr.bf16.mxu0 0
    %2581 = vmatmul.mubr.bf16.gmra.mrb[0].mxu0 %v2546
    %v2582 = vpop.f32.mrb[0].mxu0
    %v2583 = vadd.f32 0.0, %v2582
    %v2584 = vpop.f32.mrb[0].mxu0
    %v2585 = vpop.f32.mrb[0].mxu0
    %v2586 = vadd.f32 0.0, %v2585
    %v2587 = vpop.f32.mrb[0].mxu0
    %2588 = vdwg.mxu0
    %v2589 = vadd.f32 %v2526, %v2583
    %v2590 = vadd.f32 %v2527, %v2586
    %v2591 = vld [vmem:[%s6] sm:$0x1]
    %v2593 = vlaneseq
    %v2594 = vshrl.u32 %v2593, 7
    %v2595 = vsub.s32 0, %v2594
    %v2596 = vrot.slane %v2591, %v2595
    %v2598 = vadd.f32 %v2589, %v2596
    %v2599 = vadd.f32 %v2590, %v2596
    %v2600 = vmax.f32 %v2598, 0.0
    %v2601 = vmax.f32 %v2599, 0.0
    %v2602 = vpack.c.bf16 %v2601, %v2600
    %v2603 = vld [vmem:[%s7] sm:$0xf]
    %v2604 = vld [vmem:[%s7 + $0x4] sm:$0xf]
    %v2605 = vld [vmem:[%s7 + $0x8] sm:$0xf]
    %v2606 = vld [vmem:[%s7 + $0xc] sm:$0xf]
    %v2607 = vld [vmem:[%s7 + $0x10] sm:$0xf]
    %v2608 = vld [vmem:[%s7 + $0x14] sm:$0xf]
    %v2609 = vld [vmem:[%s7 + $0x18] sm:$0xf]
    %v2610 = vld [vmem:[%s7 + $0x1c] sm:$0xf]
    %v2611 = vld [vmem:[%s7 + $0x20] sm:$0xf]
    %v2621 = vunpack.c.l.b16 %v2603
    %v2622 = vunpack.c.l.b16 %v2604
    %v2623 = vunpack.c.l.b16 %v2605
    %v2624 = vunpack.c.l.b16 %v2606
    %v2625 = vunpack.c.l.b16 %v2607
    %v2626 = vunpack.c.l.b16 %v2608
    %v2627 = vunpack.c.l.b16 %v2609
    %v2628 = vunpack.c.l.b16 %v2610
    %v2629 = vunpack.c.l.b16 %v2611
    %v2630 = vpack.c.b16 %v2622, %v2621
    %v2631 = vpack.c.b16 %v2624, %v2623
    %v2632 = vpack.c.b16 %v2626, %v2625
    %v2633 = vpack.c.b16 %v2628, %v2627
    %v2634 = vpack.c.b16 %v2629, %v2629
    %vm2635 = vcmask 130048
    %v2637 = vsel %vm2635, %v2630, 0
    %v2640 = vsel %vm2635, %v2631, 0
    %v2643 = vsel %vm2635, %v2632, 0
    %v2646 = vsel %vm2635, %v2633, 0
    %v2649 = vsel %vm2635, %v2634, 0
    %2651 = vmatprep.subr.bf16.mxu0 0
    %2652 = vmatpush1.bf16.msra.mxu0 %v2602
    %2653 = vmatprep.subr.bf16.mxu0 0
    %2654 = vmatpush1.bf16.msra.mxu0 0
    %2655 = vmatprep.subr.bf16.mxu0 0
    %2656 = vmatpush1.bf16.msra.mxu0 0
    %2657 = vmatprep.subr.bf16.mxu0 0
    %2658 = vmatpush1.bf16.msra.mxu0 0
    %2659 = vmatprep.subr.bf16.mxu0 0
    %2660 = vmatpush1.bf16.msra.mxu0 0
    %2661 = vmatprep.subr.bf16.mxu0 0
    %2662 = vmatpush1.bf16.msra.mxu0 0
    %2663 = vmatprep.subr.bf16.mxu0 0
    %2664 = vmatpush1.bf16.msra.mxu0 0
    %2665 = vmatprep.subr.bf16.mxu0 0
    %2666 = vmatpush1.bf16.msra.mxu0 0
    %2667 = vmatprep.subr.bf16.mxu0 0
    %2668 = vmatpush1.bf16.msra.mxu0 0
    %2669 = vmatprep.subr.bf16.mxu0 0
    %2670 = vmatpush1.bf16.msra.mxu0 0
    %2671 = vmatprep.subr.bf16.mxu0 0
    %2672 = vmatpush1.bf16.msra.mxu0 0
    %2673 = vmatprep.subr.bf16.mxu0 0
    %2674 = vmatpush1.bf16.msra.mxu0 0
    %2675 = vmatprep.subr.bf16.mxu0 0
    %2676 = vmatpush1.bf16.msra.mxu0 0
    %2677 = vmatprep.subr.bf16.mxu0 0
    %2678 = vmatpush1.bf16.msra.mxu0 0
    %2679 = vmatprep.subr.bf16.mxu0 0
    %2680 = vmatpush1.bf16.msra.mxu0 0
    %2681 = vmatprep.subr.bf16.mxu0 0
    %2682 = vmatpush1.bf16.msra.mxu0 0
    %2683 = vmatprep.mubr.bf16.mxu0 0
    %2684 = vmatmul.mubr.bf16.gmra.mrb[0].mxu0 %v2637
    %v2685 = vpop.f32.mrb[0].mxu0
    %v2686 = vadd.f32 0.0, %v2685
    %v2687 = vpop.f32.mrb[0].mxu0
    %v2688 = vpop.f32.mrb[0].mxu0
    %v2689 = vadd.f32 0.0, %v2688
    %v2690 = vpop.f32.mrb[0].mxu0
    %2691 = vmatprep.mubr.bf16.mxu0 0
    %2692 = vmatmul.mubr.bf16.gmra.mrb[0].mxu0 %v2640
    %v2693 = vpop.f32.mrb[0].mxu0
    %v2694 = vadd.f32 0.0, %v2693
    %v2695 = vpop.f32.mrb[0].mxu0
    %v2696 = vpop.f32.mrb[0].mxu0
    %v2697 = vadd.f32 0.0, %v2696
    %v2698 = vpop.f32.mrb[0].mxu0
    %2699 = vmatprep.mubr.bf16.mxu0 0
    %2700 = vmatmul.mubr.bf16.gmra.mrb[0].mxu0 %v2643
    %v2701 = vpop.f32.mrb[0].mxu0
    %v2702 = vadd.f32 0.0, %v2701
    %v2703 = vpop.f32.mrb[0].mxu0
    %v2704 = vpop.f32.mrb[0].mxu0
    %v2705 = vadd.f32 0.0, %v2704
    %v2706 = vpop.f32.mrb[0].mxu0
    %2707 = vmatprep.mubr.bf16.mxu0 0
    %2708 = vmatmul.mubr.bf16.gmra.mrb[0].mxu0 %v2646
    %v2709 = vpop.f32.mrb[0].mxu0
    %v2710 = vadd.f32 0.0, %v2709
    %v2711 = vpop.f32.mrb[0].mxu0
    %v2712 = vpop.f32.mrb[0].mxu0
    %v2713 = vadd.f32 0.0, %v2712
    %v2714 = vpop.f32.mrb[0].mxu0
    %2715 = vmatprep.mubr.bf16.mxu0 0
    %2716 = vmatmul.mubr.bf16.gmra.mrb[0].mxu0 %v2649
    %v2717 = vpop.f32.mrb[0].mxu0
    %v2718 = vadd.f32 0.0, %v2717
    %v2719 = vpop.f32.mrb[0].mxu0
    %v2720 = vpop.f32.mrb[0].mxu0
    %v2721 = vpop.f32.mrb[0].mxu0
    %2722 = vdwg.mxu0
    %v2723 = vpack.c.bf16 %v2689, %v2686
    %v2724 = vpack.c.bf16 %v2697, %v2694
    %v2725 = vpack.c.bf16 %v2705, %v2702
    %v2726 = vpack.c.bf16 %v2713, %v2710
    %v2727 = vpack.c.bf16 %v2718, %v2718
    %v2728 = vld [vmem:[%s8] sm:$0xf]
    %v2729 = vld [vmem:[%s8 + $0x4] sm:$0xf]
    %v2730 = vld [vmem:[%s8 + $0x8] sm:$0xf]
    %v2731 = vld [vmem:[%s8 + $0xc] sm:$0xf]
    %v2732 = vld [vmem:[%s8 + $0x10] sm:$0xf]
    %v2733 = vld [vmem:[%s8 + $0x14] sm:$0xf]
    %v2734 = vld [vmem:[%s8 + $0x18] sm:$0xf]
    %v2735 = vld [vmem:[%s8 + $0x1c] sm:$0xf]
    %s2736 = scalar_lea.vmem %s8, 32
    %v2737 = vld [vmem:[%s2736] sm:$0xf]
    %v2738 = vld [vmem:[%s2736 + $0x4] sm:$0xf]
    %v2739 = vld [vmem:[%s2736 + $0x8] sm:$0xf]
    %v2740 = vld [vmem:[%s2736 + $0xc] sm:$0xf]
    %v2741 = vld [vmem:[%s2736 + $0x10] sm:$0xf]
    %v2742 = vld [vmem:[%s2736 + $0x14] sm:$0xf]
    %v2743 = vld [vmem:[%s2736 + $0x18] sm:$0xf]
    %v2744 = vld [vmem:[%s2736 + $0x1c] sm:$0xf]
    %v2746 = vrot.slane %v2723, 4
    %v2755 = vunpack.c.l.b16 %v2737
    %v2756 = vunpack.c.l.b16 %v2738
    %v2757 = vunpack.c.l.b16 %v2739
    %v2758 = vunpack.c.l.b16 %v2740
    %v2759 = vunpack.c.l.b16 %v2741
    %v2760 = vunpack.c.l.b16 %v2742
    %v2761 = vunpack.c.l.b16 %v2743
    %v2762 = vunpack.c.l.b16 %v2744
    %v2763 = vpack.c.b16 %v2756, %v2755
    %v2764 = vpack.c.b16 %v2758, %v2757
    %v2765 = vpack.c.b16 %v2760, %v2759
    %v2766 = vpack.c.b16 %v2762, %v2761
    %v2772 = vsel %vm1886, %v2746, 0
    %2774 = vmatprep.subr.bf16.mxu0 0
    %2775 = vmatpush1.bf16.msra.mxu0 %v2763
    %2776 = vmatprep.subr.bf16.mxu0 0
    %2777 = vmatpush1.bf16.msra.mxu0 %v2764
    %2778 = vmatprep.subr.bf16.mxu0 0
    %2779 = vmatpush1.bf16.msra.mxu0 %v2765
    %2780 = vmatprep.subr.bf16.mxu0 0
    %2781 = vmatpush1.bf16.msra.mxu0 %v2766
    %2782 = vmatprep.subr.bf16.mxu0 0
    %2783 = vmatpush1.bf16.msra.mxu0 0
    %2784 = vmatprep.subr.bf16.mxu0 0
    %2785 = vmatpush1.bf16.msra.mxu0 0
    %2786 = vmatprep.subr.bf16.mxu0 0
    %2787 = vmatpush1.bf16.msra.mxu0 0
    %2788 = vmatprep.subr.bf16.mxu0 0
    %2789 = vmatpush1.bf16.msra.mxu0 0
    %2790 = vmatprep.subr.bf16.mxu0 0
    %2791 = vmatpush1.bf16.msra.mxu0 0
    %2792 = vmatprep.subr.bf16.mxu0 0
    %2793 = vmatpush1.bf16.msra.mxu0 0
    %2794 = vmatprep.subr.bf16.mxu0 0
    %2795 = vmatpush1.bf16.msra.mxu0 0
    %2796 = vmatprep.subr.bf16.mxu0 0
    %2797 = vmatpush1.bf16.msra.mxu0 0
    %2798 = vmatprep.subr.bf16.mxu0 0
    %2799 = vmatpush1.bf16.msra.mxu0 0
    %2800 = vmatprep.subr.bf16.mxu0 0
    %2801 = vmatpush1.bf16.msra.mxu0 0
    %2802 = vmatprep.subr.bf16.mxu0 0
    %2803 = vmatpush1.bf16.msra.mxu0 0
    %2804 = vmatprep.subr.bf16.mxu0 0
    %2805 = vmatpush1.bf16.msra.mxu0 0
    %2806 = vmatprep.mubr.bf16.mxu0 0
    %2807 = vmatmul.mubr.bf16.gmra.mrb[0].mxu0 %v2772
    %v2808 = vpop.f32.mrb[0].mxu0
    %v2809 = vadd.f32 0.0, %v2808
    %v2810 = vpop.f32.mrb[0].mxu0
    %v2811 = vpop.f32.mrb[0].mxu0
    %v2812 = vpop.f32.mrb[0].mxu0
    %2813 = vdwg.mxu0
    %v2822 = vunpack.c.l.b16 %v2728
    %v2823 = vunpack.c.l.b16 %v2729
    %v2824 = vunpack.c.l.b16 %v2730
    %v2825 = vunpack.c.l.b16 %v2731
    %v2826 = vunpack.c.l.b16 %v2732
    %v2827 = vunpack.c.l.b16 %v2733
    %v2828 = vunpack.c.l.b16 %v2734
    %v2829 = vunpack.c.l.b16 %v2735
    %v2830 = vpack.c.b16 %v2823, %v2822
    %v2831 = vpack.c.b16 %v2825, %v2824
    %v2832 = vpack.c.b16 %v2827, %v2826
    %v2833 = vpack.c.b16 %v2829, %v2828
    %v2839 = vsel %vm1886, %v2723, 0
    %2841 = vmatprep.subr.bf16.mxu0 0
    %2842 = vmatpush1.bf16.msra.mxu0 %v2830
    %2843 = vmatprep.subr.bf16.mxu0 0
    %2844 = vmatpush1.bf16.msra.mxu0 %v2831
    %2845 = vmatprep.subr.bf16.mxu0 0
    %2846 = vmatpush1.bf16.msra.mxu0 %v2832
    %2847 = vmatprep.subr.bf16.mxu0 0
    %2848 = vmatpush1.bf16.msra.mxu0 %v2833
    %2849 = vmatprep.subr.bf16.mxu0 0
    %2850 = vmatpush1.bf16.msra.mxu0 0
    %2851 = vmatprep.subr.bf16.mxu0 0
    %2852 = vmatpush1.bf16.msra.mxu0 0
    %2853 = vmatprep.subr.bf16.mxu0 0
    %2854 = vmatpush1.bf16.msra.mxu0 0
    %2855 = vmatprep.subr.bf16.mxu0 0
    %2856 = vmatpush1.bf16.msra.mxu0 0
    %2857 = vmatprep.subr.bf16.mxu0 0
    %2858 = vmatpush1.bf16.msra.mxu0 0
    %2859 = vmatprep.subr.bf16.mxu0 0
    %2860 = vmatpush1.bf16.msra.mxu0 0
    %2861 = vmatprep.subr.bf16.mxu0 0
    %2862 = vmatpush1.bf16.msra.mxu0 0
    %2863 = vmatprep.subr.bf16.mxu0 0
    %2864 = vmatpush1.bf16.msra.mxu0 0
    %2865 = vmatprep.subr.bf16.mxu0 0
    %2866 = vmatpush1.bf16.msra.mxu0 0
    %2867 = vmatprep.subr.bf16.mxu0 0
    %2868 = vmatpush1.bf16.msra.mxu0 0
    %2869 = vmatprep.subr.bf16.mxu0 0
    %2870 = vmatpush1.bf16.msra.mxu0 0
    %2871 = vmatprep.subr.bf16.mxu0 0
    %2872 = vmatpush1.bf16.msra.mxu0 0
    %2873 = vmatprep.mubr.bf16.mxu0 0
    %2874 = vmatmul.mubr.bf16.gmra.mrb[0].mxu0 %v2839
    %v2875 = vpop.f32.mrb[0].mxu0
    %v2876 = vadd.f32 %v2809, %v2875
    %v2877 = vpop.f32.mrb[0].mxu0
    %v2878 = vpop.f32.mrb[0].mxu0
    %v2879 = vpop.f32.mrb[0].mxu0
    %2880 = vdwg.mxu0
    %s2881 = scalar_lea.vmem %s8, 64
    %v2882 = vld [vmem:[%s2881] sm:$0xf]
    %v2883 = vld [vmem:[%s2881 + $0x4] sm:$0xf]
    %v2884 = vld [vmem:[%s2881 + $0x8] sm:$0xf]
    %v2885 = vld [vmem:[%s2881 + $0xc] sm:$0xf]
    %v2886 = vld [vmem:[%s2881 + $0x10] sm:$0xf]
    %v2887 = vld [vmem:[%s2881 + $0x14] sm:$0xf]
    %v2888 = vld [vmem:[%s2881 + $0x18] sm:$0xf]
    %v2889 = vld [vmem:[%s2881 + $0x1c] sm:$0xf]
    %v2898 = vunpack.c.l.b16 %v2882
    %v2899 = vunpack.c.l.b16 %v2883
    %v2900 = vunpack.c.l.b16 %v2884
    %v2901 = vunpack.c.l.b16 %v2885
    %v2902 = vunpack.c.l.b16 %v2886
    %v2903 = vunpack.c.l.b16 %v2887
    %v2904 = vunpack.c.l.b16 %v2888
    %v2905 = vunpack.c.l.b16 %v2889
    %v2906 = vpack.c.b16 %v2899, %v2898
    %v2907 = vpack.c.b16 %v2901, %v2900
    %v2908 = vpack.c.b16 %v2903, %v2902
    %v2909 = vpack.c.b16 %v2905, %v2904
    %v2915 = vsel %vm1886, %v2724, 0
    %2917 = vmatprep.subr.bf16.mxu0 0
    %2918 = vmatpush1.bf16.msra.mxu0 %v2906
    %2919 = vmatprep.subr.bf16.mxu0 0
    %2920 = vmatpush1.bf16.msra.mxu0 %v2907
    %2921 = vmatprep.subr.bf16.mxu0 0
    %2922 = vmatpush1.bf16.msra.mxu0 %v2908
    %2923 = vmatprep.subr.bf16.mxu0 0
    %2924 = vmatpush1.bf16.msra.mxu0 %v2909
    %2925 = vmatprep.subr.bf16.mxu0 0
    %2926 = vmatpush1.bf16.msra.mxu0 0
    %2927 = vmatprep.subr.bf16.mxu0 0
    %2928 = vmatpush1.bf16.msra.mxu0 0
    %2929 = vmatprep.subr.bf16.mxu0 0
    %2930 = vmatpush1.bf16.msra.mxu0 0
    %2931 = vmatprep.subr.bf16.mxu0 0
    %2932 = vmatpush1.bf16.msra.mxu0 0
    %2933 = vmatprep.subr.bf16.mxu0 0
    %2934 = vmatpush1.bf16.msra.mxu0 0
    %2935 = vmatprep.subr.bf16.mxu0 0
    %2936 = vmatpush1.bf16.msra.mxu0 0
    %2937 = vmatprep.subr.bf16.mxu0 0
    %2938 = vmatpush1.bf16.msra.mxu0 0
    %2939 = vmatprep.subr.bf16.mxu0 0
    %2940 = vmatpush1.bf16.msra.mxu0 0
    %2941 = vmatprep.subr.bf16.mxu0 0
    %2942 = vmatpush1.bf16.msra.mxu0 0
    %2943 = vmatprep.subr.bf16.mxu0 0
    %2944 = vmatpush1.bf16.msra.mxu0 0
    %2945 = vmatprep.subr.bf16.mxu0 0
    %2946 = vmatpush1.bf16.msra.mxu0 0
    %2947 = vmatprep.subr.bf16.mxu0 0
    %2948 = vmatpush1.bf16.msra.mxu0 0
    %2949 = vmatprep.mubr.bf16.mxu0 0
    %2950 = vmatmul.mubr.bf16.gmra.mrb[0].mxu0 %v2915
    %v2951 = vpop.f32.mrb[0].mxu0
    %v2952 = vadd.f32 0.0, %v2951
    %v2953 = vpop.f32.mrb[0].mxu0
    %v2954 = vpop.f32.mrb[0].mxu0
    %v2955 = vpop.f32.mrb[0].mxu0
    %2956 = vdwg.mxu0
    %v2957 = vadd.f32 %v2876, %v2952
    %s2958 = scalar_lea.vmem %s8, 96
    %v2959 = vld [vmem:[%s2958] sm:$0xf]
    %v2960 = vld [vmem:[%s2958 + $0x4] sm:$0xf]
    %v2961 = vld [vmem:[%s2958 + $0x8] sm:$0xf]
    %v2962 = vld [vmem:[%s2958 + $0xc] sm:$0xf]
    %v2963 = vld [vmem:[%s2958 + $0x10] sm:$0xf]
    %v2964 = vld [vmem:[%s2958 + $0x14] sm:$0xf]
    %v2965 = vld [vmem:[%s2958 + $0x18] sm:$0xf]
    %v2966 = vld [vmem:[%s2958 + $0x1c] sm:$0xf]
    %v2968 = vrot.slane %v2724, 4
    %v2977 = vunpack.c.l.b16 %v2959
    %v2978 = vunpack.c.l.b16 %v2960
    %v2979 = vunpack.c.l.b16 %v2961
    %v2980 = vunpack.c.l.b16 %v2962
    %v2981 = vunpack.c.l.b16 %v2963
    %v2982 = vunpack.c.l.b16 %v2964
    %v2983 = vunpack.c.l.b16 %v2965
    %v2984 = vunpack.c.l.b16 %v2966
    %v2985 = vpack.c.b16 %v2978, %v2977
    %v2986 = vpack.c.b16 %v2980, %v2979
    %v2987 = vpack.c.b16 %v2982, %v2981
    %v2988 = vpack.c.b16 %v2984, %v2983
    %v2994 = vsel %vm1886, %v2968, 0
    %2996 = vmatprep.subr.bf16.mxu0 0
    %2997 = vmatpush1.bf16.msra.mxu0 %v2985
    %2998 = vmatprep.subr.bf16.mxu0 0
    %2999 = vmatpush1.bf16.msra.mxu0 %v2986
    %3000 = vmatprep.subr.bf16.mxu0 0
    %3001 = vmatpush1.bf16.msra.mxu0 %v2987
    %3002 = vmatprep.subr.bf16.mxu0 0
    %3003 = vmatpush1.bf16.msra.mxu0 %v2988
    %3004 = vmatprep.subr.bf16.mxu0 0
    %3005 = vmatpush1.bf16.msra.mxu0 0
    %3006 = vmatprep.subr.bf16.mxu0 0
    %3007 = vmatpush1.bf16.msra.mxu0 0
    %3008 = vmatprep.subr.bf16.mxu0 0
    %3009 = vmatpush1.bf16.msra.mxu0 0
    %3010 = vmatprep.subr.bf16.mxu0 0
    %3011 = vmatpush1.bf16.msra.mxu0 0
    %3012 = vmatprep.subr.bf16.mxu0 0
    %3013 = vmatpush1.bf16.msra.mxu0 0
    %3014 = vmatprep.subr.bf16.mxu0 0
    %3015 = vmatpush1.bf16.msra.mxu0 0
    %3016 = vmatprep.subr.bf16.mxu0 0
    %3017 = vmatpush1.bf16.msra.mxu0 0
    %3018 = vmatprep.subr.bf16.mxu0 0
    %3019 = vmatpush1.bf16.msra.mxu0 0
    %3020 = vmatprep.subr.bf16.mxu0 0
    %3021 = vmatpush1.bf16.msra.mxu0 0
    %3022 = vmatprep.subr.bf16.mxu0 0
    %3023 = vmatpush1.bf16.msra.mxu0 0
    %3024 = vmatprep.subr.bf16.mxu0 0
    %3025 = vmatpush1.bf16.msra.mxu0 0
    %3026 = vmatprep.subr.bf16.mxu0 0
    %3027 = vmatpush1.bf16.msra.mxu0 0
    %3028 = vmatprep.mubr.bf16.mxu0 0
    %3029 = vmatmul.mubr.bf16.gmra.mrb[0].mxu0 %v2994
    %v3030 = vpop.f32.mrb[0].mxu0
    %v3031 = vadd.f32 0.0, %v3030
    %v3032 = vpop.f32.mrb[0].mxu0
    %v3033 = vpop.f32.mrb[0].mxu0
    %v3034 = vpop.f32.mrb[0].mxu0
    %3035 = vdwg.mxu0
    %v3036 = vadd.f32 %v2957, %v3031
    %s3037 = scalar_lea.vmem %s8, 128
    %v3038 = vld [vmem:[%s3037] sm:$0xf]
    %v3039 = vld [vmem:[%s3037 + $0x4] sm:$0xf]
    %v3040 = vld [vmem:[%s3037 + $0x8] sm:$0xf]
    %v3041 = vld [vmem:[%s3037 + $0xc] sm:$0xf]
    %v3042 = vld [vmem:[%s3037 + $0x10] sm:$0xf]
    %v3043 = vld [vmem:[%s3037 + $0x14] sm:$0xf]
    %v3044 = vld [vmem:[%s3037 + $0x18] sm:$0xf]
    %v3045 = vld [vmem:[%s3037 + $0x1c] sm:$0xf]
    %v3054 = vunpack.c.l.b16 %v3038
    %v3055 = vunpack.c.l.b16 %v3039
    %v3056 = vunpack.c.l.b16 %v3040
    %v3057 = vunpack.c.l.b16 %v3041
    %v3058 = vunpack.c.l.b16 %v3042
    %v3059 = vunpack.c.l.b16 %v3043
    %v3060 = vunpack.c.l.b16 %v3044
    %v3061 = vunpack.c.l.b16 %v3045
    %v3062 = vpack.c.b16 %v3055, %v3054
    %v3063 = vpack.c.b16 %v3057, %v3056
    %v3064 = vpack.c.b16 %v3059, %v3058
    %v3065 = vpack.c.b16 %v3061, %v3060
    %v3071 = vsel %vm1886, %v2725, 0
    %3073 = vmatprep.subr.bf16.mxu0 0
    %3074 = vmatpush1.bf16.msra.mxu0 %v3062
    %3075 = vmatprep.subr.bf16.mxu0 0
    %3076 = vmatpush1.bf16.msra.mxu0 %v3063
    %3077 = vmatprep.subr.bf16.mxu0 0
    %3078 = vmatpush1.bf16.msra.mxu0 %v3064
    %3079 = vmatprep.subr.bf16.mxu0 0
    %3080 = vmatpush1.bf16.msra.mxu0 %v3065
    %3081 = vmatprep.subr.bf16.mxu0 0
    %3082 = vmatpush1.bf16.msra.mxu0 0
    %3083 = vmatprep.subr.bf16.mxu0 0
    %3084 = vmatpush1.bf16.msra.mxu0 0
    %3085 = vmatprep.subr.bf16.mxu0 0
    %3086 = vmatpush1.bf16.msra.mxu0 0
    %3087 = vmatprep.subr.bf16.mxu0 0
    %3088 = vmatpush1.bf16.msra.mxu0 0
    %3089 = vmatprep.subr.bf16.mxu0 0
    %3090 = vmatpush1.bf16.msra.mxu0 0
    %3091 = vmatprep.subr.bf16.mxu0 0
    %3092 = vmatpush1.bf16.msra.mxu0 0
    %3093 = vmatprep.subr.bf16.mxu0 0
    %3094 = vmatpush1.bf16.msra.mxu0 0
    %3095 = vmatprep.subr.bf16.mxu0 0
    %3096 = vmatpush1.bf16.msra.mxu0 0
    %3097 = vmatprep.subr.bf16.mxu0 0
    %3098 = vmatpush1.bf16.msra.mxu0 0
    %3099 = vmatprep.subr.bf16.mxu0 0
    %3100 = vmatpush1.bf16.msra.mxu0 0
    %3101 = vmatprep.subr.bf16.mxu0 0
    %3102 = vmatpush1.bf16.msra.mxu0 0
    %3103 = vmatprep.subr.bf16.mxu0 0
    %3104 = vmatpush1.bf16.msra.mxu0 0
    %3105 = vmatprep.mubr.bf16.mxu0 0
    %3106 = vmatmul.mubr.bf16.gmra.mrb[0].mxu0 %v3071
    %v3107 = vpop.f32.mrb[0].mxu0
    %v3108 = vadd.f32 0.0, %v3107
    %v3109 = vpop.f32.mrb[0].mxu0
    %v3110 = vpop.f32.mrb[0].mxu0
    %v3111 = vpop.f32.mrb[0].mxu0
    %3112 = vdwg.mxu0
    %v3113 = vadd.f32 %v3036, %v3108
    %s3114 = scalar_lea.vmem %s8, 160
    %v3115 = vld [vmem:[%s3114] sm:$0xf]
    %v3116 = vld [vmem:[%s3114 + $0x4] sm:$0xf]
    %v3117 = vld [vmem:[%s3114 + $0x8] sm:$0xf]
    %v3118 = vld [vmem:[%s3114 + $0xc] sm:$0xf]
    %v3119 = vld [vmem:[%s3114 + $0x10] sm:$0xf]
    %v3120 = vld [vmem:[%s3114 + $0x14] sm:$0xf]
    %v3121 = vld [vmem:[%s3114 + $0x18] sm:$0xf]
    %v3122 = vld [vmem:[%s3114 + $0x1c] sm:$0xf]
    %v3124 = vrot.slane %v2725, 4
    %v3133 = vunpack.c.l.b16 %v3115
    %v3134 = vunpack.c.l.b16 %v3116
    %v3135 = vunpack.c.l.b16 %v3117
    %v3136 = vunpack.c.l.b16 %v3118
    %v3137 = vunpack.c.l.b16 %v3119
    %v3138 = vunpack.c.l.b16 %v3120
    %v3139 = vunpack.c.l.b16 %v3121
    %v3140 = vunpack.c.l.b16 %v3122
    %v3141 = vpack.c.b16 %v3134, %v3133
    %v3142 = vpack.c.b16 %v3136, %v3135
    %v3143 = vpack.c.b16 %v3138, %v3137
    %v3144 = vpack.c.b16 %v3140, %v3139
    %v3150 = vsel %vm1886, %v3124, 0
    %3152 = vmatprep.subr.bf16.mxu0 0
    %3153 = vmatpush1.bf16.msra.mxu0 %v3141
    %3154 = vmatprep.subr.bf16.mxu0 0
    %3155 = vmatpush1.bf16.msra.mxu0 %v3142
    %3156 = vmatprep.subr.bf16.mxu0 0
    %3157 = vmatpush1.bf16.msra.mxu0 %v3143
    %3158 = vmatprep.subr.bf16.mxu0 0
    %3159 = vmatpush1.bf16.msra.mxu0 %v3144
    %3160 = vmatprep.subr.bf16.mxu0 0
    %3161 = vmatpush1.bf16.msra.mxu0 0
    %3162 = vmatprep.subr.bf16.mxu0 0
    %3163 = vmatpush1.bf16.msra.mxu0 0
    %3164 = vmatprep.subr.bf16.mxu0 0
    %3165 = vmatpush1.bf16.msra.mxu0 0
    %3166 = vmatprep.subr.bf16.mxu0 0
    %3167 = vmatpush1.bf16.msra.mxu0 0
    %3168 = vmatprep.subr.bf16.mxu0 0
    %3169 = vmatpush1.bf16.msra.mxu0 0
    %3170 = vmatprep.subr.bf16.mxu0 0
    %3171 = vmatpush1.bf16.msra.mxu0 0
    %3172 = vmatprep.subr.bf16.mxu0 0
    %3173 = vmatpush1.bf16.msra.mxu0 0
    %3174 = vmatprep.subr.bf16.mxu0 0
    %3175 = vmatpush1.bf16.msra.mxu0 0
    %3176 = vmatprep.subr.bf16.mxu0 0
    %3177 = vmatpush1.bf16.msra.mxu0 0
    %3178 = vmatprep.subr.bf16.mxu0 0
    %3179 = vmatpush1.bf16.msra.mxu0 0
    %3180 = vmatprep.subr.bf16.mxu0 0
    %3181 = vmatpush1.bf16.msra.mxu0 0
    %3182 = vmatprep.subr.bf16.mxu0 0
    %3183 = vmatpush1.bf16.msra.mxu0 0
    %3184 = vmatprep.mubr.bf16.mxu0 0
    %3185 = vmatmul.mubr.bf16.gmra.mrb[0].mxu0 %v3150
    %v3186 = vpop.f32.mrb[0].mxu0
    %v3187 = vadd.f32 0.0, %v3186
    %v3188 = vpop.f32.mrb[0].mxu0
    %v3189 = vpop.f32.mrb[0].mxu0
    %v3190 = vpop.f32.mrb[0].mxu0
    %3191 = vdwg.mxu0
    %v3192 = vadd.f32 %v3113, %v3187
    %s3193 = scalar_lea.vmem %s8, 192
    %v3194 = vld [vmem:[%s3193] sm:$0xf]
    %v3195 = vld [vmem:[%s3193 + $0x4] sm:$0xf]
    %v3196 = vld [vmem:[%s3193 + $0x8] sm:$0xf]
    %v3197 = vld [vmem:[%s3193 + $0xc] sm:$0xf]
    %v3198 = vld [vmem:[%s3193 + $0x10] sm:$0xf]
    %v3199 = vld [vmem:[%s3193 + $0x14] sm:$0xf]
    %v3200 = vld [vmem:[%s3193 + $0x18] sm:$0xf]
    %v3201 = vld [vmem:[%s3193 + $0x1c] sm:$0xf]
    %v3210 = vunpack.c.l.b16 %v3194
    %v3211 = vunpack.c.l.b16 %v3195
    %v3212 = vunpack.c.l.b16 %v3196
    %v3213 = vunpack.c.l.b16 %v3197
    %v3214 = vunpack.c.l.b16 %v3198
    %v3215 = vunpack.c.l.b16 %v3199
    %v3216 = vunpack.c.l.b16 %v3200
    %v3217 = vunpack.c.l.b16 %v3201
    %v3218 = vpack.c.b16 %v3211, %v3210
    %v3219 = vpack.c.b16 %v3213, %v3212
    %v3220 = vpack.c.b16 %v3215, %v3214
    %v3221 = vpack.c.b16 %v3217, %v3216
    %v3227 = vsel %vm1886, %v2726, 0
    %3229 = vmatprep.subr.bf16.mxu0 0
    %3230 = vmatpush1.bf16.msra.mxu0 %v3218
    %3231 = vmatprep.subr.bf16.mxu0 0
    %3232 = vmatpush1.bf16.msra.mxu0 %v3219
    %3233 = vmatprep.subr.bf16.mxu0 0
    %3234 = vmatpush1.bf16.msra.mxu0 %v3220
    %3235 = vmatprep.subr.bf16.mxu0 0
    %3236 = vmatpush1.bf16.msra.mxu0 %v3221
    %3237 = vmatprep.subr.bf16.mxu0 0
    %3238 = vmatpush1.bf16.msra.mxu0 0
    %3239 = vmatprep.subr.bf16.mxu0 0
    %3240 = vmatpush1.bf16.msra.mxu0 0
    %3241 = vmatprep.subr.bf16.mxu0 0
    %3242 = vmatpush1.bf16.msra.mxu0 0
    %3243 = vmatprep.subr.bf16.mxu0 0
    %3244 = vmatpush1.bf16.msra.mxu0 0
    %3245 = vmatprep.subr.bf16.mxu0 0
    %3246 = vmatpush1.bf16.msra.mxu0 0
    %3247 = vmatprep.subr.bf16.mxu0 0
    %3248 = vmatpush1.bf16.msra.mxu0 0
    %3249 = vmatprep.subr.bf16.mxu0 0
    %3250 = vmatpush1.bf16.msra.mxu0 0
    %3251 = vmatprep.subr.bf16.mxu0 0
    %3252 = vmatpush1.bf16.msra.mxu0 0
    %3253 = vmatprep.subr.bf16.mxu0 0
    %3254 = vmatpush1.bf16.msra.mxu0 0
    %3255 = vmatprep.subr.bf16.mxu0 0
    %3256 = vmatpush1.bf16.msra.mxu0 0
    %3257 = vmatprep.subr.bf16.mxu0 0
    %3258 = vmatpush1.bf16.msra.mxu0 0
    %3259 = vmatprep.subr.bf16.mxu0 0
    %3260 = vmatpush1.bf16.msra.mxu0 0
    %3261 = vmatprep.mubr.bf16.mxu0 0
    %3262 = vmatmul.mubr.bf16.gmra.mrb[0].mxu0 %v3227
    %v3263 = vpop.f32.mrb[0].mxu0
    %v3264 = vadd.f32 0.0, %v3263
    %v3265 = vpop.f32.mrb[0].mxu0
    %v3266 = vpop.f32.mrb[0].mxu0
    %v3267 = vpop.f32.mrb[0].mxu0
    %3268 = vdwg.mxu0
    %v3269 = vadd.f32 %v3192, %v3264
    %s3270 = scalar_lea.vmem %s8, 224
    %v3271 = vld [vmem:[%s3270] sm:$0xf]
    %v3272 = vld [vmem:[%s3270 + $0x4] sm:$0xf]
    %v3273 = vld [vmem:[%s3270 + $0x8] sm:$0xf]
    %v3274 = vld [vmem:[%s3270 + $0xc] sm:$0xf]
    %v3275 = vld [vmem:[%s3270 + $0x10] sm:$0xf]
    %v3276 = vld [vmem:[%s3270 + $0x14] sm:$0xf]
    %v3277 = vld [vmem:[%s3270 + $0x18] sm:$0xf]
    %v3278 = vld [vmem:[%s3270 + $0x1c] sm:$0xf]
    %v3280 = vrot.slane %v2726, 4
    %v3289 = vunpack.c.l.b16 %v3271
    %v3290 = vunpack.c.l.b16 %v3272
    %v3291 = vunpack.c.l.b16 %v3273
    %v3292 = vunpack.c.l.b16 %v3274
    %v3293 = vunpack.c.l.b16 %v3275
    %v3294 = vunpack.c.l.b16 %v3276
    %v3295 = vunpack.c.l.b16 %v3277
    %v3296 = vunpack.c.l.b16 %v3278
    %v3297 = vpack.c.b16 %v3290, %v3289
    %v3298 = vpack.c.b16 %v3292, %v3291
    %v3299 = vpack.c.b16 %v3294, %v3293
    %v3300 = vpack.c.b16 %v3296, %v3295
    %v3306 = vsel %vm1886, %v3280, 0
    %3308 = vmatprep.subr.bf16.mxu0 0
    %3309 = vmatpush1.bf16.msra.mxu0 %v3297
    %3310 = vmatprep.subr.bf16.mxu0 0
    %3311 = vmatpush1.bf16.msra.mxu0 %v3298
    %3312 = vmatprep.subr.bf16.mxu0 0
    %3313 = vmatpush1.bf16.msra.mxu0 %v3299
    %3314 = vmatprep.subr.bf16.mxu0 0
    %3315 = vmatpush1.bf16.msra.mxu0 %v3300
    %3316 = vmatprep.subr.bf16.mxu0 0
    %3317 = vmatpush1.bf16.msra.mxu0 0
    %3318 = vmatprep.subr.bf16.mxu0 0
    %3319 = vmatpush1.bf16.msra.mxu0 0
    %3320 = vmatprep.subr.bf16.mxu0 0
    %3321 = vmatpush1.bf16.msra.mxu0 0
    %3322 = vmatprep.subr.bf16.mxu0 0
    %3323 = vmatpush1.bf16.msra.mxu0 0
    %3324 = vmatprep.subr.bf16.mxu0 0
    %3325 = vmatpush1.bf16.msra.mxu0 0
    %3326 = vmatprep.subr.bf16.mxu0 0
    %3327 = vmatpush1.bf16.msra.mxu0 0
    %3328 = vmatprep.subr.bf16.mxu0 0
    %3329 = vmatpush1.bf16.msra.mxu0 0
    %3330 = vmatprep.subr.bf16.mxu0 0
    %3331 = vmatpush1.bf16.msra.mxu0 0
    %3332 = vmatprep.subr.bf16.mxu0 0
    %3333 = vmatpush1.bf16.msra.mxu0 0
    %3334 = vmatprep.subr.bf16.mxu0 0
    %3335 = vmatpush1.bf16.msra.mxu0 0
    %3336 = vmatprep.subr.bf16.mxu0 0
    %3337 = vmatpush1.bf16.msra.mxu0 0
    %3338 = vmatprep.subr.bf16.mxu0 0
    %3339 = vmatpush1.bf16.msra.mxu0 0
    %3340 = vmatprep.mubr.bf16.mxu0 0
    %3341 = vmatmul.mubr.bf16.gmra.mrb[0].mxu0 %v3306
    %v3342 = vpop.f32.mrb[0].mxu0
    %v3343 = vadd.f32 0.0, %v3342
    %v3344 = vpop.f32.mrb[0].mxu0
    %v3345 = vpop.f32.mrb[0].mxu0
    %v3346 = vpop.f32.mrb[0].mxu0
    %3347 = vdwg.mxu0
    %v3348 = vadd.f32 %v3269, %v3343
    %s3349 = scalar_lea.vmem %s8, 256
    %v3350 = vld [vmem:[%s3349] sm:$0xf]
    %v3351 = vld [vmem:[%s3349 + $0x4] sm:$0xf]
    %v3352 = vld [vmem:[%s3349 + $0x8] sm:$0xf]
    %v3353 = vld [vmem:[%s3349 + $0xc] sm:$0xf]
    %v3354 = vld [vmem:[%s3349 + $0x10] sm:$0xf]
    %v3355 = vld [vmem:[%s3349 + $0x14] sm:$0xf]
    %v3356 = vld [vmem:[%s3349 + $0x18] sm:$0xf]
    %v3357 = vld [vmem:[%s3349 + $0x1c] sm:$0xf]
    %v3366 = vunpack.c.l.b16 %v3350
    %v3367 = vunpack.c.l.b16 %v3351
    %v3368 = vunpack.c.l.b16 %v3352
    %v3369 = vunpack.c.l.b16 %v3353
    %v3370 = vunpack.c.l.b16 %v3354
    %v3371 = vunpack.c.l.b16 %v3355
    %v3372 = vunpack.c.l.b16 %v3356
    %v3373 = vunpack.c.l.b16 %v3357
    %v3374 = vpack.c.b16 %v3367, %v3366
    %v3375 = vpack.c.b16 %v3369, %v3368
    %v3376 = vpack.c.b16 %v3371, %v3370
    %v3377 = vpack.c.b16 %v3373, %v3372
    %v3383 = vsel %vm1886, %v2727, 0
    %3385 = vmatprep.subr.bf16.mxu0 0
    %3386 = vmatpush1.bf16.msra.mxu0 %v3374
    %3387 = vmatprep.subr.bf16.mxu0 0
    %3388 = vmatpush1.bf16.msra.mxu0 %v3375
    %3389 = vmatprep.subr.bf16.mxu0 0
    %3390 = vmatpush1.bf16.msra.mxu0 %v3376
    %3391 = vmatprep.subr.bf16.mxu0 0
    %3392 = vmatpush1.bf16.msra.mxu0 %v3377
    %3393 = vmatprep.subr.bf16.mxu0 0
    %3394 = vmatpush1.bf16.msra.mxu0 0
    %3395 = vmatprep.subr.bf16.mxu0 0
    %3396 = vmatpush1.bf16.msra.mxu0 0
    %3397 = vmatprep.subr.bf16.mxu0 0
    %3398 = vmatpush1.bf16.msra.mxu0 0
    %3399 = vmatprep.subr.bf16.mxu0 0
    %3400 = vmatpush1.bf16.msra.mxu0 0
    %3401 = vmatprep.subr.bf16.mxu0 0
    %3402 = vmatpush1.bf16.msra.mxu0 0
    %3403 = vmatprep.subr.bf16.mxu0 0
    %3404 = vmatpush1.bf16.msra.mxu0 0
    %3405 = vmatprep.subr.bf16.mxu0 0
    %3406 = vmatpush1.bf16.msra.mxu0 0
    %3407 = vmatprep.subr.bf16.mxu0 0
    %3408 = vmatpush1.bf16.msra.mxu0 0
    %3409 = vmatprep.subr.bf16.mxu0 0
    %3410 = vmatpush1.bf16.msra.mxu0 0
    %3411 = vmatprep.subr.bf16.mxu0 0
    %3412 = vmatpush1.bf16.msra.mxu0 0
    %3413 = vmatprep.subr.bf16.mxu0 0
    %3414 = vmatpush1.bf16.msra.mxu0 0
    %3415 = vmatprep.subr.bf16.mxu0 0
    %3416 = vmatpush1.bf16.msra.mxu0 0
    %3417 = vmatprep.mubr.bf16.mxu0 0
    %3418 = vmatmul.mubr.bf16.gmra.mrb[0].mxu0 %v3383
    %v3419 = vpop.f32.mrb[0].mxu0
    %v3420 = vadd.f32 0.0, %v3419
    %v3421 = vpop.f32.mrb[0].mxu0
    %v3422 = vpop.f32.mrb[0].mxu0
    %v3423 = vpop.f32.mrb[0].mxu0
    %3424 = vdwg.mxu0
    %v3425 = vadd.f32 %v3348, %v3420
    %v3426 = vld [vmem:[%s9] sm:$0x1]
    %v3428 = vlaneseq
    %v3429 = vshrl.u32 %v3428, 7
    %v3430 = vsub.s32 0, %v3429
    %v3431 = vrot.slane %v3426, %v3430
    %v3433 = vadd.f32 %v3425, %v3431
    %v3434 = vmax.f32 %v3433, 0.0
    %vm3435 = vcmask 1043456
    %v3436 = vsel %vm3435, %v3434, 0.0
    %v3437 = vrot.slane %v3436, 4
    %v3438 = vadd.f32 %v3436, %v3437
    %v3439 = vrot.slane %v3438, 2
    %v3440 = vadd.f32 %v3438, %v3439
    %v3441 = vrot.slane %v3440, 1
    %v3442 = vadd.f32 %v3440, %v3441
    %v3443 = vrcp.pop 4.0
    %v3444 = vmul.f32 %v3442, %v3443
    %v3445 = vld [vmem:[#allocation7] sm:$0xff]
    %v3446 = vld [vmem:[#allocation7 + $0x8] sm:$0xff]
    %v3447 = vld [vmem:[#allocation7 + $0x10] sm:$0xff]
    %v3448 = vld [vmem:[#allocation7 + $0x18] sm:$0xff]
    %v3449 = vld [vmem:[#allocation7 + $0x20] sm:$0xff]
    %v3450 = vld [vmem:[#allocation7 + $0x28] sm:$0xff]
    %v3451 = vld [vmem:[#allocation7 + $0x30] sm:$0xff]
    %v3452 = vld [vmem:[#allocation7 + $0x38] sm:$0xff]
    %v3453 = vld [vmem:[%s11] sm:$0x1]
    %v3455 = vsel %vm1886, %v3444, 0
    %3457 = vmatprep.subr.mxu0 0.0
    %3458 = vmatpush1.msra.mxu0 %v3445
    %3459 = vmatprep.subr.mxu0 0.0
    %3460 = vmatpush1.msra.mxu0 %v3446
    %3461 = vmatprep.subr.mxu0 0.0
    %3462 = vmatpush1.msra.mxu0 %v3447
    %3463 = vmatprep.subr.mxu0 0.0
    %3464 = vmatpush1.msra.mxu0 %v3448
    %3465 = vmatprep.subr.mxu0 0.0
    %3466 = vmatpush1.msra.mxu0 %v3449
    %3467 = vmatprep.subr.mxu0 0.0
    %3468 = vmatpush1.msra.mxu0 %v3450
    %3469 = vmatprep.subr.mxu0 0.0
    %3470 = vmatpush1.msra.mxu0 %v3451
    %3471 = vmatprep.subr.mxu0 0.0
    %3472 = vmatpush1.msra.mxu0 %v3452
    %3473 = vmatprep.subr.mxu0 0.0
    %3474 = vmatpush1.msra.mxu0 0.0
    %3475 = vmatprep.subr.mxu0 0.0
    %3476 = vmatpush1.msra.mxu0 0.0
    %3477 = vmatprep.subr.mxu0 0.0
    %3478 = vmatpush1.msra.mxu0 0.0
    %3479 = vmatprep.subr.mxu0 0.0
    %3480 = vmatpush1.msra.mxu0 0.0
    %3481 = vmatprep.subr.mxu0 0.0
    %3482 = vmatpush1.msra.mxu0 0.0
    %3483 = vmatprep.subr.mxu0 0.0
    %3484 = vmatpush1.msra.mxu0 0.0
    %3485 = vmatprep.subr.mxu0 0.0
    %3486 = vmatpush1.msra.mxu0 0.0
    %3487 = vmatprep.subr.mxu0 0.0
    %3488 = vmatpush1.msra.mxu0 0.0
    %3489 = vmatprep.subr.mxu0 0.0
    %3490 = vmatpush1.msra.mxu0 0.0
    %3491 = vmatprep.subr.mxu0 0.0
    %3492 = vmatpush1.msra.mxu0 0.0
    %3493 = vmatprep.subr.mxu0 0.0
    %3494 = vmatpush1.msra.mxu0 0.0
    %3495 = vmatprep.subr.mxu0 0.0
    %3496 = vmatpush1.msra.mxu0 0.0
    %3497 = vmatprep.subr.mxu0 0.0
    %3498 = vmatpush1.msra.mxu0 0.0
    %3499 = vmatprep.subr.mxu0 0.0
    %3500 = vmatpush1.msra.mxu0 0.0
    %3501 = vmatprep.subr.mxu0 0.0
    %3502 = vmatpush1.msra.mxu0 0.0
    %3503 = vmatprep.subr.mxu0 0.0
    %3504 = vmatpush1.msra.mxu0 0.0
    %3505 = vmatprep.subr.mxu0 0.0
    %3506 = vmatpush1.msra.mxu0 0.0
    %3507 = vmatprep.subr.mxu0 0.0
    %3508 = vmatpush1.msra.mxu0 0.0
    %3509 = vmatprep.subr.mxu0 0.0
    %3510 = vmatpush1.msra.mxu0 0.0
    %3511 = vmatprep.subr.mxu0 0.0
    %3512 = vmatpush1.msra.mxu0 0.0
    %3513 = vmatprep.subr.mxu0 0.0
    %3514 = vmatpush1.msra.mxu0 0.0
    %3515 = vmatprep.subr.mxu0 0.0
    %3516 = vmatpush1.msra.mxu0 0.0
    %3517 = vmatprep.subr.mxu0 0.0
    %3518 = vmatpush1.msra.mxu0 0.0
    %3519 = vmatprep.subr.mxu0 0.0
    %3520 = vmatpush1.msra.mxu0 0.0
    %3521 = vmatprep.mubr.f32.mxu0 0.0
    %3522 = vmatmul.mubr.f32.gmra.mrb[0].mxu0 %v3455
    %v3523 = vpop.f32.mrb[0].mxu0
    %v3524 = vadd.f32 %v3453, %v3523
    %v3525 = vpop.f32.mrb[0].mxu0
    %3526 = vdwg.mxu0
    %v3527 = vmul.f32 %v3524, %v3524
    %vm3528 = vcmask 1040384
    %v3529 = vsel %vm3528, %v3527, 0.0
    %3530 = vadd.xlane.f32.xlu0 %v3529
    %v3531 = vpop.xlane.xlu0 %3530
    %v3532 = vmax.f32 %v3531, 1e-24
    %v3533 = vrsqrt.pop %v3532
    %v3534 = vmul.f32 %v3524, %v3533
    %3535 = vst [vmem:[#allocation8] sm:$0x1] %v3534
    %v3536 = vld [vmem:[#allocation7] sm:$0xff]
    %v3537 = vld [vmem:[#allocation7 + $0x8] sm:$0xff]
    %v3538 = vld [vmem:[#allocation7 + $0x10] sm:$0xff]
    %v3539 = vld [vmem:[#allocation7 + $0x18] sm:$0xff]
    %v3540 = vld [vmem:[#allocation7 + $0x20] sm:$0xff]
    %v3541 = vld [vmem:[#allocation7 + $0x28] sm:$0xff]
    %v3542 = vld [vmem:[#allocation7 + $0x30] sm:$0xff]
    %v3543 = vld [vmem:[#allocation7 + $0x38] sm:$0xff]
    %v3544 = vld [vmem:[%s11] sm:$0x1]
    %3545 = vrot.lane.b32.xlu0 %v3444, 64
    %v3546 = vpop.permute.xlu0 %3545
    %v3547 = vsel %vm1886, %v3546, 0
    %3549 = vmatprep.subr.mxu0 0.0
    %3550 = vmatpush1.msra.mxu0 %v3536
    %3551 = vmatprep.subr.mxu0 0.0
    %3552 = vmatpush1.msra.mxu0 %v3537
    %3553 = vmatprep.subr.mxu0 0.0
    %3554 = vmatpush1.msra.mxu0 %v3538
    %3555 = vmatprep.subr.mxu0 0.0
    %3556 = vmatpush1.msra.mxu0 %v3539
    %3557 = vmatprep.subr.mxu0 0.0
    %3558 = vmatpush1.msra.mxu0 %v3540
    %3559 = vmatprep.subr.mxu0 0.0
    %3560 = vmatpush1.msra.mxu0 %v3541
    %3561 = vmatprep.subr.mxu0 0.0
    %3562 = vmatpush1.msra.mxu0 %v3542
    %3563 = vmatprep.subr.mxu0 0.0
    %3564 = vmatpush1.msra.mxu0 %v3543
    %3565 = vmatprep.subr.mxu0 0.0
    %3566 = vmatpush1.msra.mxu0 0.0
    %3567 = vmatprep.subr.mxu0 0.0
    %3568 = vmatpush1.msra.mxu0 0.0
    %3569 = vmatprep.subr.mxu0 0.0
    %3570 = vmatpush1.msra.mxu0 0.0
    %3571 = vmatprep.subr.mxu0 0.0
    %3572 = vmatpush1.msra.mxu0 0.0
    %3573 = vmatprep.subr.mxu0 0.0
    %3574 = vmatpush1.msra.mxu0 0.0
    %3575 = vmatprep.subr.mxu0 0.0
    %3576 = vmatpush1.msra.mxu0 0.0
    %3577 = vmatprep.subr.mxu0 0.0
    %3578 = vmatpush1.msra.mxu0 0.0
    %3579 = vmatprep.subr.mxu0 0.0
    %3580 = vmatpush1.msra.mxu0 0.0
    %3581 = vmatprep.subr.mxu0 0.0
    %3582 = vmatpush1.msra.mxu0 0.0
    %3583 = vmatprep.subr.mxu0 0.0
    %3584 = vmatpush1.msra.mxu0 0.0
    %3585 = vmatprep.subr.mxu0 0.0
    %3586 = vmatpush1.msra.mxu0 0.0
    %3587 = vmatprep.subr.mxu0 0.0
    %3588 = vmatpush1.msra.mxu0 0.0
    %3589 = vmatprep.subr.mxu0 0.0
    %3590 = vmatpush1.msra.mxu0 0.0
    %3591 = vmatprep.subr.mxu0 0.0
    %3592 = vmatpush1.msra.mxu0 0.0
    %3593 = vmatprep.subr.mxu0 0.0
    %3594 = vmatpush1.msra.mxu0 0.0
    %3595 = vmatprep.subr.mxu0 0.0
    %3596 = vmatpush1.msra.mxu0 0.0
    %3597 = vmatprep.subr.mxu0 0.0
    %3598 = vmatpush1.msra.mxu0 0.0
    %3599 = vmatprep.subr.mxu0 0.0
    %3600 = vmatpush1.msra.mxu0 0.0
    %3601 = vmatprep.subr.mxu0 0.0
    %3602 = vmatpush1.msra.mxu0 0.0
    %3603 = vmatprep.subr.mxu0 0.0
    %3604 = vmatpush1.msra.mxu0 0.0
    %3605 = vmatprep.subr.mxu0 0.0
    %3606 = vmatpush1.msra.mxu0 0.0
    %3607 = vmatprep.subr.mxu0 0.0
    %3608 = vmatpush1.msra.mxu0 0.0
    %3609 = vmatprep.subr.mxu0 0.0
    %3610 = vmatpush1.msra.mxu0 0.0
    %3611 = vmatprep.subr.mxu0 0.0
    %3612 = vmatpush1.msra.mxu0 0.0
    %3613 = vmatprep.mubr.f32.mxu0 0.0
    %3614 = vmatmul.mubr.f32.gmra.mrb[0].mxu0 %v3547
    %v3615 = vpop.f32.mrb[0].mxu0
    %v3616 = vadd.f32 %v3544, %v3615
    %v3617 = vpop.f32.mrb[0].mxu0
    %3618 = vdwg.mxu0
    %v3619 = vmul.f32 %v3616, %v3616
    %v3620 = vsel %vm3528, %v3619, 0.0
    %3621 = vadd.xlane.f32.xlu0 %v3620
    %v3622 = vpop.xlane.xlu0 %3621
    %v3623 = vmax.f32 %v3622, 1e-24
    %v3624 = vrsqrt.pop %v3623
    %v3625 = vmul.f32 %v3616, %v3624
    %3626 = vst [vmem:[#allocation8 + $0x1] sm:$0x1] %v3625
    // Predicated region
    $region62: #{lightweight_cnn_forward.1} parent=1 // pred_check
      _
    $region63: #{lightweight_cnn_forward.1} parent=1 // pred_check_branch
      %3628 = sbr.rel (0) target = $region65
    $region64: #{lightweight_cnn_forward.1} parent=1 // pred_region
      %s3630 = ssub.s32 32, 32
      %3631 = vsyncadd [#allocation4], %s3630
      %s3633 = sshll.u32 [#allocation8], 4
      %s3634 = int_to_ptr.vmem [resolvable:$true] %s3633
      %3636 = dma.vmem_to_hbm [thread:$0]  %s3634, 32, %s12, [#allocation4]
    $region65: #{lightweight_cnn_forward.1} parent=1 // pred_fallthru
      _
    // Predicated region
    $region66: #{lightweight_cnn_forward.1} parent=1 // pred_check
      _
    $region67: #{lightweight_cnn_forward.1} parent=1 // pred_check_branch
      %3638 = sbr.rel (0) target = $region69
    $region68: #{lightweight_cnn_forward.1} parent=1 // pred_region
      %3639 = dma.done [#allocation4], 32
    $region69: #{lightweight_cnn_forward.1} parent=1 // pred_fallthru
      _
    %3640 = vsyncpa [#allocation3], 1
    %3641 = vsyncpa [#allocation6], 1
    %3642 = vsyncpa [#allocation4], 1

</llo_original>
